<compile_context>
chip_gen: v5e
topology: v5e:2x2
jax: 0.10.0
libtpu: 0.0.40
codegen_flags: <defaults>
</compile_context>

<pallas_src>
import functools

import jax
import jax.numpy as jnp
from jax import lax
from jax.experimental import pallas as pl
from jax.experimental.pallas import tpu as pltpu

_NEG_LARGE = float(jnp.finfo(jnp.float32).min)

# 3x3 conv taps in (dh, dw) order matching row-major (kh, kw) weight flattening.
_TAPS3 = tuple((kh - 1, kw - 1) for kh in range(3) for kw in range(3))


def _crp_kernel(x_ref, w_ref, b_ref, o_ref, *, n_stages, C, H, W, chunk_n):
    HW = H * W
    f32 = jnp.float32

    # Lane-position helpers, computed once with shape (1, HW); they broadcast
    # over however many rows the shifted array has.
    lane = lax.broadcasted_iota(jnp.int32, (1, HW), 1)
    if (W & (W - 1)) == 0:                       # power-of-two fast path
        wpos = jnp.bitwise_and(lane, W - 1)
    else:
        wpos = lane % W

    def shift(a, dh, dw, fill):
        """out(h, w) = a(h+dh, w+dw), with constant `fill` outside the image.

        Each row of `a` holds one full HxW image flattened along lanes, so the
        spatial shift is a single lane rotation by dh*W + dw plus edge masks.
        """
        off = dh * W + dw
        sh = a if off == 0 else pltpu.roll(a, shift=(-off) % HW, axis=1)
        valid = None
        if dw > 0:
            valid = wpos < (W - dw)
        elif dw < 0:
            valid = wpos >= (-dw)
        if dh > 0:
            hv = lane < (H - dh) * W
            valid = hv if valid is None else (valid & hv)
        elif dh < 0:
            hv = lane >= (-dh) * W
            valid = hv if valid is None else (valid & hv)
        if valid is None:
            return sh
        return jnp.where(valid, sh, fill)

    x = x_ref[...].astype(f32)                   # (chunk_n*C, HW)
    # ELU (alpha = 1.0)
    x = jnp.where(x > 0, x, jnp.exp(jnp.minimum(x, 0.0)) - 1.0)
    path = x

    inv_hw = f32(1.0 / HW)
    for s in range(n_stages):
        # ---- MaxPool2d(5, stride=1, pad=2): separable 1x5 then 5x1 ----
        m = path
        for dw in (-2, -1, 1, 2):
            m = jnp.maximum(m, shift(path, 0, dw, _NEG_LARGE))
        pooled = m
        for dh in (-2, -1, 1, 2):
            pooled = jnp.maximum(pooled, shift(m, dh, 0, _NEG_LARGE))

        # ---- InstanceNorm2d (affine=False): each row is one (n, c) instance ----
        mean = jnp.sum(pooled, axis=1, keepdims=True) * inv_hw
        ex2 = jnp.sum(pooled * pooled, axis=1, keepdims=True) * inv_hw
        var = jnp.maximum(ex2 - mean * mean, 0.0)
        normed = (pooled - mean) * lax.rsqrt(var + 1e-5)

        # ---- Conv2d(C, C, 3, pad=1) + bias: tap-major unrolled VPU MACs ----
        accs = [jnp.zeros((C, HW), f32) for _ in range(chunk_n)]
        for t, (dh, dw) in enumerate(_TAPS3):
            sh = shift(normed, dh, dw, 0.0)      # zero padding for the conv
            row0 = (s * 9 + t) * C
            wblk = w_ref[row0:row0 + C, :]       # (C_out, C_in) for this tap
            for b in range(chunk_n):
                for i in range(C):
                    accs[b] = accs[b] + wblk[:, i:i + 1] * sh[b * C + i:b * C + i + 1, :]
        bias = b_ref[s * C:(s + 1) * C, :]       # (C, 1)
        outs = [acc + bias for acc in accs]
        path = outs[0] if chunk_n == 1 else jnp.concatenate(outs, axis=0)

        x = path + x

    o_ref[...] = x.astype(o_ref.dtype)


def crp_block(x, conv_w, conv_b, *, n_stages=2):
    """x: (N, C, H, W); conv_w: (n_stages, C, C, 3, 3) OIHW; conv_b: (n_stages, C)."""
    N, C, H, W = x.shape
    HW = H * W
    rows = N * C

    # Lane-dense relayout: one (n, c) image per row, H*W along lanes.
    x2 = x.reshape(rows, HW)
    # Weights regrouped tap-major: row (s*9 + kh*3 + kw)*C + o, column i.
    w2 = jnp.transpose(conv_w.astype(jnp.float32), (0, 3, 4, 1, 2)).reshape(
        n_stages * 9 * C, C)
    b2 = conv_b.astype(jnp.float32).reshape(n_stages * C, 1)

    # Batch chunking: one big step by default; split 2-way (for v7x's two
    # TensorCores) whenever each chunk still holds whole images and a row
    # count that is a multiple of the 8-sublane tile.
    num_chunks = 1
    if N % 2 == 0 and ((N // 2) * C) % 8 == 0:
        num_chunks = 2
    chunk_n = N // num_chunks
    chunk_rows = chunk_n * C

    kernel = functools.partial(
        _crp_kernel, n_stages=n_stages, C=C, H=H, W=W, chunk_n=chunk_n)

    out2 = pl.pallas_call(
        kernel,
        out_shape=jax.ShapeDtypeStruct((rows, HW), x.dtype),
        grid=(num_chunks,),
        in_specs=[
            pl.BlockSpec((chunk_rows, HW), lambda i: (i, 0)),
            pl.BlockSpec((n_stages * 9 * C, C), lambda i: (0, 0)),
            pl.BlockSpec((n_stages * C, 1), lambda i: (0, 0)),
        ],
        out_specs=pl.BlockSpec((chunk_rows, HW), lambda i: (i, 0)),
        compiler_params=pltpu.CompilerParams(
            dimension_semantics=("parallel",)),
    )(x2, w2, b2)
    return out2.reshape(N, C, H, W)


def crp_block_ref(x, conv_w, conv_b, n_stages=2):
    """Pure-JAX reference (mirrors the PyTorch module)."""
    x = jnp.where(x > 0, x, jnp.exp(jnp.minimum(x, 0.0)) - 1.0)
    path = x
    for s in range(n_stages):
        path = lax.reduce_window(
            path, -jnp.inf, lax.max,
            window_dimensions=(1, 1, 5, 5), window_strides=(1, 1, 1, 1),
            padding=[(0, 0), (0, 0), (2, 2), (2, 2)])
        mean = jnp.mean(path, axis=(2, 3), keepdims=True)
        var = jnp.mean(jnp.square(path - mean), axis=(2, 3), keepdims=True)
        path = (path - mean) * lax.rsqrt(var + 1e-5)
        path = lax.conv_general_dilated(
            path, conv_w[s], window_strides=(1, 1), padding=[(1, 1), (1, 1)],
            dimension_numbers=("NCHW", "OIHW", "NCHW"))
        path = path + conv_b[s][None, :, None, None]
        x = path + x
    return x


if __name__ == "__main__":
    N, C, H, W = 2, 4, 16, 16
    n_stages = 2

    key = jax.random.PRNGKey(0)
    kx, kw, kb = jax.random.split(key, 3)
    x = jax.random.normal(kx, (N, C, H, W), jnp.float32)
    conv_w = 0.1 * jax.random.normal(kw, (n_stages, C, C, 3, 3), jnp.float32)
    conv_b = 0.1 * jax.random.normal(kb, (n_stages, C), jnp.float32)

    out = crp_block(x, conv_w, conv_b, n_stages=n_stages)
    out = jax.block_until_ready(out)

    ref = crp_block_ref(x, conv_w, conv_b, n_stages=n_stages)
    assert out.shape == (N, C, H, W)
    assert jnp.allclose(out, ref, rtol=1e-3, atol=1e-3), float(
        jnp.max(jnp.abs(out - ref)))
    print("KERNEL_OK")
</pallas_src>

<mosaic_0001>
module attributes {stable_mosaic.version = 11 : i64} {
  func.func @_crp_kernel(%arg0: i32, %arg1: memref<8x256xf32, #tpu.memory_space<vmem>>, %arg2: memref<72x4xf32, #tpu.memory_space<vmem>>, %arg3: memref<8x1xf32, #tpu.memory_space<vmem>>, %arg4: memref<8x256xf32, #tpu.memory_space<vmem>>) attributes {dimension_semantics = [#tpu.dimension_semantics<parallel>], iteration_bounds = array<i64: 1>, scalar_prefetch = 0 : i64, scratch_operands = 0 : i64, tpu.core_type = #tpu.core_type<tc>, window_params = [{transform_indices = @transform_0, window_bounds = array<i64: 8, 256>}, {pipeline_mode = #tpu.pipeline_mode<synchronous>, transform_indices = @transform_1, window_bounds = array<i64: 72, 4>}, {pipeline_mode = #tpu.pipeline_mode<synchronous>, transform_indices = @transform_2, window_bounds = array<i64: 8, 1>}, {transform_indices = @transform_3, window_bounds = array<i64: 8, 256>}]} {
    %0 = tpu.iota {dimensions = array<i32: 1>} : vector<1x256xi32>
    %c15_i32 = arith.constant 15 : i32
    %1 = vector.broadcast %c15_i32 : i32 to vector<1x256xi32>
    %2 = arith.andi %0, %1 : vector<1x256xi32>
    %c0 = arith.constant 0 : index
    %c0_0 = arith.constant 0 : index
    %3 = vector.load %arg1[%c0, %c0_0] : memref<8x256xf32, #tpu.memory_space<vmem>>, vector<8x256xf32>
    %cst = arith.constant 0.000000e+00 : f32
    %4 = vector.broadcast %cst : f32 to vector<8x256xf32>
    %5 = arith.cmpf ogt, %3, %4 : vector<8x256xf32>
    %cst_1 = arith.constant 0.000000e+00 : f32
    %6 = vector.broadcast %cst_1 : f32 to vector<8x256xf32>
    %7 = arith.minimumf %3, %6 : vector<8x256xf32>
    %8 = math.exp %7 : vector<8x256xf32>
    %cst_2 = arith.constant 1.000000e+00 : f32
    %9 = vector.broadcast %cst_2 : f32 to vector<8x256xf32>
    %10 = arith.subf %8, %9 : vector<8x256xf32>
    %11 = arith.select %5, %3, %10 : vector<8x256xi1>, vector<8x256xf32>
    %c2_i32 = arith.constant 2 : i32
    %12 = tpu.dynamic_rotate %11 by %c2_i32 dim 1 : vector<8x256xf32>, i32 -> vector<8x256xf32>
    %c2_i32_3 = arith.constant 2 : i32
    %13 = vector.broadcast %c2_i32_3 : i32 to vector<1x256xi32>
    %14 = arith.cmpi sge, %2, %13 : vector<1x256xi32>
    %cst_4 = arith.constant -3.40282347E+38 : f32
    %15 = vector.shape_cast %14 : vector<1x256xi1> to vector<1x256xi1>
    %16 = vector.broadcast %15 : vector<1x256xi1> to vector<8x256xi1>
    %17 = vector.broadcast %cst_4 : f32 to vector<8x256xf32>
    %18 = arith.select %16, %12, %17 : vector<8x256xi1>, vector<8x256xf32>
    %19 = arith.maximumf %11, %18 : vector<8x256xf32>
    %c1_i32 = arith.constant 1 : i32
    %20 = tpu.dynamic_rotate %11 by %c1_i32 dim 1 : vector<8x256xf32>, i32 -> vector<8x256xf32>
    %c1_i32_5 = arith.constant 1 : i32
    %21 = vector.broadcast %c1_i32_5 : i32 to vector<1x256xi32>
    %22 = arith.cmpi sge, %2, %21 : vector<1x256xi32>
    %cst_6 = arith.constant -3.40282347E+38 : f32
    %23 = vector.shape_cast %22 : vector<1x256xi1> to vector<1x256xi1>
    %24 = vector.broadcast %23 : vector<1x256xi1> to vector<8x256xi1>
    %25 = vector.broadcast %cst_6 : f32 to vector<8x256xf32>
    %26 = arith.select %24, %20, %25 : vector<8x256xi1>, vector<8x256xf32>
    %27 = arith.maximumf %19, %26 : vector<8x256xf32>
    %c255_i32 = arith.constant 255 : i32
    %28 = tpu.dynamic_rotate %11 by %c255_i32 dim 1 : vector<8x256xf32>, i32 -> vector<8x256xf32>
    %c15_i32_7 = arith.constant 15 : i32
    %29 = vector.broadcast %c15_i32_7 : i32 to vector<1x256xi32>
    %30 = arith.cmpi slt, %2, %29 : vector<1x256xi32>
    %cst_8 = arith.constant -3.40282347E+38 : f32
    %31 = vector.shape_cast %30 : vector<1x256xi1> to vector<1x256xi1>
    %32 = vector.broadcast %31 : vector<1x256xi1> to vector<8x256xi1>
    %33 = vector.broadcast %cst_8 : f32 to vector<8x256xf32>
    %34 = arith.select %32, %28, %33 : vector<8x256xi1>, vector<8x256xf32>
    %35 = arith.maximumf %27, %34 : vector<8x256xf32>
    %c254_i32 = arith.constant 254 : i32
    %36 = tpu.dynamic_rotate %11 by %c254_i32 dim 1 : vector<8x256xf32>, i32 -> vector<8x256xf32>
    %c14_i32 = arith.constant 14 : i32
    %37 = vector.broadcast %c14_i32 : i32 to vector<1x256xi32>
    %38 = arith.cmpi slt, %2, %37 : vector<1x256xi32>
    %cst_9 = arith.constant -3.40282347E+38 : f32
    %39 = vector.shape_cast %38 : vector<1x256xi1> to vector<1x256xi1>
    %40 = vector.broadcast %39 : vector<1x256xi1> to vector<8x256xi1>
    %41 = vector.broadcast %cst_9 : f32 to vector<8x256xf32>
    %42 = arith.select %40, %36, %41 : vector<8x256xi1>, vector<8x256xf32>
    %43 = arith.maximumf %35, %42 : vector<8x256xf32>
    %c32_i32 = arith.constant 32 : i32
    %44 = tpu.dynamic_rotate %43 by %c32_i32 dim 1 : vector<8x256xf32>, i32 -> vector<8x256xf32>
    %c32_i32_10 = arith.constant 32 : i32
    %45 = vector.broadcast %c32_i32_10 : i32 to vector<1x256xi32>
    %46 = arith.cmpi sge, %0, %45 : vector<1x256xi32>
    %cst_11 = arith.constant -3.40282347E+38 : f32
    %47 = vector.shape_cast %46 : vector<1x256xi1> to vector<1x256xi1>
    %48 = vector.broadcast %47 : vector<1x256xi1> to vector<8x256xi1>
    %49 = vector.broadcast %cst_11 : f32 to vector<8x256xf32>
    %50 = arith.select %48, %44, %49 : vector<8x256xi1>, vector<8x256xf32>
    %51 = arith.maximumf %43, %50 : vector<8x256xf32>
    %c16_i32 = arith.constant 16 : i32
    %52 = tpu.dynamic_rotate %43 by %c16_i32 dim 1 : vector<8x256xf32>, i32 -> vector<8x256xf32>
    %c16_i32_12 = arith.constant 16 : i32
    %53 = vector.broadcast %c16_i32_12 : i32 to vector<1x256xi32>
    %54 = arith.cmpi sge, %0, %53 : vector<1x256xi32>
    %cst_13 = arith.constant -3.40282347E+38 : f32
    %55 = vector.shape_cast %54 : vector<1x256xi1> to vector<1x256xi1>
    %56 = vector.broadcast %55 : vector<1x256xi1> to vector<8x256xi1>
    %57 = vector.broadcast %cst_13 : f32 to vector<8x256xf32>
    %58 = arith.select %56, %52, %57 : vector<8x256xi1>, vector<8x256xf32>
    %59 = arith.maximumf %51, %58 : vector<8x256xf32>
    %c240_i32 = arith.constant 240 : i32
    %60 = tpu.dynamic_rotate %43 by %c240_i32 dim 1 : vector<8x256xf32>, i32 -> vector<8x256xf32>
    %c240_i32_14 = arith.constant 240 : i32
    %61 = vector.broadcast %c240_i32_14 : i32 to vector<1x256xi32>
    %62 = arith.cmpi slt, %0, %61 : vector<1x256xi32>
    %cst_15 = arith.constant -3.40282347E+38 : f32
    %63 = vector.shape_cast %62 : vector<1x256xi1> to vector<1x256xi1>
    %64 = vector.broadcast %63 : vector<1x256xi1> to vector<8x256xi1>
    %65 = vector.broadcast %cst_15 : f32 to vector<8x256xf32>
    %66 = arith.select %64, %60, %65 : vector<8x256xi1>, vector<8x256xf32>
    %67 = arith.maximumf %59, %66 : vector<8x256xf32>
    %c224_i32 = arith.constant 224 : i32
    %68 = tpu.dynamic_rotate %43 by %c224_i32 dim 1 : vector<8x256xf32>, i32 -> vector<8x256xf32>
    %c224_i32_16 = arith.constant 224 : i32
    %69 = vector.broadcast %c224_i32_16 : i32 to vector<1x256xi32>
    %70 = arith.cmpi slt, %0, %69 : vector<1x256xi32>
    %cst_17 = arith.constant -3.40282347E+38 : f32
    %71 = vector.shape_cast %70 : vector<1x256xi1> to vector<1x256xi1>
    %72 = vector.broadcast %71 : vector<1x256xi1> to vector<8x256xi1>
    %73 = vector.broadcast %cst_17 : f32 to vector<8x256xf32>
    %74 = arith.select %72, %68, %73 : vector<8x256xi1>, vector<8x256xf32>
    %75 = arith.maximumf %67, %74 : vector<8x256xf32>
    %cst_18 = arith.constant dense<0.000000e+00> : vector<8xf32>
    %76 = vector.multi_reduction <add>, %75, %cst_18 [1] : vector<8x256xf32> to vector<8xf32>
    %77 = vector.shape_cast %76 : vector<8xf32> to vector<8x1xf32>
    %cst_19 = arith.constant 3.906250e-03 : f32
    %78 = vector.broadcast %cst_19 : f32 to vector<8x1xf32>
    %79 = arith.mulf %77, %78 : vector<8x1xf32>
    %80 = arith.mulf %75, %75 : vector<8x256xf32>
    %cst_20 = arith.constant dense<0.000000e+00> : vector<8xf32>
    %81 = vector.multi_reduction <add>, %80, %cst_20 [1] : vector<8x256xf32> to vector<8xf32>
    %82 = vector.shape_cast %81 : vector<8xf32> to vector<8x1xf32>
    %cst_21 = arith.constant 3.906250e-03 : f32
    %83 = vector.broadcast %cst_21 : f32 to vector<8x1xf32>
    %84 = arith.mulf %82, %83 : vector<8x1xf32>
    %85 = arith.mulf %79, %79 : vector<8x1xf32>
    %86 = arith.subf %84, %85 : vector<8x1xf32>
    %cst_22 = arith.constant 0.000000e+00 : f32
    %87 = vector.broadcast %cst_22 : f32 to vector<8x1xf32>
    %88 = arith.maximumf %86, %87 : vector<8x1xf32>
    %89 = vector.broadcast %79 : vector<8x1xf32> to vector<8x256xf32>
    %90 = arith.subf %75, %89 : vector<8x256xf32>
    %cst_23 = arith.constant 9.99999974E-6 : f32
    %91 = vector.broadcast %cst_23 : f32 to vector<8x1xf32>
    %92 = arith.addf %88, %91 : vector<8x1xf32>
    %93 = math.rsqrt %92 : vector<8x1xf32>
    %94 = vector.broadcast %93 : vector<8x1xf32> to vector<8x256xf32>
    %95 = arith.mulf %90, %94 : vector<8x256xf32>
    %cst_24 = arith.constant 0.000000e+00 : f32
    %96 = vector.broadcast %cst_24 : f32 to vector<4x256xf32>
    %cst_25 = arith.constant 0.000000e+00 : f32
    %97 = vector.broadcast %cst_25 : f32 to vector<4x256xf32>
    %c17_i32 = arith.constant 17 : i32
    %98 = tpu.dynamic_rotate %95 by %c17_i32 dim 1 : vector<8x256xf32>, i32 -> vector<8x256xf32>
    %c1_i32_26 = arith.constant 1 : i32
    %99 = vector.broadcast %c1_i32_26 : i32 to vector<1x256xi32>
    %100 = arith.cmpi sge, %2, %99 : vector<1x256xi32>
    %c16_i32_27 = arith.constant 16 : i32
    %101 = vector.broadcast %c16_i32_27 : i32 to vector<1x256xi32>
    %102 = arith.cmpi sge, %0, %101 : vector<1x256xi32>
    %103 = arith.andi %100, %102 : vector<1x256xi1>
    %cst_28 = arith.constant 0.000000e+00 : f32
    %104 = vector.shape_cast %103 : vector<1x256xi1> to vector<1x256xi1>
    %105 = vector.broadcast %104 : vector<1x256xi1> to vector<8x256xi1>
    %106 = vector.broadcast %cst_28 : f32 to vector<8x256xf32>
    %107 = arith.select %105, %98, %106 : vector<8x256xi1>, vector<8x256xf32>
    %c0_29 = arith.constant 0 : index
    %c0_30 = arith.constant 0 : index
    %108 = vector.load %arg2[%c0_29, %c0_30] : memref<72x4xf32, #tpu.memory_space<vmem>>, vector<4x4xf32>
    %109 = vector.extract_strided_slice %108 {offsets = [0, 0], sizes = [4, 1], strides = [1, 1]} : vector<4x4xf32> to vector<4x1xf32>
    %110 = vector.extract_strided_slice %107 {offsets = [0, 0], sizes = [1, 256], strides = [1, 1]} : vector<8x256xf32> to vector<1x256xf32>
    %111 = vector.broadcast %109 : vector<4x1xf32> to vector<4x256xf32>
    %112 = vector.broadcast %110 : vector<1x256xf32> to vector<4x256xf32>
    %113 = arith.mulf %111, %112 : vector<4x256xf32>
    %114 = arith.addf %96, %113 : vector<4x256xf32>
    %115 = vector.extract_strided_slice %108 {offsets = [0, 1], sizes = [4, 1], strides = [1, 1]} : vector<4x4xf32> to vector<4x1xf32>
    %116 = vector.extract_strided_slice %107 {offsets = [1, 0], sizes = [1, 256], strides = [1, 1]} : vector<8x256xf32> to vector<1x256xf32>
    %117 = vector.broadcast %115 : vector<4x1xf32> to vector<4x256xf32>
    %118 = vector.broadcast %116 : vector<1x256xf32> to vector<4x256xf32>
    %119 = arith.mulf %117, %118 : vector<4x256xf32>
    %120 = arith.addf %114, %119 : vector<4x256xf32>
    %121 = vector.extract_strided_slice %108 {offsets = [0, 2], sizes = [4, 1], strides = [1, 1]} : vector<4x4xf32> to vector<4x1xf32>
    %122 = vector.extract_strided_slice %107 {offsets = [2, 0], sizes = [1, 256], strides = [1, 1]} : vector<8x256xf32> to vector<1x256xf32>
    %123 = vector.broadcast %121 : vector<4x1xf32> to vector<4x256xf32>
    %124 = vector.broadcast %122 : vector<1x256xf32> to vector<4x256xf32>
    %125 = arith.mulf %123, %124 : vector<4x256xf32>
    %126 = arith.addf %120, %125 : vector<4x256xf32>
    %127 = vector.extract_strided_slice %108 {offsets = [0, 3], sizes = [4, 1], strides = [1, 1]} : vector<4x4xf32> to vector<4x1xf32>
    %128 = vector.extract_strided_slice %107 {offsets = [3, 0], sizes = [1, 256], strides = [1, 1]} : vector<8x256xf32> to vector<1x256xf32>
    %129 = vector.broadcast %127 : vector<4x1xf32> to vector<4x256xf32>
    %130 = vector.broadcast %128 : vector<1x256xf32> to vector<4x256xf32>
    %131 = arith.mulf %129, %130 : vector<4x256xf32>
    %132 = arith.addf %126, %131 : vector<4x256xf32>
    %133 = vector.extract_strided_slice %108 {offsets = [0, 0], sizes = [4, 1], strides = [1, 1]} : vector<4x4xf32> to vector<4x1xf32>
    %134 = vector.extract_strided_slice %107 {offsets = [4, 0], sizes = [1, 256], strides = [1, 1]} : vector<8x256xf32> to vector<1x256xf32>
    %135 = vector.broadcast %133 : vector<4x1xf32> to vector<4x256xf32>
    %136 = vector.broadcast %134 : vector<1x256xf32> to vector<4x256xf32>
    %137 = arith.mulf %135, %136 : vector<4x256xf32>
    %138 = arith.addf %97, %137 : vector<4x256xf32>
    %139 = vector.extract_strided_slice %108 {offsets = [0, 1], sizes = [4, 1], strides = [1, 1]} : vector<4x4xf32> to vector<4x1xf32>
    %140 = vector.extract_strided_slice %107 {offsets = [5, 0], sizes = [1, 256], strides = [1, 1]} : vector<8x256xf32> to vector<1x256xf32>
    %141 = vector.broadcast %139 : vector<4x1xf32> to vector<4x256xf32>
    %142 = vector.broadcast %140 : vector<1x256xf32> to vector<4x256xf32>
    %143 = arith.mulf %141, %142 : vector<4x256xf32>
    %144 = arith.addf %138, %143 : vector<4x256xf32>
    %145 = vector.extract_strided_slice %108 {offsets = [0, 2], sizes = [4, 1], strides = [1, 1]} : vector<4x4xf32> to vector<4x1xf32>
    %146 = vector.extract_strided_slice %107 {offsets = [6, 0], sizes = [1, 256], strides = [1, 1]} : vector<8x256xf32> to vector<1x256xf32>
    %147 = vector.broadcast %145 : vector<4x1xf32> to vector<4x256xf32>
    %148 = vector.broadcast %146 : vector<1x256xf32> to vector<4x256xf32>
    %149 = arith.mulf %147, %148 : vector<4x256xf32>
    %150 = arith.addf %144, %149 : vector<4x256xf32>
    %151 = vector.extract_strided_slice %108 {offsets = [0, 3], sizes = [4, 1], strides = [1, 1]} : vector<4x4xf32> to vector<4x1xf32>
    %152 = vector.extract_strided_slice %107 {offsets = [7, 0], sizes = [1, 256], strides = [1, 1]} : vector<8x256xf32> to vector<1x256xf32>
    %153 = vector.broadcast %151 : vector<4x1xf32> to vector<4x256xf32>
    %154 = vector.broadcast %152 : vector<1x256xf32> to vector<4x256xf32>
    %155 = arith.mulf %153, %154 : vector<4x256xf32>
    %156 = arith.addf %150, %155 : vector<4x256xf32>
    %c16_i32_31 = arith.constant 16 : i32
    %157 = tpu.dynamic_rotate %95 by %c16_i32_31 dim 1 : vector<8x256xf32>, i32 -> vector<8x256xf32>
    %c16_i32_32 = arith.constant 16 : i32
    %158 = vector.broadcast %c16_i32_32 : i32 to vector<1x256xi32>
    %159 = arith.cmpi sge, %0, %158 : vector<1x256xi32>
    %cst_33 = arith.constant 0.000000e+00 : f32
    %160 = vector.shape_cast %159 : vector<1x256xi1> to vector<1x256xi1>
    %161 = vector.broadcast %160 : vector<1x256xi1> to vector<8x256xi1>
    %162 = vector.broadcast %cst_33 : f32 to vector<8x256xf32>
    %163 = arith.select %161, %157, %162 : vector<8x256xi1>, vector<8x256xf32>
    %c4 = arith.constant 4 : index
    %c0_34 = arith.constant 0 : index
    %164 = vector.load %arg2[%c4, %c0_34] : memref<72x4xf32, #tpu.memory_space<vmem>>, vector<4x4xf32>
    %165 = vector.extract_strided_slice %164 {offsets = [0, 0], sizes = [4, 1], strides = [1, 1]} : vector<4x4xf32> to vector<4x1xf32>
    %166 = vector.extract_strided_slice %163 {offsets = [0, 0], sizes = [1, 256], strides = [1, 1]} : vector<8x256xf32> to vector<1x256xf32>
    %167 = vector.broadcast %165 : vector<4x1xf32> to vector<4x256xf32>
    %168 = vector.broadcast %166 : vector<1x256xf32> to vector<4x256xf32>
    %169 = arith.mulf %167, %168 : vector<4x256xf32>
    %170 = arith.addf %132, %169 : vector<4x256xf32>
    %171 = vector.extract_strided_slice %164 {offsets = [0, 1], sizes = [4, 1], strides = [1, 1]} : vector<4x4xf32> to vector<4x1xf32>
    %172 = vector.extract_strided_slice %163 {offsets = [1, 0], sizes = [1, 256], strides = [1, 1]} : vector<8x256xf32> to vector<1x256xf32>
    %173 = vector.broadcast %171 : vector<4x1xf32> to vector<4x256xf32>
    %174 = vector.broadcast %172 : vector<1x256xf32> to vector<4x256xf32>
    %175 = arith.mulf %173, %174 : vector<4x256xf32>
    %176 = arith.addf %170, %175 : vector<4x256xf32>
    %177 = vector.extract_strided_slice %164 {offsets = [0, 2], sizes = [4, 1], strides = [1, 1]} : vector<4x4xf32> to vector<4x1xf32>
    %178 = vector.extract_strided_slice %163 {offsets = [2, 0], sizes = [1, 256], strides = [1, 1]} : vector<8x256xf32> to vector<1x256xf32>
    %179 = vector.broadcast %177 : vector<4x1xf32> to vector<4x256xf32>
    %180 = vector.broadcast %178 : vector<1x256xf32> to vector<4x256xf32>
    %181 = arith.mulf %179, %180 : vector<4x256xf32>
    %182 = arith.addf %176, %181 : vector<4x256xf32>
    %183 = vector.extract_strided_slice %164 {offsets = [0, 3], sizes = [4, 1], strides = [1, 1]} : vector<4x4xf32> to vector<4x1xf32>
    %184 = vector.extract_strided_slice %163 {offsets = [3, 0], sizes = [1, 256], strides = [1, 1]} : vector<8x256xf32> to vector<1x256xf32>
    %185 = vector.broadcast %183 : vector<4x1xf32> to vector<4x256xf32>
    %186 = vector.broadcast %184 : vector<1x256xf32> to vector<4x256xf32>
    %187 = arith.mulf %185, %186 : vector<4x256xf32>
    %188 = arith.addf %182, %187 : vector<4x256xf32>
    %189 = vector.extract_strided_slice %164 {offsets = [0, 0], sizes = [4, 1], strides = [1, 1]} : vector<4x4xf32> to vector<4x1xf32>
    %190 = vector.extract_strided_slice %163 {offsets = [4, 0], sizes = [1, 256], strides = [1, 1]} : vector<8x256xf32> to vector<1x256xf32>
    %191 = vector.broadcast %189 : vector<4x1xf32> to vector<4x256xf32>
    %192 = vector.broadcast %190 : vector<1x256xf32> to vector<4x256xf32>
    %193 = arith.mulf %191, %192 : vector<4x256xf32>
    %194 = arith.addf %156, %193 : vector<4x256xf32>
    %195 = vector.extract_strided_slice %164 {offsets = [0, 1], sizes = [4, 1], strides = [1, 1]} : vector<4x4xf32> to vector<4x1xf32>
    %196 = vector.extract_strided_slice %163 {offsets = [5, 0], sizes = [1, 256], strides = [1, 1]} : vector<8x256xf32> to vector<1x256xf32>
    %197 = vector.broadcast %195 : vector<4x1xf32> to vector<4x256xf32>
    %198 = vector.broadcast %196 : vector<1x256xf32> to vector<4x256xf32>
    %199 = arith.mulf %197, %198 : vector<4x256xf32>
    %200 = arith.addf %194, %199 : vector<4x256xf32>
    %201 = vector.extract_strided_slice %164 {offsets = [0, 2], sizes = [4, 1], strides = [1, 1]} : vector<4x4xf32> to vector<4x1xf32>
    %202 = vector.extract_strided_slice %163 {offsets = [6, 0], sizes = [1, 256], strides = [1, 1]} : vector<8x256xf32> to vector<1x256xf32>
    %203 = vector.broadcast %201 : vector<4x1xf32> to vector<4x256xf32>
    %204 = vector.broadcast %202 : vector<1x256xf32> to vector<4x256xf32>
    %205 = arith.mulf %203, %204 : vector<4x256xf32>
    %206 = arith.addf %200, %205 : vector<4x256xf32>
    %207 = vector.extract_strided_slice %164 {offsets = [0, 3], sizes = [4, 1], strides = [1, 1]} : vector<4x4xf32> to vector<4x1xf32>
    %208 = vector.extract_strided_slice %163 {offsets = [7, 0], sizes = [1, 256], strides = [1, 1]} : vector<8x256xf32> to vector<1x256xf32>
    %209 = vector.broadcast %207 : vector<4x1xf32> to vector<4x256xf32>
    %210 = vector.broadcast %208 : vector<1x256xf32> to vector<4x256xf32>
    %211 = arith.mulf %209, %210 : vector<4x256xf32>
    %212 = arith.addf %206, %211 : vector<4x256xf32>
    %c15_i32_35 = arith.constant 15 : i32
    %213 = tpu.dynamic_rotate %95 by %c15_i32_35 dim 1 : vector<8x256xf32>, i32 -> vector<8x256xf32>
    %c15_i32_36 = arith.constant 15 : i32
    %214 = vector.broadcast %c15_i32_36 : i32 to vector<1x256xi32>
    %215 = arith.cmpi slt, %2, %214 : vector<1x256xi32>
    %c16_i32_37 = arith.constant 16 : i32
    %216 = vector.broadcast %c16_i32_37 : i32 to vector<1x256xi32>
    %217 = arith.cmpi sge, %0, %216 : vector<1x256xi32>
    %218 = arith.andi %215, %217 : vector<1x256xi1>
    %cst_38 = arith.constant 0.000000e+00 : f32
    %219 = vector.shape_cast %218 : vector<1x256xi1> to vector<1x256xi1>
    %220 = vector.broadcast %219 : vector<1x256xi1> to vector<8x256xi1>
    %221 = vector.broadcast %cst_38 : f32 to vector<8x256xf32>
    %222 = arith.select %220, %213, %221 : vector<8x256xi1>, vector<8x256xf32>
    %c8 = arith.constant 8 : index
    %c0_39 = arith.constant 0 : index
    %223 = vector.load %arg2[%c8, %c0_39] : memref<72x4xf32, #tpu.memory_space<vmem>>, vector<4x4xf32>
    %224 = vector.extract_strided_slice %223 {offsets = [0, 0], sizes = [4, 1], strides = [1, 1]} : vector<4x4xf32> to vector<4x1xf32>
    %225 = vector.extract_strided_slice %222 {offsets = [0, 0], sizes = [1, 256], strides = [1, 1]} : vector<8x256xf32> to vector<1x256xf32>
    %226 = vector.broadcast %224 : vector<4x1xf32> to vector<4x256xf32>
    %227 = vector.broadcast %225 : vector<1x256xf32> to vector<4x256xf32>
    %228 = arith.mulf %226, %227 : vector<4x256xf32>
    %229 = arith.addf %188, %228 : vector<4x256xf32>
    %230 = vector.extract_strided_slice %223 {offsets = [0, 1], sizes = [4, 1], strides = [1, 1]} : vector<4x4xf32> to vector<4x1xf32>
    %231 = vector.extract_strided_slice %222 {offsets = [1, 0], sizes = [1, 256], strides = [1, 1]} : vector<8x256xf32> to vector<1x256xf32>
    %232 = vector.broadcast %230 : vector<4x1xf32> to vector<4x256xf32>
    %233 = vector.broadcast %231 : vector<1x256xf32> to vector<4x256xf32>
    %234 = arith.mulf %232, %233 : vector<4x256xf32>
    %235 = arith.addf %229, %234 : vector<4x256xf32>
    %236 = vector.extract_strided_slice %223 {offsets = [0, 2], sizes = [4, 1], strides = [1, 1]} : vector<4x4xf32> to vector<4x1xf32>
    %237 = vector.extract_strided_slice %222 {offsets = [2, 0], sizes = [1, 256], strides = [1, 1]} : vector<8x256xf32> to vector<1x256xf32>
    %238 = vector.broadcast %236 : vector<4x1xf32> to vector<4x256xf32>
    %239 = vector.broadcast %237 : vector<1x256xf32> to vector<4x256xf32>
    %240 = arith.mulf %238, %239 : vector<4x256xf32>
    %241 = arith.addf %235, %240 : vector<4x256xf32>
    %242 = vector.extract_strided_slice %223 {offsets = [0, 3], sizes = [4, 1], strides = [1, 1]} : vector<4x4xf32> to vector<4x1xf32>
    %243 = vector.extract_strided_slice %222 {offsets = [3, 0], sizes = [1, 256], strides = [1, 1]} : vector<8x256xf32> to vector<1x256xf32>
    %244 = vector.broadcast %242 : vector<4x1xf32> to vector<4x256xf32>
    %245 = vector.broadcast %243 : vector<1x256xf32> to vector<4x256xf32>
    %246 = arith.mulf %244, %245 : vector<4x256xf32>
    %247 = arith.addf %241, %246 : vector<4x256xf32>
    %248 = vector.extract_strided_slice %223 {offsets = [0, 0], sizes = [4, 1], strides = [1, 1]} : vector<4x4xf32> to vector<4x1xf32>
    %249 = vector.extract_strided_slice %222 {offsets = [4, 0], sizes = [1, 256], strides = [1, 1]} : vector<8x256xf32> to vector<1x256xf32>
    %250 = vector.broadcast %248 : vector<4x1xf32> to vector<4x256xf32>
    %251 = vector.broadcast %249 : vector<1x256xf32> to vector<4x256xf32>
    %252 = arith.mulf %250, %251 : vector<4x256xf32>
    %253 = arith.addf %212, %252 : vector<4x256xf32>
    %254 = vector.extract_strided_slice %223 {offsets = [0, 1], sizes = [4, 1], strides = [1, 1]} : vector<4x4xf32> to vector<4x1xf32>
    %255 = vector.extract_strided_slice %222 {offsets = [5, 0], sizes = [1, 256], strides = [1, 1]} : vector<8x256xf32> to vector<1x256xf32>
    %256 = vector.broadcast %254 : vector<4x1xf32> to vector<4x256xf32>
    %257 = vector.broadcast %255 : vector<1x256xf32> to vector<4x256xf32>
    %258 = arith.mulf %256, %257 : vector<4x256xf32>
    %259 = arith.addf %253, %258 : vector<4x256xf32>
    %260 = vector.extract_strided_slice %223 {offsets = [0, 2], sizes = [4, 1], strides = [1, 1]} : vector<4x4xf32> to vector<4x1xf32>
    %261 = vector.extract_strided_slice %222 {offsets = [6, 0], sizes = [1, 256], strides = [1, 1]} : vector<8x256xf32> to vector<1x256xf32>
    %262 = vector.broadcast %260 : vector<4x1xf32> to vector<4x256xf32>
    %263 = vector.broadcast %261 : vector<1x256xf32> to vector<4x256xf32>
    %264 = arith.mulf %262, %263 : vector<4x256xf32>
    %265 = arith.addf %259, %264 : vector<4x256xf32>
    %266 = vector.extract_strided_slice %223 {offsets = [0, 3], sizes = [4, 1], strides = [1, 1]} : vector<4x4xf32> to vector<4x1xf32>
    %267 = vector.extract_strided_slice %222 {offsets = [7, 0], sizes = [1, 256], strides = [1, 1]} : vector<8x256xf32> to vector<1x256xf32>
    %268 = vector.broadcast %266 : vector<4x1xf32> to vector<4x256xf32>
    %269 = vector.broadcast %267 : vector<1x256xf32> to vector<4x256xf32>
    %270 = arith.mulf %268, %269 : vector<4x256xf32>
    %271 = arith.addf %265, %270 : vector<4x256xf32>
    %c1_i32_40 = arith.constant 1 : i32
    %272 = tpu.dynamic_rotate %95 by %c1_i32_40 dim 1 : vector<8x256xf32>, i32 -> vector<8x256xf32>
    %c1_i32_41 = arith.constant 1 : i32
    %273 = vector.broadcast %c1_i32_41 : i32 to vector<1x256xi32>
    %274 = arith.cmpi sge, %2, %273 : vector<1x256xi32>
    %cst_42 = arith.constant 0.000000e+00 : f32
    %275 = vector.shape_cast %274 : vector<1x256xi1> to vector<1x256xi1>
    %276 = vector.broadcast %275 : vector<1x256xi1> to vector<8x256xi1>
    %277 = vector.broadcast %cst_42 : f32 to vector<8x256xf32>
    %278 = arith.select %276, %272, %277 : vector<8x256xi1>, vector<8x256xf32>
    %c12 = arith.constant 12 : index
    %c0_43 = arith.constant 0 : index
    %279 = vector.load %arg2[%c12, %c0_43] : memref<72x4xf32, #tpu.memory_space<vmem>>, vector<4x4xf32>
    %280 = vector.extract_strided_slice %279 {offsets = [0, 0], sizes = [4, 1], strides = [1, 1]} : vector<4x4xf32> to vector<4x1xf32>
    %281 = vector.extract_strided_slice %278 {offsets = [0, 0], sizes = [1, 256], strides = [1, 1]} : vector<8x256xf32> to vector<1x256xf32>
    %282 = vector.broadcast %280 : vector<4x1xf32> to vector<4x256xf32>
    %283 = vector.broadcast %281 : vector<1x256xf32> to vector<4x256xf32>
    %284 = arith.mulf %282, %283 : vector<4x256xf32>
    %285 = arith.addf %247, %284 : vector<4x256xf32>
    %286 = vector.extract_strided_slice %279 {offsets = [0, 1], sizes = [4, 1], strides = [1, 1]} : vector<4x4xf32> to vector<4x1xf32>
    %287 = vector.extract_strided_slice %278 {offsets = [1, 0], sizes = [1, 256], strides = [1, 1]} : vector<8x256xf32> to vector<1x256xf32>
    %288 = vector.broadcast %286 : vector<4x1xf32> to vector<4x256xf32>
    %289 = vector.broadcast %287 : vector<1x256xf32> to vector<4x256xf32>
    %290 = arith.mulf %288, %289 : vector<4x256xf32>
    %291 = arith.addf %285, %290 : vector<4x256xf32>
    %292 = vector.extract_strided_slice %279 {offsets = [0, 2], sizes = [4, 1], strides = [1, 1]} : vector<4x4xf32> to vector<4x1xf32>
    %293 = vector.extract_strided_slice %278 {offsets = [2, 0], sizes = [1, 256], strides = [1, 1]} : vector<8x256xf32> to vector<1x256xf32>
    %294 = vector.broadcast %292 : vector<4x1xf32> to vector<4x256xf32>
    %295 = vector.broadcast %293 : vector<1x256xf32> to vector<4x256xf32>
    %296 = arith.mulf %294, %295 : vector<4x256xf32>
    %297 = arith.addf %291, %296 : vector<4x256xf32>
    %298 = vector.extract_strided_slice %279 {offsets = [0, 3], sizes = [4, 1], strides = [1, 1]} : vector<4x4xf32> to vector<4x1xf32>
    %299 = vector.extract_strided_slice %278 {offsets = [3, 0], sizes = [1, 256], strides = [1, 1]} : vector<8x256xf32> to vector<1x256xf32>
    %300 = vector.broadcast %298 : vector<4x1xf32> to vector<4x256xf32>
    %301 = vector.broadcast %299 : vector<1x256xf32> to vector<4x256xf32>
    %302 = arith.mulf %300, %301 : vector<4x256xf32>
    %303 = arith.addf %297, %302 : vector<4x256xf32>
    %304 = vector.extract_strided_slice %279 {offsets = [0, 0], sizes = [4, 1], strides = [1, 1]} : vector<4x4xf32> to vector<4x1xf32>
    %305 = vector.extract_strided_slice %278 {offsets = [4, 0], sizes = [1, 256], strides = [1, 1]} : vector<8x256xf32> to vector<1x256xf32>
    %306 = vector.broadcast %304 : vector<4x1xf32> to vector<4x256xf32>
    %307 = vector.broadcast %305 : vector<1x256xf32> to vector<4x256xf32>
    %308 = arith.mulf %306, %307 : vector<4x256xf32>
    %309 = arith.addf %271, %308 : vector<4x256xf32>
    %310 = vector.extract_strided_slice %279 {offsets = [0, 1], sizes = [4, 1], strides = [1, 1]} : vector<4x4xf32> to vector<4x1xf32>
    %311 = vector.extract_strided_slice %278 {offsets = [5, 0], sizes = [1, 256], strides = [1, 1]} : vector<8x256xf32> to vector<1x256xf32>
    %312 = vector.broadcast %310 : vector<4x1xf32> to vector<4x256xf32>
    %313 = vector.broadcast %311 : vector<1x256xf32> to vector<4x256xf32>
    %314 = arith.mulf %312, %313 : vector<4x256xf32>
    %315 = arith.addf %309, %314 : vector<4x256xf32>
    %316 = vector.extract_strided_slice %279 {offsets = [0, 2], sizes = [4, 1], strides = [1, 1]} : vector<4x4xf32> to vector<4x1xf32>
    %317 = vector.extract_strided_slice %278 {offsets = [6, 0], sizes = [1, 256], strides = [1, 1]} : vector<8x256xf32> to vector<1x256xf32>
    %318 = vector.broadcast %316 : vector<4x1xf32> to vector<4x256xf32>
    %319 = vector.broadcast %317 : vector<1x256xf32> to vector<4x256xf32>
    %320 = arith.mulf %318, %319 : vector<4x256xf32>
    %321 = arith.addf %315, %320 : vector<4x256xf32>
    %322 = vector.extract_strided_slice %279 {offsets = [0, 3], sizes = [4, 1], strides = [1, 1]} : vector<4x4xf32> to vector<4x1xf32>
    %323 = vector.extract_strided_slice %278 {offsets = [7, 0], sizes = [1, 256], strides = [1, 1]} : vector<8x256xf32> to vector<1x256xf32>
    %324 = vector.broadcast %322 : vector<4x1xf32> to vector<4x256xf32>
    %325 = vector.broadcast %323 : vector<1x256xf32> to vector<4x256xf32>
    %326 = arith.mulf %324, %325 : vector<4x256xf32>
    %327 = arith.addf %321, %326 : vector<4x256xf32>
    %c16 = arith.constant 16 : index
    %c0_44 = arith.constant 0 : index
    %328 = vector.load %arg2[%c16, %c0_44] : memref<72x4xf32, #tpu.memory_space<vmem>>, vector<4x4xf32>
    %329 = vector.extract_strided_slice %328 {offsets = [0, 0], sizes = [4, 1], strides = [1, 1]} : vector<4x4xf32> to vector<4x1xf32>
    %330 = vector.extract_strided_slice %95 {offsets = [0, 0], sizes = [1, 256], strides = [1, 1]} : vector<8x256xf32> to vector<1x256xf32>
    %331 = vector.broadcast %329 : vector<4x1xf32> to vector<4x256xf32>
    %332 = vector.broadcast %330 : vector<1x256xf32> to vector<4x256xf32>
    %333 = arith.mulf %331, %332 : vector<4x256xf32>
    %334 = arith.addf %303, %333 : vector<4x256xf32>
    %335 = vector.extract_strided_slice %328 {offsets = [0, 1], sizes = [4, 1], strides = [1, 1]} : vector<4x4xf32> to vector<4x1xf32>
    %336 = vector.extract_strided_slice %95 {offsets = [1, 0], sizes = [1, 256], strides = [1, 1]} : vector<8x256xf32> to vector<1x256xf32>
    %337 = vector.broadcast %335 : vector<4x1xf32> to vector<4x256xf32>
    %338 = vector.broadcast %336 : vector<1x256xf32> to vector<4x256xf32>
    %339 = arith.mulf %337, %338 : vector<4x256xf32>
    %340 = arith.addf %334, %339 : vector<4x256xf32>
    %341 = vector.extract_strided_slice %328 {offsets = [0, 2], sizes = [4, 1], strides = [1, 1]} : vector<4x4xf32> to vector<4x1xf32>
    %342 = vector.extract_strided_slice %95 {offsets = [2, 0], sizes = [1, 256], strides = [1, 1]} : vector<8x256xf32> to vector<1x256xf32>
    %343 = vector.broadcast %341 : vector<4x1xf32> to vector<4x256xf32>
    %344 = vector.broadcast %342 : vector<1x256xf32> to vector<4x256xf32>
    %345 = arith.mulf %343, %344 : vector<4x256xf32>
    %346 = arith.addf %340, %345 : vector<4x256xf32>
    %347 = vector.extract_strided_slice %328 {offsets = [0, 3], sizes = [4, 1], strides = [1, 1]} : vector<4x4xf32> to vector<4x1xf32>
    %348 = vector.extract_strided_slice %95 {offsets = [3, 0], sizes = [1, 256], strides = [1, 1]} : vector<8x256xf32> to vector<1x256xf32>
    %349 = vector.broadcast %347 : vector<4x1xf32> to vector<4x256xf32>
    %350 = vector.broadcast %348 : vector<1x256xf32> to vector<4x256xf32>
    %351 = arith.mulf %349, %350 : vector<4x256xf32>
    %352 = arith.addf %346, %351 : vector<4x256xf32>
    %353 = vector.extract_strided_slice %328 {offsets = [0, 0], sizes = [4, 1], strides = [1, 1]} : vector<4x4xf32> to vector<4x1xf32>
    %354 = vector.extract_strided_slice %95 {offsets = [4, 0], sizes = [1, 256], strides = [1, 1]} : vector<8x256xf32> to vector<1x256xf32>
    %355 = vector.broadcast %353 : vector<4x1xf32> to vector<4x256xf32>
    %356 = vector.broadcast %354 : vector<1x256xf32> to vector<4x256xf32>
    %357 = arith.mulf %355, %356 : vector<4x256xf32>
    %358 = arith.addf %327, %357 : vector<4x256xf32>
    %359 = vector.extract_strided_slice %328 {offsets = [0, 1], sizes = [4, 1], strides = [1, 1]} : vector<4x4xf32> to vector<4x1xf32>
    %360 = vector.extract_strided_slice %95 {offsets = [5, 0], sizes = [1, 256], strides = [1, 1]} : vector<8x256xf32> to vector<1x256xf32>
    %361 = vector.broadcast %359 : vector<4x1xf32> to vector<4x256xf32>
    %362 = vector.broadcast %360 : vector<1x256xf32> to vector<4x256xf32>
    %363 = arith.mulf %361, %362 : vector<4x256xf32>
    %364 = arith.addf %358, %363 : vector<4x256xf32>
    %365 = vector.extract_strided_slice %328 {offsets = [0, 2], sizes = [4, 1], strides = [1, 1]} : vector<4x4xf32> to vector<4x1xf32>
    %366 = vector.extract_strided_slice %95 {offsets = [6, 0], sizes = [1, 256], strides = [1, 1]} : vector<8x256xf32> to vector<1x256xf32>
    %367 = vector.broadcast %365 : vector<4x1xf32> to vector<4x256xf32>
    %368 = vector.broadcast %366 : vector<1x256xf32> to vector<4x256xf32>
    %369 = arith.mulf %367, %368 : vector<4x256xf32>
    %370 = arith.addf %364, %369 : vector<4x256xf32>
    %371 = vector.extract_strided_slice %328 {offsets = [0, 3], sizes = [4, 1], strides = [1, 1]} : vector<4x4xf32> to vector<4x1xf32>
    %372 = vector.extract_strided_slice %95 {offsets = [7, 0], sizes = [1, 256], strides = [1, 1]} : vector<8x256xf32> to vector<1x256xf32>
    %373 = vector.broadcast %371 : vector<4x1xf32> to vector<4x256xf32>
    %374 = vector.broadcast %372 : vector<1x256xf32> to vector<4x256xf32>
    %375 = arith.mulf %373, %374 : vector<4x256xf32>
    %376 = arith.addf %370, %375 : vector<4x256xf32>
    %c255_i32_45 = arith.constant 255 : i32
    %377 = tpu.dynamic_rotate %95 by %c255_i32_45 dim 1 : vector<8x256xf32>, i32 -> vector<8x256xf32>
    %c15_i32_46 = arith.constant 15 : i32
    %378 = vector.broadcast %c15_i32_46 : i32 to vector<1x256xi32>
    %379 = arith.cmpi slt, %2, %378 : vector<1x256xi32>
    %cst_47 = arith.constant 0.000000e+00 : f32
    %380 = vector.shape_cast %379 : vector<1x256xi1> to vector<1x256xi1>
    %381 = vector.broadcast %380 : vector<1x256xi1> to vector<8x256xi1>
    %382 = vector.broadcast %cst_47 : f32 to vector<8x256xf32>
    %383 = arith.select %381, %377, %382 : vector<8x256xi1>, vector<8x256xf32>
    %c20 = arith.constant 20 : index
    %c0_48 = arith.constant 0 : index
    %384 = vector.load %arg2[%c20, %c0_48] : memref<72x4xf32, #tpu.memory_space<vmem>>, vector<4x4xf32>
    %385 = vector.extract_strided_slice %384 {offsets = [0, 0], sizes = [4, 1], strides = [1, 1]} : vector<4x4xf32> to vector<4x1xf32>
    %386 = vector.extract_strided_slice %383 {offsets = [0, 0], sizes = [1, 256], strides = [1, 1]} : vector<8x256xf32> to vector<1x256xf32>
    %387 = vector.broadcast %385 : vector<4x1xf32> to vector<4x256xf32>
    %388 = vector.broadcast %386 : vector<1x256xf32> to vector<4x256xf32>
    %389 = arith.mulf %387, %388 : vector<4x256xf32>
    %390 = arith.addf %352, %389 : vector<4x256xf32>
    %391 = vector.extract_strided_slice %384 {offsets = [0, 1], sizes = [4, 1], strides = [1, 1]} : vector<4x4xf32> to vector<4x1xf32>
    %392 = vector.extract_strided_slice %383 {offsets = [1, 0], sizes = [1, 256], strides = [1, 1]} : vector<8x256xf32> to vector<1x256xf32>
    %393 = vector.broadcast %391 : vector<4x1xf32> to vector<4x256xf32>
    %394 = vector.broadcast %392 : vector<1x256xf32> to vector<4x256xf32>
    %395 = arith.mulf %393, %394 : vector<4x256xf32>
    %396 = arith.addf %390, %395 : vector<4x256xf32>
    %397 = vector.extract_strided_slice %384 {offsets = [0, 2], sizes = [4, 1], strides = [1, 1]} : vector<4x4xf32> to vector<4x1xf32>
    %398 = vector.extract_strided_slice %383 {offsets = [2, 0], sizes = [1, 256], strides = [1, 1]} : vector<8x256xf32> to vector<1x256xf32>
    %399 = vector.broadcast %397 : vector<4x1xf32> to vector<4x256xf32>
    %400 = vector.broadcast %398 : vector<1x256xf32> to vector<4x256xf32>
    %401 = arith.mulf %399, %400 : vector<4x256xf32>
    %402 = arith.addf %396, %401 : vector<4x256xf32>
    %403 = vector.extract_strided_slice %384 {offsets = [0, 3], sizes = [4, 1], strides = [1, 1]} : vector<4x4xf32> to vector<4x1xf32>
    %404 = vector.extract_strided_slice %383 {offsets = [3, 0], sizes = [1, 256], strides = [1, 1]} : vector<8x256xf32> to vector<1x256xf32>
    %405 = vector.broadcast %403 : vector<4x1xf32> to vector<4x256xf32>
    %406 = vector.broadcast %404 : vector<1x256xf32> to vector<4x256xf32>
    %407 = arith.mulf %405, %406 : vector<4x256xf32>
    %408 = arith.addf %402, %407 : vector<4x256xf32>
    %409 = vector.extract_strided_slice %384 {offsets = [0, 0], sizes = [4, 1], strides = [1, 1]} : vector<4x4xf32> to vector<4x1xf32>
    %410 = vector.extract_strided_slice %383 {offsets = [4, 0], sizes = [1, 256], strides = [1, 1]} : vector<8x256xf32> to vector<1x256xf32>
    %411 = vector.broadcast %409 : vector<4x1xf32> to vector<4x256xf32>
    %412 = vector.broadcast %410 : vector<1x256xf32> to vector<4x256xf32>
    %413 = arith.mulf %411, %412 : vector<4x256xf32>
    %414 = arith.addf %376, %413 : vector<4x256xf32>
    %415 = vector.extract_strided_slice %384 {offsets = [0, 1], sizes = [4, 1], strides = [1, 1]} : vector<4x4xf32> to vector<4x1xf32>
    %416 = vector.extract_strided_slice %383 {offsets = [5, 0], sizes = [1, 256], strides = [1, 1]} : vector<8x256xf32> to vector<1x256xf32>
    %417 = vector.broadcast %415 : vector<4x1xf32> to vector<4x256xf32>
    %418 = vector.broadcast %416 : vector<1x256xf32> to vector<4x256xf32>
    %419 = arith.mulf %417, %418 : vector<4x256xf32>
    %420 = arith.addf %414, %419 : vector<4x256xf32>
    %421 = vector.extract_strided_slice %384 {offsets = [0, 2], sizes = [4, 1], strides = [1, 1]} : vector<4x4xf32> to vector<4x1xf32>
    %422 = vector.extract_strided_slice %383 {offsets = [6, 0], sizes = [1, 256], strides = [1, 1]} : vector<8x256xf32> to vector<1x256xf32>
    %423 = vector.broadcast %421 : vector<4x1xf32> to vector<4x256xf32>
    %424 = vector.broadcast %422 : vector<1x256xf32> to vector<4x256xf32>
    %425 = arith.mulf %423, %424 : vector<4x256xf32>
    %426 = arith.addf %420, %425 : vector<4x256xf32>
    %427 = vector.extract_strided_slice %384 {offsets = [0, 3], sizes = [4, 1], strides = [1, 1]} : vector<4x4xf32> to vector<4x1xf32>
    %428 = vector.extract_strided_slice %383 {offsets = [7, 0], sizes = [1, 256], strides = [1, 1]} : vector<8x256xf32> to vector<1x256xf32>
    %429 = vector.broadcast %427 : vector<4x1xf32> to vector<4x256xf32>
    %430 = vector.broadcast %428 : vector<1x256xf32> to vector<4x256xf32>
    %431 = arith.mulf %429, %430 : vector<4x256xf32>
    %432 = arith.addf %426, %431 : vector<4x256xf32>
    %c241_i32 = arith.constant 241 : i32
    %433 = tpu.dynamic_rotate %95 by %c241_i32 dim 1 : vector<8x256xf32>, i32 -> vector<8x256xf32>
    %c1_i32_49 = arith.constant 1 : i32
    %434 = vector.broadcast %c1_i32_49 : i32 to vector<1x256xi32>
    %435 = arith.cmpi sge, %2, %434 : vector<1x256xi32>
    %c240_i32_50 = arith.constant 240 : i32
    %436 = vector.broadcast %c240_i32_50 : i32 to vector<1x256xi32>
    %437 = arith.cmpi slt, %0, %436 : vector<1x256xi32>
    %438 = arith.andi %435, %437 : vector<1x256xi1>
    %cst_51 = arith.constant 0.000000e+00 : f32
    %439 = vector.shape_cast %438 : vector<1x256xi1> to vector<1x256xi1>
    %440 = vector.broadcast %439 : vector<1x256xi1> to vector<8x256xi1>
    %441 = vector.broadcast %cst_51 : f32 to vector<8x256xf32>
    %442 = arith.select %440, %433, %441 : vector<8x256xi1>, vector<8x256xf32>
    %c24 = arith.constant 24 : index
    %c0_52 = arith.constant 0 : index
    %443 = vector.load %arg2[%c24, %c0_52] : memref<72x4xf32, #tpu.memory_space<vmem>>, vector<4x4xf32>
    %444 = vector.extract_strided_slice %443 {offsets = [0, 0], sizes = [4, 1], strides = [1, 1]} : vector<4x4xf32> to vector<4x1xf32>
    %445 = vector.extract_strided_slice %442 {offsets = [0, 0], sizes = [1, 256], strides = [1, 1]} : vector<8x256xf32> to vector<1x256xf32>
    %446 = vector.broadcast %444 : vector<4x1xf32> to vector<4x256xf32>
    %447 = vector.broadcast %445 : vector<1x256xf32> to vector<4x256xf32>
    %448 = arith.mulf %446, %447 : vector<4x256xf32>
    %449 = arith.addf %408, %448 : vector<4x256xf32>
    %450 = vector.extract_strided_slice %443 {offsets = [0, 1], sizes = [4, 1], strides = [1, 1]} : vector<4x4xf32> to vector<4x1xf32>
    %451 = vector.extract_strided_slice %442 {offsets = [1, 0], sizes = [1, 256], strides = [1, 1]} : vector<8x256xf32> to vector<1x256xf32>
    %452 = vector.broadcast %450 : vector<4x1xf32> to vector<4x256xf32>
    %453 = vector.broadcast %451 : vector<1x256xf32> to vector<4x256xf32>
    %454 = arith.mulf %452, %453 : vector<4x256xf32>
    %455 = arith.addf %449, %454 : vector<4x256xf32>
    %456 = vector.extract_strided_slice %443 {offsets = [0, 2], sizes = [4, 1], strides = [1, 1]} : vector<4x4xf32> to vector<4x1xf32>
    %457 = vector.extract_strided_slice %442 {offsets = [2, 0], sizes = [1, 256], strides = [1, 1]} : vector<8x256xf32> to vector<1x256xf32>
    %458 = vector.broadcast %456 : vector<4x1xf32> to vector<4x256xf32>
    %459 = vector.broadcast %457 : vector<1x256xf32> to vector<4x256xf32>
    %460 = arith.mulf %458, %459 : vector<4x256xf32>
    %461 = arith.addf %455, %460 : vector<4x256xf32>
    %462 = vector.extract_strided_slice %443 {offsets = [0, 3], sizes = [4, 1], strides = [1, 1]} : vector<4x4xf32> to vector<4x1xf32>
    %463 = vector.extract_strided_slice %442 {offsets = [3, 0], sizes = [1, 256], strides = [1, 1]} : vector<8x256xf32> to vector<1x256xf32>
    %464 = vector.broadcast %462 : vector<4x1xf32> to vector<4x256xf32>
    %465 = vector.broadcast %463 : vector<1x256xf32> to vector<4x256xf32>
    %466 = arith.mulf %464, %465 : vector<4x256xf32>
    %467 = arith.addf %461, %466 : vector<4x256xf32>
    %468 = vector.extract_strided_slice %443 {offsets = [0, 0], sizes = [4, 1], strides = [1, 1]} : vector<4x4xf32> to vector<4x1xf32>
    %469 = vector.extract_strided_slice %442 {offsets = [4, 0], sizes = [1, 256], strides = [1, 1]} : vector<8x256xf32> to vector<1x256xf32>
    %470 = vector.broadcast %468 : vector<4x1xf32> to vector<4x256xf32>
    %471 = vector.broadcast %469 : vector<1x256xf32> to vector<4x256xf32>
    %472 = arith.mulf %470, %471 : vector<4x256xf32>
    %473 = arith.addf %432, %472 : vector<4x256xf32>
    %474 = vector.extract_strided_slice %443 {offsets = [0, 1], sizes = [4, 1], strides = [1, 1]} : vector<4x4xf32> to vector<4x1xf32>
    %475 = vector.extract_strided_slice %442 {offsets = [5, 0], sizes = [1, 256], strides = [1, 1]} : vector<8x256xf32> to vector<1x256xf32>
    %476 = vector.broadcast %474 : vector<4x1xf32> to vector<4x256xf32>
    %477 = vector.broadcast %475 : vector<1x256xf32> to vector<4x256xf32>
    %478 = arith.mulf %476, %477 : vector<4x256xf32>
    %479 = arith.addf %473, %478 : vector<4x256xf32>
    %480 = vector.extract_strided_slice %443 {offsets = [0, 2], sizes = [4, 1], strides = [1, 1]} : vector<4x4xf32> to vector<4x1xf32>
    %481 = vector.extract_strided_slice %442 {offsets = [6, 0], sizes = [1, 256], strides = [1, 1]} : vector<8x256xf32> to vector<1x256xf32>
    %482 = vector.broadcast %480 : vector<4x1xf32> to vector<4x256xf32>
    %483 = vector.broadcast %481 : vector<1x256xf32> to vector<4x256xf32>
    %484 = arith.mulf %482, %483 : vector<4x256xf32>
    %485 = arith.addf %479, %484 : vector<4x256xf32>
    %486 = vector.extract_strided_slice %443 {offsets = [0, 3], sizes = [4, 1], strides = [1, 1]} : vector<4x4xf32> to vector<4x1xf32>
    %487 = vector.extract_strided_slice %442 {offsets = [7, 0], sizes = [1, 256], strides = [1, 1]} : vector<8x256xf32> to vector<1x256xf32>
    %488 = vector.broadcast %486 : vector<4x1xf32> to vector<4x256xf32>
    %489 = vector.broadcast %487 : vector<1x256xf32> to vector<4x256xf32>
    %490 = arith.mulf %488, %489 : vector<4x256xf32>
    %491 = arith.addf %485, %490 : vector<4x256xf32>
    %c240_i32_53 = arith.constant 240 : i32
    %492 = tpu.dynamic_rotate %95 by %c240_i32_53 dim 1 : vector<8x256xf32>, i32 -> vector<8x256xf32>
    %c240_i32_54 = arith.constant 240 : i32
    %493 = vector.broadcast %c240_i32_54 : i32 to vector<1x256xi32>
    %494 = arith.cmpi slt, %0, %493 : vector<1x256xi32>
    %cst_55 = arith.constant 0.000000e+00 : f32
    %495 = vector.shape_cast %494 : vector<1x256xi1> to vector<1x256xi1>
    %496 = vector.broadcast %495 : vector<1x256xi1> to vector<8x256xi1>
    %497 = vector.broadcast %cst_55 : f32 to vector<8x256xf32>
    %498 = arith.select %496, %492, %497 : vector<8x256xi1>, vector<8x256xf32>
    %c28 = arith.constant 28 : index
    %c0_56 = arith.constant 0 : index
    %499 = vector.load %arg2[%c28, %c0_56] : memref<72x4xf32, #tpu.memory_space<vmem>>, vector<4x4xf32>
    %500 = vector.extract_strided_slice %499 {offsets = [0, 0], sizes = [4, 1], strides = [1, 1]} : vector<4x4xf32> to vector<4x1xf32>
    %501 = vector.extract_strided_slice %498 {offsets = [0, 0], sizes = [1, 256], strides = [1, 1]} : vector<8x256xf32> to vector<1x256xf32>
    %502 = vector.broadcast %500 : vector<4x1xf32> to vector<4x256xf32>
    %503 = vector.broadcast %501 : vector<1x256xf32> to vector<4x256xf32>
    %504 = arith.mulf %502, %503 : vector<4x256xf32>
    %505 = arith.addf %467, %504 : vector<4x256xf32>
    %506 = vector.extract_strided_slice %499 {offsets = [0, 1], sizes = [4, 1], strides = [1, 1]} : vector<4x4xf32> to vector<4x1xf32>
    %507 = vector.extract_strided_slice %498 {offsets = [1, 0], sizes = [1, 256], strides = [1, 1]} : vector<8x256xf32> to vector<1x256xf32>
    %508 = vector.broadcast %506 : vector<4x1xf32> to vector<4x256xf32>
    %509 = vector.broadcast %507 : vector<1x256xf32> to vector<4x256xf32>
    %510 = arith.mulf %508, %509 : vector<4x256xf32>
    %511 = arith.addf %505, %510 : vector<4x256xf32>
    %512 = vector.extract_strided_slice %499 {offsets = [0, 2], sizes = [4, 1], strides = [1, 1]} : vector<4x4xf32> to vector<4x1xf32>
    %513 = vector.extract_strided_slice %498 {offsets = [2, 0], sizes = [1, 256], strides = [1, 1]} : vector<8x256xf32> to vector<1x256xf32>
    %514 = vector.broadcast %512 : vector<4x1xf32> to vector<4x256xf32>
    %515 = vector.broadcast %513 : vector<1x256xf32> to vector<4x256xf32>
    %516 = arith.mulf %514, %515 : vector<4x256xf32>
    %517 = arith.addf %511, %516 : vector<4x256xf32>
    %518 = vector.extract_strided_slice %499 {offsets = [0, 3], sizes = [4, 1], strides = [1, 1]} : vector<4x4xf32> to vector<4x1xf32>
    %519 = vector.extract_strided_slice %498 {offsets = [3, 0], sizes = [1, 256], strides = [1, 1]} : vector<8x256xf32> to vector<1x256xf32>
    %520 = vector.broadcast %518 : vector<4x1xf32> to vector<4x256xf32>
    %521 = vector.broadcast %519 : vector<1x256xf32> to vector<4x256xf32>
    %522 = arith.mulf %520, %521 : vector<4x256xf32>
    %523 = arith.addf %517, %522 : vector<4x256xf32>
    %524 = vector.extract_strided_slice %499 {offsets = [0, 0], sizes = [4, 1], strides = [1, 1]} : vector<4x4xf32> to vector<4x1xf32>
    %525 = vector.extract_strided_slice %498 {offsets = [4, 0], sizes = [1, 256], strides = [1, 1]} : vector<8x256xf32> to vector<1x256xf32>
    %526 = vector.broadcast %524 : vector<4x1xf32> to vector<4x256xf32>
    %527 = vector.broadcast %525 : vector<1x256xf32> to vector<4x256xf32>
    %528 = arith.mulf %526, %527 : vector<4x256xf32>
    %529 = arith.addf %491, %528 : vector<4x256xf32>
    %530 = vector.extract_strided_slice %499 {offsets = [0, 1], sizes = [4, 1], strides = [1, 1]} : vector<4x4xf32> to vector<4x1xf32>
    %531 = vector.extract_strided_slice %498 {offsets = [5, 0], sizes = [1, 256], strides = [1, 1]} : vector<8x256xf32> to vector<1x256xf32>
    %532 = vector.broadcast %530 : vector<4x1xf32> to vector<4x256xf32>
    %533 = vector.broadcast %531 : vector<1x256xf32> to vector<4x256xf32>
    %534 = arith.mulf %532, %533 : vector<4x256xf32>
    %535 = arith.addf %529, %534 : vector<4x256xf32>
    %536 = vector.extract_strided_slice %499 {offsets = [0, 2], sizes = [4, 1], strides = [1, 1]} : vector<4x4xf32> to vector<4x1xf32>
    %537 = vector.extract_strided_slice %498 {offsets = [6, 0], sizes = [1, 256], strides = [1, 1]} : vector<8x256xf32> to vector<1x256xf32>
    %538 = vector.broadcast %536 : vector<4x1xf32> to vector<4x256xf32>
    %539 = vector.broadcast %537 : vector<1x256xf32> to vector<4x256xf32>
    %540 = arith.mulf %538, %539 : vector<4x256xf32>
    %541 = arith.addf %535, %540 : vector<4x256xf32>
    %542 = vector.extract_strided_slice %499 {offsets = [0, 3], sizes = [4, 1], strides = [1, 1]} : vector<4x4xf32> to vector<4x1xf32>
    %543 = vector.extract_strided_slice %498 {offsets = [7, 0], sizes = [1, 256], strides = [1, 1]} : vector<8x256xf32> to vector<1x256xf32>
    %544 = vector.broadcast %542 : vector<4x1xf32> to vector<4x256xf32>
    %545 = vector.broadcast %543 : vector<1x256xf32> to vector<4x256xf32>
    %546 = arith.mulf %544, %545 : vector<4x256xf32>
    %547 = arith.addf %541, %546 : vector<4x256xf32>
    %c239_i32 = arith.constant 239 : i32
    %548 = tpu.dynamic_rotate %95 by %c239_i32 dim 1 : vector<8x256xf32>, i32 -> vector<8x256xf32>
    %c15_i32_57 = arith.constant 15 : i32
    %549 = vector.broadcast %c15_i32_57 : i32 to vector<1x256xi32>
    %550 = arith.cmpi slt, %2, %549 : vector<1x256xi32>
    %c240_i32_58 = arith.constant 240 : i32
    %551 = vector.broadcast %c240_i32_58 : i32 to vector<1x256xi32>
    %552 = arith.cmpi slt, %0, %551 : vector<1x256xi32>
    %553 = arith.andi %550, %552 : vector<1x256xi1>
    %cst_59 = arith.constant 0.000000e+00 : f32
    %554 = vector.shape_cast %553 : vector<1x256xi1> to vector<1x256xi1>
    %555 = vector.broadcast %554 : vector<1x256xi1> to vector<8x256xi1>
    %556 = vector.broadcast %cst_59 : f32 to vector<8x256xf32>
    %557 = arith.select %555, %548, %556 : vector<8x256xi1>, vector<8x256xf32>
    %c32 = arith.constant 32 : index
    %c0_60 = arith.constant 0 : index
    %558 = vector.load %arg2[%c32, %c0_60] : memref<72x4xf32, #tpu.memory_space<vmem>>, vector<4x4xf32>
    %559 = vector.extract_strided_slice %558 {offsets = [0, 0], sizes = [4, 1], strides = [1, 1]} : vector<4x4xf32> to vector<4x1xf32>
    %560 = vector.extract_strided_slice %557 {offsets = [0, 0], sizes = [1, 256], strides = [1, 1]} : vector<8x256xf32> to vector<1x256xf32>
    %561 = vector.broadcast %559 : vector<4x1xf32> to vector<4x256xf32>
    %562 = vector.broadcast %560 : vector<1x256xf32> to vector<4x256xf32>
    %563 = arith.mulf %561, %562 : vector<4x256xf32>
    %564 = arith.addf %523, %563 : vector<4x256xf32>
    %565 = vector.extract_strided_slice %558 {offsets = [0, 1], sizes = [4, 1], strides = [1, 1]} : vector<4x4xf32> to vector<4x1xf32>
    %566 = vector.extract_strided_slice %557 {offsets = [1, 0], sizes = [1, 256], strides = [1, 1]} : vector<8x256xf32> to vector<1x256xf32>
    %567 = vector.broadcast %565 : vector<4x1xf32> to vector<4x256xf32>
    %568 = vector.broadcast %566 : vector<1x256xf32> to vector<4x256xf32>
    %569 = arith.mulf %567, %568 : vector<4x256xf32>
    %570 = arith.addf %564, %569 : vector<4x256xf32>
    %571 = vector.extract_strided_slice %558 {offsets = [0, 2], sizes = [4, 1], strides = [1, 1]} : vector<4x4xf32> to vector<4x1xf32>
    %572 = vector.extract_strided_slice %557 {offsets = [2, 0], sizes = [1, 256], strides = [1, 1]} : vector<8x256xf32> to vector<1x256xf32>
    %573 = vector.broadcast %571 : vector<4x1xf32> to vector<4x256xf32>
    %574 = vector.broadcast %572 : vector<1x256xf32> to vector<4x256xf32>
    %575 = arith.mulf %573, %574 : vector<4x256xf32>
    %576 = arith.addf %570, %575 : vector<4x256xf32>
    %577 = vector.extract_strided_slice %558 {offsets = [0, 3], sizes = [4, 1], strides = [1, 1]} : vector<4x4xf32> to vector<4x1xf32>
    %578 = vector.extract_strided_slice %557 {offsets = [3, 0], sizes = [1, 256], strides = [1, 1]} : vector<8x256xf32> to vector<1x256xf32>
    %579 = vector.broadcast %577 : vector<4x1xf32> to vector<4x256xf32>
    %580 = vector.broadcast %578 : vector<1x256xf32> to vector<4x256xf32>
    %581 = arith.mulf %579, %580 : vector<4x256xf32>
    %582 = arith.addf %576, %581 : vector<4x256xf32>
    %583 = vector.extract_strided_slice %558 {offsets = [0, 0], sizes = [4, 1], strides = [1, 1]} : vector<4x4xf32> to vector<4x1xf32>
    %584 = vector.extract_strided_slice %557 {offsets = [4, 0], sizes = [1, 256], strides = [1, 1]} : vector<8x256xf32> to vector<1x256xf32>
    %585 = vector.broadcast %583 : vector<4x1xf32> to vector<4x256xf32>
    %586 = vector.broadcast %584 : vector<1x256xf32> to vector<4x256xf32>
    %587 = arith.mulf %585, %586 : vector<4x256xf32>
    %588 = arith.addf %547, %587 : vector<4x256xf32>
    %589 = vector.extract_strided_slice %558 {offsets = [0, 1], sizes = [4, 1], strides = [1, 1]} : vector<4x4xf32> to vector<4x1xf32>
    %590 = vector.extract_strided_slice %557 {offsets = [5, 0], sizes = [1, 256], strides = [1, 1]} : vector<8x256xf32> to vector<1x256xf32>
    %591 = vector.broadcast %589 : vector<4x1xf32> to vector<4x256xf32>
    %592 = vector.broadcast %590 : vector<1x256xf32> to vector<4x256xf32>
    %593 = arith.mulf %591, %592 : vector<4x256xf32>
    %594 = arith.addf %588, %593 : vector<4x256xf32>
    %595 = vector.extract_strided_slice %558 {offsets = [0, 2], sizes = [4, 1], strides = [1, 1]} : vector<4x4xf32> to vector<4x1xf32>
    %596 = vector.extract_strided_slice %557 {offsets = [6, 0], sizes = [1, 256], strides = [1, 1]} : vector<8x256xf32> to vector<1x256xf32>
    %597 = vector.broadcast %595 : vector<4x1xf32> to vector<4x256xf32>
    %598 = vector.broadcast %596 : vector<1x256xf32> to vector<4x256xf32>
    %599 = arith.mulf %597, %598 : vector<4x256xf32>
    %600 = arith.addf %594, %599 : vector<4x256xf32>
    %601 = vector.extract_strided_slice %558 {offsets = [0, 3], sizes = [4, 1], strides = [1, 1]} : vector<4x4xf32> to vector<4x1xf32>
    %602 = vector.extract_strided_slice %557 {offsets = [7, 0], sizes = [1, 256], strides = [1, 1]} : vector<8x256xf32> to vector<1x256xf32>
    %603 = vector.broadcast %601 : vector<4x1xf32> to vector<4x256xf32>
    %604 = vector.broadcast %602 : vector<1x256xf32> to vector<4x256xf32>
    %605 = arith.mulf %603, %604 : vector<4x256xf32>
    %606 = arith.addf %600, %605 : vector<4x256xf32>
    %c0_61 = arith.constant 0 : index
    %c0_62 = arith.constant 0 : index
    %607 = vector.load %arg3[%c0_61, %c0_62] : memref<8x1xf32, #tpu.memory_space<vmem>>, vector<4x1xf32>
    %608 = vector.broadcast %607 : vector<4x1xf32> to vector<4x256xf32>
    %609 = arith.addf %582, %608 : vector<4x256xf32>
    %610 = vector.broadcast %607 : vector<4x1xf32> to vector<4x256xf32>
    %611 = arith.addf %606, %610 : vector<4x256xf32>
    %612 = tpu.concatenate %609, %611 in 0 : vector<4x256xf32>, vector<4x256xf32> -> vector<8x256xf32>
    %613 = arith.addf %612, %11 : vector<8x256xf32>
    %c2_i32_63 = arith.constant 2 : i32
    %614 = tpu.dynamic_rotate %612 by %c2_i32_63 dim 1 : vector<8x256xf32>, i32 -> vector<8x256xf32>
    %c2_i32_64 = arith.constant 2 : i32
    %615 = vector.broadcast %c2_i32_64 : i32 to vector<1x256xi32>
    %616 = arith.cmpi sge, %2, %615 : vector<1x256xi32>
    %cst_65 = arith.constant -3.40282347E+38 : f32
    %617 = vector.shape_cast %616 : vector<1x256xi1> to vector<1x256xi1>
    %618 = vector.broadcast %617 : vector<1x256xi1> to vector<8x256xi1>
    %619 = vector.broadcast %cst_65 : f32 to vector<8x256xf32>
    %620 = arith.select %618, %614, %619 : vector<8x256xi1>, vector<8x256xf32>
    %621 = arith.maximumf %612, %620 : vector<8x256xf32>
    %c1_i32_66 = arith.constant 1 : i32
    %622 = tpu.dynamic_rotate %612 by %c1_i32_66 dim 1 : vector<8x256xf32>, i32 -> vector<8x256xf32>
    %c1_i32_67 = arith.constant 1 : i32
    %623 = vector.broadcast %c1_i32_67 : i32 to vector<1x256xi32>
    %624 = arith.cmpi sge, %2, %623 : vector<1x256xi32>
    %cst_68 = arith.constant -3.40282347E+38 : f32
    %625 = vector.shape_cast %624 : vector<1x256xi1> to vector<1x256xi1>
    %626 = vector.broadcast %625 : vector<1x256xi1> to vector<8x256xi1>
    %627 = vector.broadcast %cst_68 : f32 to vector<8x256xf32>
    %628 = arith.select %626, %622, %627 : vector<8x256xi1>, vector<8x256xf32>
    %629 = arith.maximumf %621, %628 : vector<8x256xf32>
    %c255_i32_69 = arith.constant 255 : i32
    %630 = tpu.dynamic_rotate %612 by %c255_i32_69 dim 1 : vector<8x256xf32>, i32 -> vector<8x256xf32>
    %c15_i32_70 = arith.constant 15 : i32
    %631 = vector.broadcast %c15_i32_70 : i32 to vector<1x256xi32>
    %632 = arith.cmpi slt, %2, %631 : vector<1x256xi32>
    %cst_71 = arith.constant -3.40282347E+38 : f32
    %633 = vector.shape_cast %632 : vector<1x256xi1> to vector<1x256xi1>
    %634 = vector.broadcast %633 : vector<1x256xi1> to vector<8x256xi1>
    %635 = vector.broadcast %cst_71 : f32 to vector<8x256xf32>
    %636 = arith.select %634, %630, %635 : vector<8x256xi1>, vector<8x256xf32>
    %637 = arith.maximumf %629, %636 : vector<8x256xf32>
    %c254_i32_72 = arith.constant 254 : i32
    %638 = tpu.dynamic_rotate %612 by %c254_i32_72 dim 1 : vector<8x256xf32>, i32 -> vector<8x256xf32>
    %c14_i32_73 = arith.constant 14 : i32
    %639 = vector.broadcast %c14_i32_73 : i32 to vector<1x256xi32>
    %640 = arith.cmpi slt, %2, %639 : vector<1x256xi32>
    %cst_74 = arith.constant -3.40282347E+38 : f32
    %641 = vector.shape_cast %640 : vector<1x256xi1> to vector<1x256xi1>
    %642 = vector.broadcast %641 : vector<1x256xi1> to vector<8x256xi1>
    %643 = vector.broadcast %cst_74 : f32 to vector<8x256xf32>
    %644 = arith.select %642, %638, %643 : vector<8x256xi1>, vector<8x256xf32>
    %645 = arith.maximumf %637, %644 : vector<8x256xf32>
    %c32_i32_75 = arith.constant 32 : i32
    %646 = tpu.dynamic_rotate %645 by %c32_i32_75 dim 1 : vector<8x256xf32>, i32 -> vector<8x256xf32>
    %c32_i32_76 = arith.constant 32 : i32
    %647 = vector.broadcast %c32_i32_76 : i32 to vector<1x256xi32>
    %648 = arith.cmpi sge, %0, %647 : vector<1x256xi32>
    %cst_77 = arith.constant -3.40282347E+38 : f32
    %649 = vector.shape_cast %648 : vector<1x256xi1> to vector<1x256xi1>
    %650 = vector.broadcast %649 : vector<1x256xi1> to vector<8x256xi1>
    %651 = vector.broadcast %cst_77 : f32 to vector<8x256xf32>
    %652 = arith.select %650, %646, %651 : vector<8x256xi1>, vector<8x256xf32>
    %653 = arith.maximumf %645, %652 : vector<8x256xf32>
    %c16_i32_78 = arith.constant 16 : i32
    %654 = tpu.dynamic_rotate %645 by %c16_i32_78 dim 1 : vector<8x256xf32>, i32 -> vector<8x256xf32>
    %c16_i32_79 = arith.constant 16 : i32
    %655 = vector.broadcast %c16_i32_79 : i32 to vector<1x256xi32>
    %656 = arith.cmpi sge, %0, %655 : vector<1x256xi32>
    %cst_80 = arith.constant -3.40282347E+38 : f32
    %657 = vector.shape_cast %656 : vector<1x256xi1> to vector<1x256xi1>
    %658 = vector.broadcast %657 : vector<1x256xi1> to vector<8x256xi1>
    %659 = vector.broadcast %cst_80 : f32 to vector<8x256xf32>
    %660 = arith.select %658, %654, %659 : vector<8x256xi1>, vector<8x256xf32>
    %661 = arith.maximumf %653, %660 : vector<8x256xf32>
    %c240_i32_81 = arith.constant 240 : i32
    %662 = tpu.dynamic_rotate %645 by %c240_i32_81 dim 1 : vector<8x256xf32>, i32 -> vector<8x256xf32>
    %c240_i32_82 = arith.constant 240 : i32
    %663 = vector.broadcast %c240_i32_82 : i32 to vector<1x256xi32>
    %664 = arith.cmpi slt, %0, %663 : vector<1x256xi32>
    %cst_83 = arith.constant -3.40282347E+38 : f32
    %665 = vector.shape_cast %664 : vector<1x256xi1> to vector<1x256xi1>
    %666 = vector.broadcast %665 : vector<1x256xi1> to vector<8x256xi1>
    %667 = vector.broadcast %cst_83 : f32 to vector<8x256xf32>
    %668 = arith.select %666, %662, %667 : vector<8x256xi1>, vector<8x256xf32>
    %669 = arith.maximumf %661, %668 : vector<8x256xf32>
    %c224_i32_84 = arith.constant 224 : i32
    %670 = tpu.dynamic_rotate %645 by %c224_i32_84 dim 1 : vector<8x256xf32>, i32 -> vector<8x256xf32>
    %c224_i32_85 = arith.constant 224 : i32
    %671 = vector.broadcast %c224_i32_85 : i32 to vector<1x256xi32>
    %672 = arith.cmpi slt, %0, %671 : vector<1x256xi32>
    %cst_86 = arith.constant -3.40282347E+38 : f32
    %673 = vector.shape_cast %672 : vector<1x256xi1> to vector<1x256xi1>
    %674 = vector.broadcast %673 : vector<1x256xi1> to vector<8x256xi1>
    %675 = vector.broadcast %cst_86 : f32 to vector<8x256xf32>
    %676 = arith.select %674, %670, %675 : vector<8x256xi1>, vector<8x256xf32>
    %677 = arith.maximumf %669, %676 : vector<8x256xf32>
    %cst_87 = arith.constant dense<0.000000e+00> : vector<8xf32>
    %678 = vector.multi_reduction <add>, %677, %cst_87 [1] : vector<8x256xf32> to vector<8xf32>
    %679 = vector.shape_cast %678 : vector<8xf32> to vector<8x1xf32>
    %cst_88 = arith.constant 3.906250e-03 : f32
    %680 = vector.broadcast %cst_88 : f32 to vector<8x1xf32>
    %681 = arith.mulf %679, %680 : vector<8x1xf32>
    %682 = arith.mulf %677, %677 : vector<8x256xf32>
    %cst_89 = arith.constant dense<0.000000e+00> : vector<8xf32>
    %683 = vector.multi_reduction <add>, %682, %cst_89 [1] : vector<8x256xf32> to vector<8xf32>
    %684 = vector.shape_cast %683 : vector<8xf32> to vector<8x1xf32>
    %cst_90 = arith.constant 3.906250e-03 : f32
    %685 = vector.broadcast %cst_90 : f32 to vector<8x1xf32>
    %686 = arith.mulf %684, %685 : vector<8x1xf32>
    %687 = arith.mulf %681, %681 : vector<8x1xf32>
    %688 = arith.subf %686, %687 : vector<8x1xf32>
    %cst_91 = arith.constant 0.000000e+00 : f32
    %689 = vector.broadcast %cst_91 : f32 to vector<8x1xf32>
    %690 = arith.maximumf %688, %689 : vector<8x1xf32>
    %691 = vector.broadcast %681 : vector<8x1xf32> to vector<8x256xf32>
    %692 = arith.subf %677, %691 : vector<8x256xf32>
    %cst_92 = arith.constant 9.99999974E-6 : f32
    %693 = vector.broadcast %cst_92 : f32 to vector<8x1xf32>
    %694 = arith.addf %690, %693 : vector<8x1xf32>
    %695 = math.rsqrt %694 : vector<8x1xf32>
    %696 = vector.broadcast %695 : vector<8x1xf32> to vector<8x256xf32>
    %697 = arith.mulf %692, %696 : vector<8x256xf32>
    %cst_93 = arith.constant 0.000000e+00 : f32
    %698 = vector.broadcast %cst_93 : f32 to vector<4x256xf32>
    %cst_94 = arith.constant 0.000000e+00 : f32
    %699 = vector.broadcast %cst_94 : f32 to vector<4x256xf32>
    %c17_i32_95 = arith.constant 17 : i32
    %700 = tpu.dynamic_rotate %697 by %c17_i32_95 dim 1 : vector<8x256xf32>, i32 -> vector<8x256xf32>
    %c1_i32_96 = arith.constant 1 : i32
    %701 = vector.broadcast %c1_i32_96 : i32 to vector<1x256xi32>
    %702 = arith.cmpi sge, %2, %701 : vector<1x256xi32>
    %c16_i32_97 = arith.constant 16 : i32
    %703 = vector.broadcast %c16_i32_97 : i32 to vector<1x256xi32>
    %704 = arith.cmpi sge, %0, %703 : vector<1x256xi32>
    %705 = arith.andi %702, %704 : vector<1x256xi1>
    %cst_98 = arith.constant 0.000000e+00 : f32
    %706 = vector.shape_cast %705 : vector<1x256xi1> to vector<1x256xi1>
    %707 = vector.broadcast %706 : vector<1x256xi1> to vector<8x256xi1>
    %708 = vector.broadcast %cst_98 : f32 to vector<8x256xf32>
    %709 = arith.select %707, %700, %708 : vector<8x256xi1>, vector<8x256xf32>
    %c36 = arith.constant 36 : index
    %c0_99 = arith.constant 0 : index
    %710 = vector.load %arg2[%c36, %c0_99] : memref<72x4xf32, #tpu.memory_space<vmem>>, vector<4x4xf32>
    %711 = vector.extract_strided_slice %710 {offsets = [0, 0], sizes = [4, 1], strides = [1, 1]} : vector<4x4xf32> to vector<4x1xf32>
    %712 = vector.extract_strided_slice %709 {offsets = [0, 0], sizes = [1, 256], strides = [1, 1]} : vector<8x256xf32> to vector<1x256xf32>
    %713 = vector.broadcast %711 : vector<4x1xf32> to vector<4x256xf32>
    %714 = vector.broadcast %712 : vector<1x256xf32> to vector<4x256xf32>
    %715 = arith.mulf %713, %714 : vector<4x256xf32>
    %716 = arith.addf %698, %715 : vector<4x256xf32>
    %717 = vector.extract_strided_slice %710 {offsets = [0, 1], sizes = [4, 1], strides = [1, 1]} : vector<4x4xf32> to vector<4x1xf32>
    %718 = vector.extract_strided_slice %709 {offsets = [1, 0], sizes = [1, 256], strides = [1, 1]} : vector<8x256xf32> to vector<1x256xf32>
    %719 = vector.broadcast %717 : vector<4x1xf32> to vector<4x256xf32>
    %720 = vector.broadcast %718 : vector<1x256xf32> to vector<4x256xf32>
    %721 = arith.mulf %719, %720 : vector<4x256xf32>
    %722 = arith.addf %716, %721 : vector<4x256xf32>
    %723 = vector.extract_strided_slice %710 {offsets = [0, 2], sizes = [4, 1], strides = [1, 1]} : vector<4x4xf32> to vector<4x1xf32>
    %724 = vector.extract_strided_slice %709 {offsets = [2, 0], sizes = [1, 256], strides = [1, 1]} : vector<8x256xf32> to vector<1x256xf32>
    %725 = vector.broadcast %723 : vector<4x1xf32> to vector<4x256xf32>
    %726 = vector.broadcast %724 : vector<1x256xf32> to vector<4x256xf32>
    %727 = arith.mulf %725, %726 : vector<4x256xf32>
    %728 = arith.addf %722, %727 : vector<4x256xf32>
    %729 = vector.extract_strided_slice %710 {offsets = [0, 3], sizes = [4, 1], strides = [1, 1]} : vector<4x4xf32> to vector<4x1xf32>
    %730 = vector.extract_strided_slice %709 {offsets = [3, 0], sizes = [1, 256], strides = [1, 1]} : vector<8x256xf32> to vector<1x256xf32>
    %731 = vector.broadcast %729 : vector<4x1xf32> to vector<4x256xf32>
    %732 = vector.broadcast %730 : vector<1x256xf32> to vector<4x256xf32>
    %733 = arith.mulf %731, %732 : vector<4x256xf32>
    %734 = arith.addf %728, %733 : vector<4x256xf32>
    %735 = vector.extract_strided_slice %710 {offsets = [0, 0], sizes = [4, 1], strides = [1, 1]} : vector<4x4xf32> to vector<4x1xf32>
    %736 = vector.extract_strided_slice %709 {offsets = [4, 0], sizes = [1, 256], strides = [1, 1]} : vector<8x256xf32> to vector<1x256xf32>
    %737 = vector.broadcast %735 : vector<4x1xf32> to vector<4x256xf32>
    %738 = vector.broadcast %736 : vector<1x256xf32> to vector<4x256xf32>
    %739 = arith.mulf %737, %738 : vector<4x256xf32>
    %740 = arith.addf %699, %739 : vector<4x256xf32>
    %741 = vector.extract_strided_slice %710 {offsets = [0, 1], sizes = [4, 1], strides = [1, 1]} : vector<4x4xf32> to vector<4x1xf32>
    %742 = vector.extract_strided_slice %709 {offsets = [5, 0], sizes = [1, 256], strides = [1, 1]} : vector<8x256xf32> to vector<1x256xf32>
    %743 = vector.broadcast %741 : vector<4x1xf32> to vector<4x256xf32>
    %744 = vector.broadcast %742 : vector<1x256xf32> to vector<4x256xf32>
    %745 = arith.mulf %743, %744 : vector<4x256xf32>
    %746 = arith.addf %740, %745 : vector<4x256xf32>
    %747 = vector.extract_strided_slice %710 {offsets = [0, 2], sizes = [4, 1], strides = [1, 1]} : vector<4x4xf32> to vector<4x1xf32>
    %748 = vector.extract_strided_slice %709 {offsets = [6, 0], sizes = [1, 256], strides = [1, 1]} : vector<8x256xf32> to vector<1x256xf32>
    %749 = vector.broadcast %747 : vector<4x1xf32> to vector<4x256xf32>
    %750 = vector.broadcast %748 : vector<1x256xf32> to vector<4x256xf32>
    %751 = arith.mulf %749, %750 : vector<4x256xf32>
    %752 = arith.addf %746, %751 : vector<4x256xf32>
    %753 = vector.extract_strided_slice %710 {offsets = [0, 3], sizes = [4, 1], strides = [1, 1]} : vector<4x4xf32> to vector<4x1xf32>
    %754 = vector.extract_strided_slice %709 {offsets = [7, 0], sizes = [1, 256], strides = [1, 1]} : vector<8x256xf32> to vector<1x256xf32>
    %755 = vector.broadcast %753 : vector<4x1xf32> to vector<4x256xf32>
    %756 = vector.broadcast %754 : vector<1x256xf32> to vector<4x256xf32>
    %757 = arith.mulf %755, %756 : vector<4x256xf32>
    %758 = arith.addf %752, %757 : vector<4x256xf32>
    %c16_i32_100 = arith.constant 16 : i32
    %759 = tpu.dynamic_rotate %697 by %c16_i32_100 dim 1 : vector<8x256xf32>, i32 -> vector<8x256xf32>
    %c16_i32_101 = arith.constant 16 : i32
    %760 = vector.broadcast %c16_i32_101 : i32 to vector<1x256xi32>
    %761 = arith.cmpi sge, %0, %760 : vector<1x256xi32>
    %cst_102 = arith.constant 0.000000e+00 : f32
    %762 = vector.shape_cast %761 : vector<1x256xi1> to vector<1x256xi1>
    %763 = vector.broadcast %762 : vector<1x256xi1> to vector<8x256xi1>
    %764 = vector.broadcast %cst_102 : f32 to vector<8x256xf32>
    %765 = arith.select %763, %759, %764 : vector<8x256xi1>, vector<8x256xf32>
    %c40 = arith.constant 40 : index
    %c0_103 = arith.constant 0 : index
    %766 = vector.load %arg2[%c40, %c0_103] : memref<72x4xf32, #tpu.memory_space<vmem>>, vector<4x4xf32>
    %767 = vector.extract_strided_slice %766 {offsets = [0, 0], sizes = [4, 1], strides = [1, 1]} : vector<4x4xf32> to vector<4x1xf32>
    %768 = vector.extract_strided_slice %765 {offsets = [0, 0], sizes = [1, 256], strides = [1, 1]} : vector<8x256xf32> to vector<1x256xf32>
    %769 = vector.broadcast %767 : vector<4x1xf32> to vector<4x256xf32>
    %770 = vector.broadcast %768 : vector<1x256xf32> to vector<4x256xf32>
    %771 = arith.mulf %769, %770 : vector<4x256xf32>
    %772 = arith.addf %734, %771 : vector<4x256xf32>
    %773 = vector.extract_strided_slice %766 {offsets = [0, 1], sizes = [4, 1], strides = [1, 1]} : vector<4x4xf32> to vector<4x1xf32>
    %774 = vector.extract_strided_slice %765 {offsets = [1, 0], sizes = [1, 256], strides = [1, 1]} : vector<8x256xf32> to vector<1x256xf32>
    %775 = vector.broadcast %773 : vector<4x1xf32> to vector<4x256xf32>
    %776 = vector.broadcast %774 : vector<1x256xf32> to vector<4x256xf32>
    %777 = arith.mulf %775, %776 : vector<4x256xf32>
    %778 = arith.addf %772, %777 : vector<4x256xf32>
    %779 = vector.extract_strided_slice %766 {offsets = [0, 2], sizes = [4, 1], strides = [1, 1]} : vector<4x4xf32> to vector<4x1xf32>
    %780 = vector.extract_strided_slice %765 {offsets = [2, 0], sizes = [1, 256], strides = [1, 1]} : vector<8x256xf32> to vector<1x256xf32>
    %781 = vector.broadcast %779 : vector<4x1xf32> to vector<4x256xf32>
    %782 = vector.broadcast %780 : vector<1x256xf32> to vector<4x256xf32>
    %783 = arith.mulf %781, %782 : vector<4x256xf32>
    %784 = arith.addf %778, %783 : vector<4x256xf32>
    %785 = vector.extract_strided_slice %766 {offsets = [0, 3], sizes = [4, 1], strides = [1, 1]} : vector<4x4xf32> to vector<4x1xf32>
    %786 = vector.extract_strided_slice %765 {offsets = [3, 0], sizes = [1, 256], strides = [1, 1]} : vector<8x256xf32> to vector<1x256xf32>
    %787 = vector.broadcast %785 : vector<4x1xf32> to vector<4x256xf32>
    %788 = vector.broadcast %786 : vector<1x256xf32> to vector<4x256xf32>
    %789 = arith.mulf %787, %788 : vector<4x256xf32>
    %790 = arith.addf %784, %789 : vector<4x256xf32>
    %791 = vector.extract_strided_slice %766 {offsets = [0, 0], sizes = [4, 1], strides = [1, 1]} : vector<4x4xf32> to vector<4x1xf32>
    %792 = vector.extract_strided_slice %765 {offsets = [4, 0], sizes = [1, 256], strides = [1, 1]} : vector<8x256xf32> to vector<1x256xf32>
    %793 = vector.broadcast %791 : vector<4x1xf32> to vector<4x256xf32>
    %794 = vector.broadcast %792 : vector<1x256xf32> to vector<4x256xf32>
    %795 = arith.mulf %793, %794 : vector<4x256xf32>
    %796 = arith.addf %758, %795 : vector<4x256xf32>
    %797 = vector.extract_strided_slice %766 {offsets = [0, 1], sizes = [4, 1], strides = [1, 1]} : vector<4x4xf32> to vector<4x1xf32>
    %798 = vector.extract_strided_slice %765 {offsets = [5, 0], sizes = [1, 256], strides = [1, 1]} : vector<8x256xf32> to vector<1x256xf32>
    %799 = vector.broadcast %797 : vector<4x1xf32> to vector<4x256xf32>
    %800 = vector.broadcast %798 : vector<1x256xf32> to vector<4x256xf32>
    %801 = arith.mulf %799, %800 : vector<4x256xf32>
    %802 = arith.addf %796, %801 : vector<4x256xf32>
    %803 = vector.extract_strided_slice %766 {offsets = [0, 2], sizes = [4, 1], strides = [1, 1]} : vector<4x4xf32> to vector<4x1xf32>
    %804 = vector.extract_strided_slice %765 {offsets = [6, 0], sizes = [1, 256], strides = [1, 1]} : vector<8x256xf32> to vector<1x256xf32>
    %805 = vector.broadcast %803 : vector<4x1xf32> to vector<4x256xf32>
    %806 = vector.broadcast %804 : vector<1x256xf32> to vector<4x256xf32>
    %807 = arith.mulf %805, %806 : vector<4x256xf32>
    %808 = arith.addf %802, %807 : vector<4x256xf32>
    %809 = vector.extract_strided_slice %766 {offsets = [0, 3], sizes = [4, 1], strides = [1, 1]} : vector<4x4xf32> to vector<4x1xf32>
    %810 = vector.extract_strided_slice %765 {offsets = [7, 0], sizes = [1, 256], strides = [1, 1]} : vector<8x256xf32> to vector<1x256xf32>
    %811 = vector.broadcast %809 : vector<4x1xf32> to vector<4x256xf32>
    %812 = vector.broadcast %810 : vector<1x256xf32> to vector<4x256xf32>
    %813 = arith.mulf %811, %812 : vector<4x256xf32>
    %814 = arith.addf %808, %813 : vector<4x256xf32>
    %c15_i32_104 = arith.constant 15 : i32
    %815 = tpu.dynamic_rotate %697 by %c15_i32_104 dim 1 : vector<8x256xf32>, i32 -> vector<8x256xf32>
    %c15_i32_105 = arith.constant 15 : i32
    %816 = vector.broadcast %c15_i32_105 : i32 to vector<1x256xi32>
    %817 = arith.cmpi slt, %2, %816 : vector<1x256xi32>
    %c16_i32_106 = arith.constant 16 : i32
    %818 = vector.broadcast %c16_i32_106 : i32 to vector<1x256xi32>
    %819 = arith.cmpi sge, %0, %818 : vector<1x256xi32>
    %820 = arith.andi %817, %819 : vector<1x256xi1>
    %cst_107 = arith.constant 0.000000e+00 : f32
    %821 = vector.shape_cast %820 : vector<1x256xi1> to vector<1x256xi1>
    %822 = vector.broadcast %821 : vector<1x256xi1> to vector<8x256xi1>
    %823 = vector.broadcast %cst_107 : f32 to vector<8x256xf32>
    %824 = arith.select %822, %815, %823 : vector<8x256xi1>, vector<8x256xf32>
    %c44 = arith.constant 44 : index
    %c0_108 = arith.constant 0 : index
    %825 = vector.load %arg2[%c44, %c0_108] : memref<72x4xf32, #tpu.memory_space<vmem>>, vector<4x4xf32>
    %826 = vector.extract_strided_slice %825 {offsets = [0, 0], sizes = [4, 1], strides = [1, 1]} : vector<4x4xf32> to vector<4x1xf32>
    %827 = vector.extract_strided_slice %824 {offsets = [0, 0], sizes = [1, 256], strides = [1, 1]} : vector<8x256xf32> to vector<1x256xf32>
    %828 = vector.broadcast %826 : vector<4x1xf32> to vector<4x256xf32>
    %829 = vector.broadcast %827 : vector<1x256xf32> to vector<4x256xf32>
    %830 = arith.mulf %828, %829 : vector<4x256xf32>
    %831 = arith.addf %790, %830 : vector<4x256xf32>
    %832 = vector.extract_strided_slice %825 {offsets = [0, 1], sizes = [4, 1], strides = [1, 1]} : vector<4x4xf32> to vector<4x1xf32>
    %833 = vector.extract_strided_slice %824 {offsets = [1, 0], sizes = [1, 256], strides = [1, 1]} : vector<8x256xf32> to vector<1x256xf32>
    %834 = vector.broadcast %832 : vector<4x1xf32> to vector<4x256xf32>
    %835 = vector.broadcast %833 : vector<1x256xf32> to vector<4x256xf32>
    %836 = arith.mulf %834, %835 : vector<4x256xf32>
    %837 = arith.addf %831, %836 : vector<4x256xf32>
    %838 = vector.extract_strided_slice %825 {offsets = [0, 2], sizes = [4, 1], strides = [1, 1]} : vector<4x4xf32> to vector<4x1xf32>
    %839 = vector.extract_strided_slice %824 {offsets = [2, 0], sizes = [1, 256], strides = [1, 1]} : vector<8x256xf32> to vector<1x256xf32>
    %840 = vector.broadcast %838 : vector<4x1xf32> to vector<4x256xf32>
    %841 = vector.broadcast %839 : vector<1x256xf32> to vector<4x256xf32>
    %842 = arith.mulf %840, %841 : vector<4x256xf32>
    %843 = arith.addf %837, %842 : vector<4x256xf32>
    %844 = vector.extract_strided_slice %825 {offsets = [0, 3], sizes = [4, 1], strides = [1, 1]} : vector<4x4xf32> to vector<4x1xf32>
    %845 = vector.extract_strided_slice %824 {offsets = [3, 0], sizes = [1, 256], strides = [1, 1]} : vector<8x256xf32> to vector<1x256xf32>
    %846 = vector.broadcast %844 : vector<4x1xf32> to vector<4x256xf32>
    %847 = vector.broadcast %845 : vector<1x256xf32> to vector<4x256xf32>
    %848 = arith.mulf %846, %847 : vector<4x256xf32>
    %849 = arith.addf %843, %848 : vector<4x256xf32>
    %850 = vector.extract_strided_slice %825 {offsets = [0, 0], sizes = [4, 1], strides = [1, 1]} : vector<4x4xf32> to vector<4x1xf32>
    %851 = vector.extract_strided_slice %824 {offsets = [4, 0], sizes = [1, 256], strides = [1, 1]} : vector<8x256xf32> to vector<1x256xf32>
    %852 = vector.broadcast %850 : vector<4x1xf32> to vector<4x256xf32>
    %853 = vector.broadcast %851 : vector<1x256xf32> to vector<4x256xf32>
    %854 = arith.mulf %852, %853 : vector<4x256xf32>
    %855 = arith.addf %814, %854 : vector<4x256xf32>
    %856 = vector.extract_strided_slice %825 {offsets = [0, 1], sizes = [4, 1], strides = [1, 1]} : vector<4x4xf32> to vector<4x1xf32>
    %857 = vector.extract_strided_slice %824 {offsets = [5, 0], sizes = [1, 256], strides = [1, 1]} : vector<8x256xf32> to vector<1x256xf32>
    %858 = vector.broadcast %856 : vector<4x1xf32> to vector<4x256xf32>
    %859 = vector.broadcast %857 : vector<1x256xf32> to vector<4x256xf32>
    %860 = arith.mulf %858, %859 : vector<4x256xf32>
    %861 = arith.addf %855, %860 : vector<4x256xf32>
    %862 = vector.extract_strided_slice %825 {offsets = [0, 2], sizes = [4, 1], strides = [1, 1]} : vector<4x4xf32> to vector<4x1xf32>
    %863 = vector.extract_strided_slice %824 {offsets = [6, 0], sizes = [1, 256], strides = [1, 1]} : vector<8x256xf32> to vector<1x256xf32>
    %864 = vector.broadcast %862 : vector<4x1xf32> to vector<4x256xf32>
    %865 = vector.broadcast %863 : vector<1x256xf32> to vector<4x256xf32>
    %866 = arith.mulf %864, %865 : vector<4x256xf32>
    %867 = arith.addf %861, %866 : vector<4x256xf32>
    %868 = vector.extract_strided_slice %825 {offsets = [0, 3], sizes = [4, 1], strides = [1, 1]} : vector<4x4xf32> to vector<4x1xf32>
    %869 = vector.extract_strided_slice %824 {offsets = [7, 0], sizes = [1, 256], strides = [1, 1]} : vector<8x256xf32> to vector<1x256xf32>
    %870 = vector.broadcast %868 : vector<4x1xf32> to vector<4x256xf32>
    %871 = vector.broadcast %869 : vector<1x256xf32> to vector<4x256xf32>
    %872 = arith.mulf %870, %871 : vector<4x256xf32>
    %873 = arith.addf %867, %872 : vector<4x256xf32>
    %c1_i32_109 = arith.constant 1 : i32
    %874 = tpu.dynamic_rotate %697 by %c1_i32_109 dim 1 : vector<8x256xf32>, i32 -> vector<8x256xf32>
    %c1_i32_110 = arith.constant 1 : i32
    %875 = vector.broadcast %c1_i32_110 : i32 to vector<1x256xi32>
    %876 = arith.cmpi sge, %2, %875 : vector<1x256xi32>
    %cst_111 = arith.constant 0.000000e+00 : f32
    %877 = vector.shape_cast %876 : vector<1x256xi1> to vector<1x256xi1>
    %878 = vector.broadcast %877 : vector<1x256xi1> to vector<8x256xi1>
    %879 = vector.broadcast %cst_111 : f32 to vector<8x256xf32>
    %880 = arith.select %878, %874, %879 : vector<8x256xi1>, vector<8x256xf32>
    %c48 = arith.constant 48 : index
    %c0_112 = arith.constant 0 : index
    %881 = vector.load %arg2[%c48, %c0_112] : memref<72x4xf32, #tpu.memory_space<vmem>>, vector<4x4xf32>
    %882 = vector.extract_strided_slice %881 {offsets = [0, 0], sizes = [4, 1], strides = [1, 1]} : vector<4x4xf32> to vector<4x1xf32>
    %883 = vector.extract_strided_slice %880 {offsets = [0, 0], sizes = [1, 256], strides = [1, 1]} : vector<8x256xf32> to vector<1x256xf32>
    %884 = vector.broadcast %882 : vector<4x1xf32> to vector<4x256xf32>
    %885 = vector.broadcast %883 : vector<1x256xf32> to vector<4x256xf32>
    %886 = arith.mulf %884, %885 : vector<4x256xf32>
    %887 = arith.addf %849, %886 : vector<4x256xf32>
    %888 = vector.extract_strided_slice %881 {offsets = [0, 1], sizes = [4, 1], strides = [1, 1]} : vector<4x4xf32> to vector<4x1xf32>
    %889 = vector.extract_strided_slice %880 {offsets = [1, 0], sizes = [1, 256], strides = [1, 1]} : vector<8x256xf32> to vector<1x256xf32>
    %890 = vector.broadcast %888 : vector<4x1xf32> to vector<4x256xf32>
    %891 = vector.broadcast %889 : vector<1x256xf32> to vector<4x256xf32>
    %892 = arith.mulf %890, %891 : vector<4x256xf32>
    %893 = arith.addf %887, %892 : vector<4x256xf32>
    %894 = vector.extract_strided_slice %881 {offsets = [0, 2], sizes = [4, 1], strides = [1, 1]} : vector<4x4xf32> to vector<4x1xf32>
    %895 = vector.extract_strided_slice %880 {offsets = [2, 0], sizes = [1, 256], strides = [1, 1]} : vector<8x256xf32> to vector<1x256xf32>
    %896 = vector.broadcast %894 : vector<4x1xf32> to vector<4x256xf32>
    %897 = vector.broadcast %895 : vector<1x256xf32> to vector<4x256xf32>
    %898 = arith.mulf %896, %897 : vector<4x256xf32>
    %899 = arith.addf %893, %898 : vector<4x256xf32>
    %900 = vector.extract_strided_slice %881 {offsets = [0, 3], sizes = [4, 1], strides = [1, 1]} : vector<4x4xf32> to vector<4x1xf32>
    %901 = vector.extract_strided_slice %880 {offsets = [3, 0], sizes = [1, 256], strides = [1, 1]} : vector<8x256xf32> to vector<1x256xf32>
    %902 = vector.broadcast %900 : vector<4x1xf32> to vector<4x256xf32>
    %903 = vector.broadcast %901 : vector<1x256xf32> to vector<4x256xf32>
    %904 = arith.mulf %902, %903 : vector<4x256xf32>
    %905 = arith.addf %899, %904 : vector<4x256xf32>
    %906 = vector.extract_strided_slice %881 {offsets = [0, 0], sizes = [4, 1], strides = [1, 1]} : vector<4x4xf32> to vector<4x1xf32>
    %907 = vector.extract_strided_slice %880 {offsets = [4, 0], sizes = [1, 256], strides = [1, 1]} : vector<8x256xf32> to vector<1x256xf32>
    %908 = vector.broadcast %906 : vector<4x1xf32> to vector<4x256xf32>
    %909 = vector.broadcast %907 : vector<1x256xf32> to vector<4x256xf32>
    %910 = arith.mulf %908, %909 : vector<4x256xf32>
    %911 = arith.addf %873, %910 : vector<4x256xf32>
    %912 = vector.extract_strided_slice %881 {offsets = [0, 1], sizes = [4, 1], strides = [1, 1]} : vector<4x4xf32> to vector<4x1xf32>
    %913 = vector.extract_strided_slice %880 {offsets = [5, 0], sizes = [1, 256], strides = [1, 1]} : vector<8x256xf32> to vector<1x256xf32>
    %914 = vector.broadcast %912 : vector<4x1xf32> to vector<4x256xf32>
    %915 = vector.broadcast %913 : vector<1x256xf32> to vector<4x256xf32>
    %916 = arith.mulf %914, %915 : vector<4x256xf32>
    %917 = arith.addf %911, %916 : vector<4x256xf32>
    %918 = vector.extract_strided_slice %881 {offsets = [0, 2], sizes = [4, 1], strides = [1, 1]} : vector<4x4xf32> to vector<4x1xf32>
    %919 = vector.extract_strided_slice %880 {offsets = [6, 0], sizes = [1, 256], strides = [1, 1]} : vector<8x256xf32> to vector<1x256xf32>
    %920 = vector.broadcast %918 : vector<4x1xf32> to vector<4x256xf32>
    %921 = vector.broadcast %919 : vector<1x256xf32> to vector<4x256xf32>
    %922 = arith.mulf %920, %921 : vector<4x256xf32>
    %923 = arith.addf %917, %922 : vector<4x256xf32>
    %924 = vector.extract_strided_slice %881 {offsets = [0, 3], sizes = [4, 1], strides = [1, 1]} : vector<4x4xf32> to vector<4x1xf32>
    %925 = vector.extract_strided_slice %880 {offsets = [7, 0], sizes = [1, 256], strides = [1, 1]} : vector<8x256xf32> to vector<1x256xf32>
    %926 = vector.broadcast %924 : vector<4x1xf32> to vector<4x256xf32>
    %927 = vector.broadcast %925 : vector<1x256xf32> to vector<4x256xf32>
    %928 = arith.mulf %926, %927 : vector<4x256xf32>
    %929 = arith.addf %923, %928 : vector<4x256xf32>
    %c52 = arith.constant 52 : index
    %c0_113 = arith.constant 0 : index
    %930 = vector.load %arg2[%c52, %c0_113] : memref<72x4xf32, #tpu.memory_space<vmem>>, vector<4x4xf32>
    %931 = vector.extract_strided_slice %930 {offsets = [0, 0], sizes = [4, 1], strides = [1, 1]} : vector<4x4xf32> to vector<4x1xf32>
    %932 = vector.extract_strided_slice %697 {offsets = [0, 0], sizes = [1, 256], strides = [1, 1]} : vector<8x256xf32> to vector<1x256xf32>
    %933 = vector.broadcast %931 : vector<4x1xf32> to vector<4x256xf32>
    %934 = vector.broadcast %932 : vector<1x256xf32> to vector<4x256xf32>
    %935 = arith.mulf %933, %934 : vector<4x256xf32>
    %936 = arith.addf %905, %935 : vector<4x256xf32>
    %937 = vector.extract_strided_slice %930 {offsets = [0, 1], sizes = [4, 1], strides = [1, 1]} : vector<4x4xf32> to vector<4x1xf32>
    %938 = vector.extract_strided_slice %697 {offsets = [1, 0], sizes = [1, 256], strides = [1, 1]} : vector<8x256xf32> to vector<1x256xf32>
    %939 = vector.broadcast %937 : vector<4x1xf32> to vector<4x256xf32>
    %940 = vector.broadcast %938 : vector<1x256xf32> to vector<4x256xf32>
    %941 = arith.mulf %939, %940 : vector<4x256xf32>
    %942 = arith.addf %936, %941 : vector<4x256xf32>
    %943 = vector.extract_strided_slice %930 {offsets = [0, 2], sizes = [4, 1], strides = [1, 1]} : vector<4x4xf32> to vector<4x1xf32>
    %944 = vector.extract_strided_slice %697 {offsets = [2, 0], sizes = [1, 256], strides = [1, 1]} : vector<8x256xf32> to vector<1x256xf32>
    %945 = vector.broadcast %943 : vector<4x1xf32> to vector<4x256xf32>
    %946 = vector.broadcast %944 : vector<1x256xf32> to vector<4x256xf32>
    %947 = arith.mulf %945, %946 : vector<4x256xf32>
    %948 = arith.addf %942, %947 : vector<4x256xf32>
    %949 = vector.extract_strided_slice %930 {offsets = [0, 3], sizes = [4, 1], strides = [1, 1]} : vector<4x4xf32> to vector<4x1xf32>
    %950 = vector.extract_strided_slice %697 {offsets = [3, 0], sizes = [1, 256], strides = [1, 1]} : vector<8x256xf32> to vector<1x256xf32>
    %951 = vector.broadcast %949 : vector<4x1xf32> to vector<4x256xf32>
    %952 = vector.broadcast %950 : vector<1x256xf32> to vector<4x256xf32>
    %953 = arith.mulf %951, %952 : vector<4x256xf32>
    %954 = arith.addf %948, %953 : vector<4x256xf32>
    %955 = vector.extract_strided_slice %930 {offsets = [0, 0], sizes = [4, 1], strides = [1, 1]} : vector<4x4xf32> to vector<4x1xf32>
    %956 = vector.extract_strided_slice %697 {offsets = [4, 0], sizes = [1, 256], strides = [1, 1]} : vector<8x256xf32> to vector<1x256xf32>
    %957 = vector.broadcast %955 : vector<4x1xf32> to vector<4x256xf32>
    %958 = vector.broadcast %956 : vector<1x256xf32> to vector<4x256xf32>
    %959 = arith.mulf %957, %958 : vector<4x256xf32>
    %960 = arith.addf %929, %959 : vector<4x256xf32>
    %961 = vector.extract_strided_slice %930 {offsets = [0, 1], sizes = [4, 1], strides = [1, 1]} : vector<4x4xf32> to vector<4x1xf32>
    %962 = vector.extract_strided_slice %697 {offsets = [5, 0], sizes = [1, 256], strides = [1, 1]} : vector<8x256xf32> to vector<1x256xf32>
    %963 = vector.broadcast %961 : vector<4x1xf32> to vector<4x256xf32>
    %964 = vector.broadcast %962 : vector<1x256xf32> to vector<4x256xf32>
    %965 = arith.mulf %963, %964 : vector<4x256xf32>
    %966 = arith.addf %960, %965 : vector<4x256xf32>
    %967 = vector.extract_strided_slice %930 {offsets = [0, 2], sizes = [4, 1], strides = [1, 1]} : vector<4x4xf32> to vector<4x1xf32>
    %968 = vector.extract_strided_slice %697 {offsets = [6, 0], sizes = [1, 256], strides = [1, 1]} : vector<8x256xf32> to vector<1x256xf32>
    %969 = vector.broadcast %967 : vector<4x1xf32> to vector<4x256xf32>
    %970 = vector.broadcast %968 : vector<1x256xf32> to vector<4x256xf32>
    %971 = arith.mulf %969, %970 : vector<4x256xf32>
    %972 = arith.addf %966, %971 : vector<4x256xf32>
    %973 = vector.extract_strided_slice %930 {offsets = [0, 3], sizes = [4, 1], strides = [1, 1]} : vector<4x4xf32> to vector<4x1xf32>
    %974 = vector.extract_strided_slice %697 {offsets = [7, 0], sizes = [1, 256], strides = [1, 1]} : vector<8x256xf32> to vector<1x256xf32>
    %975 = vector.broadcast %973 : vector<4x1xf32> to vector<4x256xf32>
    %976 = vector.broadcast %974 : vector<1x256xf32> to vector<4x256xf32>
    %977 = arith.mulf %975, %976 : vector<4x256xf32>
    %978 = arith.addf %972, %977 : vector<4x256xf32>
    %c255_i32_114 = arith.constant 255 : i32
    %979 = tpu.dynamic_rotate %697 by %c255_i32_114 dim 1 : vector<8x256xf32>, i32 -> vector<8x256xf32>
    %c15_i32_115 = arith.constant 15 : i32
    %980 = vector.broadcast %c15_i32_115 : i32 to vector<1x256xi32>
    %981 = arith.cmpi slt, %2, %980 : vector<1x256xi32>
    %cst_116 = arith.constant 0.000000e+00 : f32
    %982 = vector.shape_cast %981 : vector<1x256xi1> to vector<1x256xi1>
    %983 = vector.broadcast %982 : vector<1x256xi1> to vector<8x256xi1>
    %984 = vector.broadcast %cst_116 : f32 to vector<8x256xf32>
    %985 = arith.select %983, %979, %984 : vector<8x256xi1>, vector<8x256xf32>
    %c56 = arith.constant 56 : index
    %c0_117 = arith.constant 0 : index
    %986 = vector.load %arg2[%c56, %c0_117] : memref<72x4xf32, #tpu.memory_space<vmem>>, vector<4x4xf32>
    %987 = vector.extract_strided_slice %986 {offsets = [0, 0], sizes = [4, 1], strides = [1, 1]} : vector<4x4xf32> to vector<4x1xf32>
    %988 = vector.extract_strided_slice %985 {offsets = [0, 0], sizes = [1, 256], strides = [1, 1]} : vector<8x256xf32> to vector<1x256xf32>
    %989 = vector.broadcast %987 : vector<4x1xf32> to vector<4x256xf32>
    %990 = vector.broadcast %988 : vector<1x256xf32> to vector<4x256xf32>
    %991 = arith.mulf %989, %990 : vector<4x256xf32>
    %992 = arith.addf %954, %991 : vector<4x256xf32>
    %993 = vector.extract_strided_slice %986 {offsets = [0, 1], sizes = [4, 1], strides = [1, 1]} : vector<4x4xf32> to vector<4x1xf32>
    %994 = vector.extract_strided_slice %985 {offsets = [1, 0], sizes = [1, 256], strides = [1, 1]} : vector<8x256xf32> to vector<1x256xf32>
    %995 = vector.broadcast %993 : vector<4x1xf32> to vector<4x256xf32>
    %996 = vector.broadcast %994 : vector<1x256xf32> to vector<4x256xf32>
    %997 = arith.mulf %995, %996 : vector<4x256xf32>
    %998 = arith.addf %992, %997 : vector<4x256xf32>
    %999 = vector.extract_strided_slice %986 {offsets = [0, 2], sizes = [4, 1], strides = [1, 1]} : vector<4x4xf32> to vector<4x1xf32>
    %1000 = vector.extract_strided_slice %985 {offsets = [2, 0], sizes = [1, 256], strides = [1, 1]} : vector<8x256xf32> to vector<1x256xf32>
    %1001 = vector.broadcast %999 : vector<4x1xf32> to vector<4x256xf32>
    %1002 = vector.broadcast %1000 : vector<1x256xf32> to vector<4x256xf32>
    %1003 = arith.mulf %1001, %1002 : vector<4x256xf32>
    %1004 = arith.addf %998, %1003 : vector<4x256xf32>
    %1005 = vector.extract_strided_slice %986 {offsets = [0, 3], sizes = [4, 1], strides = [1, 1]} : vector<4x4xf32> to vector<4x1xf32>
    %1006 = vector.extract_strided_slice %985 {offsets = [3, 0], sizes = [1, 256], strides = [1, 1]} : vector<8x256xf32> to vector<1x256xf32>
    %1007 = vector.broadcast %1005 : vector<4x1xf32> to vector<4x256xf32>
    %1008 = vector.broadcast %1006 : vector<1x256xf32> to vector<4x256xf32>
    %1009 = arith.mulf %1007, %1008 : vector<4x256xf32>
    %1010 = arith.addf %1004, %1009 : vector<4x256xf32>
    %1011 = vector.extract_strided_slice %986 {offsets = [0, 0], sizes = [4, 1], strides = [1, 1]} : vector<4x4xf32> to vector<4x1xf32>
    %1012 = vector.extract_strided_slice %985 {offsets = [4, 0], sizes = [1, 256], strides = [1, 1]} : vector<8x256xf32> to vector<1x256xf32>
    %1013 = vector.broadcast %1011 : vector<4x1xf32> to vector<4x256xf32>
    %1014 = vector.broadcast %1012 : vector<1x256xf32> to vector<4x256xf32>
    %1015 = arith.mulf %1013, %1014 : vector<4x256xf32>
    %1016 = arith.addf %978, %1015 : vector<4x256xf32>
    %1017 = vector.extract_strided_slice %986 {offsets = [0, 1], sizes = [4, 1], strides = [1, 1]} : vector<4x4xf32> to vector<4x1xf32>
    %1018 = vector.extract_strided_slice %985 {offsets = [5, 0], sizes = [1, 256], strides = [1, 1]} : vector<8x256xf32> to vector<1x256xf32>
    %1019 = vector.broadcast %1017 : vector<4x1xf32> to vector<4x256xf32>
    %1020 = vector.broadcast %1018 : vector<1x256xf32> to vector<4x256xf32>
    %1021 = arith.mulf %1019, %1020 : vector<4x256xf32>
    %1022 = arith.addf %1016, %1021 : vector<4x256xf32>
    %1023 = vector.extract_strided_slice %986 {offsets = [0, 2], sizes = [4, 1], strides = [1, 1]} : vector<4x4xf32> to vector<4x1xf32>
    %1024 = vector.extract_strided_slice %985 {offsets = [6, 0], sizes = [1, 256], strides = [1, 1]} : vector<8x256xf32> to vector<1x256xf32>
    %1025 = vector.broadcast %1023 : vector<4x1xf32> to vector<4x256xf32>
    %1026 = vector.broadcast %1024 : vector<1x256xf32> to vector<4x256xf32>
    %1027 = arith.mulf %1025, %1026 : vector<4x256xf32>
    %1028 = arith.addf %1022, %1027 : vector<4x256xf32>
    %1029 = vector.extract_strided_slice %986 {offsets = [0, 3], sizes = [4, 1], strides = [1, 1]} : vector<4x4xf32> to vector<4x1xf32>
    %1030 = vector.extract_strided_slice %985 {offsets = [7, 0], sizes = [1, 256], strides = [1, 1]} : vector<8x256xf32> to vector<1x256xf32>
    %1031 = vector.broadcast %1029 : vector<4x1xf32> to vector<4x256xf32>
    %1032 = vector.broadcast %1030 : vector<1x256xf32> to vector<4x256xf32>
    %1033 = arith.mulf %1031, %1032 : vector<4x256xf32>
    %1034 = arith.addf %1028, %1033 : vector<4x256xf32>
    %c241_i32_118 = arith.constant 241 : i32
    %1035 = tpu.dynamic_rotate %697 by %c241_i32_118 dim 1 : vector<8x256xf32>, i32 -> vector<8x256xf32>
    %c1_i32_119 = arith.constant 1 : i32
    %1036 = vector.broadcast %c1_i32_119 : i32 to vector<1x256xi32>
    %1037 = arith.cmpi sge, %2, %1036 : vector<1x256xi32>
    %c240_i32_120 = arith.constant 240 : i32
    %1038 = vector.broadcast %c240_i32_120 : i32 to vector<1x256xi32>
    %1039 = arith.cmpi slt, %0, %1038 : vector<1x256xi32>
    %1040 = arith.andi %1037, %1039 : vector<1x256xi1>
    %cst_121 = arith.constant 0.000000e+00 : f32
    %1041 = vector.shape_cast %1040 : vector<1x256xi1> to vector<1x256xi1>
    %1042 = vector.broadcast %1041 : vector<1x256xi1> to vector<8x256xi1>
    %1043 = vector.broadcast %cst_121 : f32 to vector<8x256xf32>
    %1044 = arith.select %1042, %1035, %1043 : vector<8x256xi1>, vector<8x256xf32>
    %c60 = arith.constant 60 : index
    %c0_122 = arith.constant 0 : index
    %1045 = vector.load %arg2[%c60, %c0_122] : memref<72x4xf32, #tpu.memory_space<vmem>>, vector<4x4xf32>
    %1046 = vector.extract_strided_slice %1045 {offsets = [0, 0], sizes = [4, 1], strides = [1, 1]} : vector<4x4xf32> to vector<4x1xf32>
    %1047 = vector.extract_strided_slice %1044 {offsets = [0, 0], sizes = [1, 256], strides = [1, 1]} : vector<8x256xf32> to vector<1x256xf32>
    %1048 = vector.broadcast %1046 : vector<4x1xf32> to vector<4x256xf32>
    %1049 = vector.broadcast %1047 : vector<1x256xf32> to vector<4x256xf32>
    %1050 = arith.mulf %1048, %1049 : vector<4x256xf32>
    %1051 = arith.addf %1010, %1050 : vector<4x256xf32>
    %1052 = vector.extract_strided_slice %1045 {offsets = [0, 1], sizes = [4, 1], strides = [1, 1]} : vector<4x4xf32> to vector<4x1xf32>
    %1053 = vector.extract_strided_slice %1044 {offsets = [1, 0], sizes = [1, 256], strides = [1, 1]} : vector<8x256xf32> to vector<1x256xf32>
    %1054 = vector.broadcast %1052 : vector<4x1xf32> to vector<4x256xf32>
    %1055 = vector.broadcast %1053 : vector<1x256xf32> to vector<4x256xf32>
    %1056 = arith.mulf %1054, %1055 : vector<4x256xf32>
    %1057 = arith.addf %1051, %1056 : vector<4x256xf32>
    %1058 = vector.extract_strided_slice %1045 {offsets = [0, 2], sizes = [4, 1], strides = [1, 1]} : vector<4x4xf32> to vector<4x1xf32>
    %1059 = vector.extract_strided_slice %1044 {offsets = [2, 0], sizes = [1, 256], strides = [1, 1]} : vector<8x256xf32> to vector<1x256xf32>
    %1060 = vector.broadcast %1058 : vector<4x1xf32> to vector<4x256xf32>
    %1061 = vector.broadcast %1059 : vector<1x256xf32> to vector<4x256xf32>
    %1062 = arith.mulf %1060, %1061 : vector<4x256xf32>
    %1063 = arith.addf %1057, %1062 : vector<4x256xf32>
    %1064 = vector.extract_strided_slice %1045 {offsets = [0, 3], sizes = [4, 1], strides = [1, 1]} : vector<4x4xf32> to vector<4x1xf32>
    %1065 = vector.extract_strided_slice %1044 {offsets = [3, 0], sizes = [1, 256], strides = [1, 1]} : vector<8x256xf32> to vector<1x256xf32>
    %1066 = vector.broadcast %1064 : vector<4x1xf32> to vector<4x256xf32>
    %1067 = vector.broadcast %1065 : vector<1x256xf32> to vector<4x256xf32>
    %1068 = arith.mulf %1066, %1067 : vector<4x256xf32>
    %1069 = arith.addf %1063, %1068 : vector<4x256xf32>
    %1070 = vector.extract_strided_slice %1045 {offsets = [0, 0], sizes = [4, 1], strides = [1, 1]} : vector<4x4xf32> to vector<4x1xf32>
    %1071 = vector.extract_strided_slice %1044 {offsets = [4, 0], sizes = [1, 256], strides = [1, 1]} : vector<8x256xf32> to vector<1x256xf32>
    %1072 = vector.broadcast %1070 : vector<4x1xf32> to vector<4x256xf32>
    %1073 = vector.broadcast %1071 : vector<1x256xf32> to vector<4x256xf32>
    %1074 = arith.mulf %1072, %1073 : vector<4x256xf32>
    %1075 = arith.addf %1034, %1074 : vector<4x256xf32>
    %1076 = vector.extract_strided_slice %1045 {offsets = [0, 1], sizes = [4, 1], strides = [1, 1]} : vector<4x4xf32> to vector<4x1xf32>
    %1077 = vector.extract_strided_slice %1044 {offsets = [5, 0], sizes = [1, 256], strides = [1, 1]} : vector<8x256xf32> to vector<1x256xf32>
    %1078 = vector.broadcast %1076 : vector<4x1xf32> to vector<4x256xf32>
    %1079 = vector.broadcast %1077 : vector<1x256xf32> to vector<4x256xf32>
    %1080 = arith.mulf %1078, %1079 : vector<4x256xf32>
    %1081 = arith.addf %1075, %1080 : vector<4x256xf32>
    %1082 = vector.extract_strided_slice %1045 {offsets = [0, 2], sizes = [4, 1], strides = [1, 1]} : vector<4x4xf32> to vector<4x1xf32>
    %1083 = vector.extract_strided_slice %1044 {offsets = [6, 0], sizes = [1, 256], strides = [1, 1]} : vector<8x256xf32> to vector<1x256xf32>
    %1084 = vector.broadcast %1082 : vector<4x1xf32> to vector<4x256xf32>
    %1085 = vector.broadcast %1083 : vector<1x256xf32> to vector<4x256xf32>
    %1086 = arith.mulf %1084, %1085 : vector<4x256xf32>
    %1087 = arith.addf %1081, %1086 : vector<4x256xf32>
    %1088 = vector.extract_strided_slice %1045 {offsets = [0, 3], sizes = [4, 1], strides = [1, 1]} : vector<4x4xf32> to vector<4x1xf32>
    %1089 = vector.extract_strided_slice %1044 {offsets = [7, 0], sizes = [1, 256], strides = [1, 1]} : vector<8x256xf32> to vector<1x256xf32>
    %1090 = vector.broadcast %1088 : vector<4x1xf32> to vector<4x256xf32>
    %1091 = vector.broadcast %1089 : vector<1x256xf32> to vector<4x256xf32>
    %1092 = arith.mulf %1090, %1091 : vector<4x256xf32>
    %1093 = arith.addf %1087, %1092 : vector<4x256xf32>
    %c240_i32_123 = arith.constant 240 : i32
    %1094 = tpu.dynamic_rotate %697 by %c240_i32_123 dim 1 : vector<8x256xf32>, i32 -> vector<8x256xf32>
    %c240_i32_124 = arith.constant 240 : i32
    %1095 = vector.broadcast %c240_i32_124 : i32 to vector<1x256xi32>
    %1096 = arith.cmpi slt, %0, %1095 : vector<1x256xi32>
    %cst_125 = arith.constant 0.000000e+00 : f32
    %1097 = vector.shape_cast %1096 : vector<1x256xi1> to vector<1x256xi1>
    %1098 = vector.broadcast %1097 : vector<1x256xi1> to vector<8x256xi1>
    %1099 = vector.broadcast %cst_125 : f32 to vector<8x256xf32>
    %1100 = arith.select %1098, %1094, %1099 : vector<8x256xi1>, vector<8x256xf32>
    %c64 = arith.constant 64 : index
    %c0_126 = arith.constant 0 : index
    %1101 = vector.load %arg2[%c64, %c0_126] : memref<72x4xf32, #tpu.memory_space<vmem>>, vector<4x4xf32>
    %1102 = vector.extract_strided_slice %1101 {offsets = [0, 0], sizes = [4, 1], strides = [1, 1]} : vector<4x4xf32> to vector<4x1xf32>
    %1103 = vector.extract_strided_slice %1100 {offsets = [0, 0], sizes = [1, 256], strides = [1, 1]} : vector<8x256xf32> to vector<1x256xf32>
    %1104 = vector.broadcast %1102 : vector<4x1xf32> to vector<4x256xf32>
    %1105 = vector.broadcast %1103 : vector<1x256xf32> to vector<4x256xf32>
    %1106 = arith.mulf %1104, %1105 : vector<4x256xf32>
    %1107 = arith.addf %1069, %1106 : vector<4x256xf32>
    %1108 = vector.extract_strided_slice %1101 {offsets = [0, 1], sizes = [4, 1], strides = [1, 1]} : vector<4x4xf32> to vector<4x1xf32>
    %1109 = vector.extract_strided_slice %1100 {offsets = [1, 0], sizes = [1, 256], strides = [1, 1]} : vector<8x256xf32> to vector<1x256xf32>
    %1110 = vector.broadcast %1108 : vector<4x1xf32> to vector<4x256xf32>
    %1111 = vector.broadcast %1109 : vector<1x256xf32> to vector<4x256xf32>
    %1112 = arith.mulf %1110, %1111 : vector<4x256xf32>
    %1113 = arith.addf %1107, %1112 : vector<4x256xf32>
    %1114 = vector.extract_strided_slice %1101 {offsets = [0, 2], sizes = [4, 1], strides = [1, 1]} : vector<4x4xf32> to vector<4x1xf32>
    %1115 = vector.extract_strided_slice %1100 {offsets = [2, 0], sizes = [1, 256], strides = [1, 1]} : vector<8x256xf32> to vector<1x256xf32>
    %1116 = vector.broadcast %1114 : vector<4x1xf32> to vector<4x256xf32>
    %1117 = vector.broadcast %1115 : vector<1x256xf32> to vector<4x256xf32>
    %1118 = arith.mulf %1116, %1117 : vector<4x256xf32>
    %1119 = arith.addf %1113, %1118 : vector<4x256xf32>
    %1120 = vector.extract_strided_slice %1101 {offsets = [0, 3], sizes = [4, 1], strides = [1, 1]} : vector<4x4xf32> to vector<4x1xf32>
    %1121 = vector.extract_strided_slice %1100 {offsets = [3, 0], sizes = [1, 256], strides = [1, 1]} : vector<8x256xf32> to vector<1x256xf32>
    %1122 = vector.broadcast %1120 : vector<4x1xf32> to vector<4x256xf32>
    %1123 = vector.broadcast %1121 : vector<1x256xf32> to vector<4x256xf32>
    %1124 = arith.mulf %1122, %1123 : vector<4x256xf32>
    %1125 = arith.addf %1119, %1124 : vector<4x256xf32>
    %1126 = vector.extract_strided_slice %1101 {offsets = [0, 0], sizes = [4, 1], strides = [1, 1]} : vector<4x4xf32> to vector<4x1xf32>
    %1127 = vector.extract_strided_slice %1100 {offsets = [4, 0], sizes = [1, 256], strides = [1, 1]} : vector<8x256xf32> to vector<1x256xf32>
    %1128 = vector.broadcast %1126 : vector<4x1xf32> to vector<4x256xf32>
    %1129 = vector.broadcast %1127 : vector<1x256xf32> to vector<4x256xf32>
    %1130 = arith.mulf %1128, %1129 : vector<4x256xf32>
    %1131 = arith.addf %1093, %1130 : vector<4x256xf32>
    %1132 = vector.extract_strided_slice %1101 {offsets = [0, 1], sizes = [4, 1], strides = [1, 1]} : vector<4x4xf32> to vector<4x1xf32>
    %1133 = vector.extract_strided_slice %1100 {offsets = [5, 0], sizes = [1, 256], strides = [1, 1]} : vector<8x256xf32> to vector<1x256xf32>
    %1134 = vector.broadcast %1132 : vector<4x1xf32> to vector<4x256xf32>
    %1135 = vector.broadcast %1133 : vector<1x256xf32> to vector<4x256xf32>
    %1136 = arith.mulf %1134, %1135 : vector<4x256xf32>
    %1137 = arith.addf %1131, %1136 : vector<4x256xf32>
    %1138 = vector.extract_strided_slice %1101 {offsets = [0, 2], sizes = [4, 1], strides = [1, 1]} : vector<4x4xf32> to vector<4x1xf32>
    %1139 = vector.extract_strided_slice %1100 {offsets = [6, 0], sizes = [1, 256], strides = [1, 1]} : vector<8x256xf32> to vector<1x256xf32>
    %1140 = vector.broadcast %1138 : vector<4x1xf32> to vector<4x256xf32>
    %1141 = vector.broadcast %1139 : vector<1x256xf32> to vector<4x256xf32>
    %1142 = arith.mulf %1140, %1141 : vector<4x256xf32>
    %1143 = arith.addf %1137, %1142 : vector<4x256xf32>
    %1144 = vector.extract_strided_slice %1101 {offsets = [0, 3], sizes = [4, 1], strides = [1, 1]} : vector<4x4xf32> to vector<4x1xf32>
    %1145 = vector.extract_strided_slice %1100 {offsets = [7, 0], sizes = [1, 256], strides = [1, 1]} : vector<8x256xf32> to vector<1x256xf32>
    %1146 = vector.broadcast %1144 : vector<4x1xf32> to vector<4x256xf32>
    %1147 = vector.broadcast %1145 : vector<1x256xf32> to vector<4x256xf32>
    %1148 = arith.mulf %1146, %1147 : vector<4x256xf32>
    %1149 = arith.addf %1143, %1148 : vector<4x256xf32>
    %c239_i32_127 = arith.constant 239 : i32
    %1150 = tpu.dynamic_rotate %697 by %c239_i32_127 dim 1 : vector<8x256xf32>, i32 -> vector<8x256xf32>
    %c15_i32_128 = arith.constant 15 : i32
    %1151 = vector.broadcast %c15_i32_128 : i32 to vector<1x256xi32>
    %1152 = arith.cmpi slt, %2, %1151 : vector<1x256xi32>
    %c240_i32_129 = arith.constant 240 : i32
    %1153 = vector.broadcast %c240_i32_129 : i32 to vector<1x256xi32>
    %1154 = arith.cmpi slt, %0, %1153 : vector<1x256xi32>
    %1155 = arith.andi %1152, %1154 : vector<1x256xi1>
    %cst_130 = arith.constant 0.000000e+00 : f32
    %1156 = vector.shape_cast %1155 : vector<1x256xi1> to vector<1x256xi1>
    %1157 = vector.broadcast %1156 : vector<1x256xi1> to vector<8x256xi1>
    %1158 = vector.broadcast %cst_130 : f32 to vector<8x256xf32>
    %1159 = arith.select %1157, %1150, %1158 : vector<8x256xi1>, vector<8x256xf32>
    %c68 = arith.constant 68 : index
    %c0_131 = arith.constant 0 : index
    %1160 = vector.load %arg2[%c68, %c0_131] : memref<72x4xf32, #tpu.memory_space<vmem>>, vector<4x4xf32>
    %1161 = vector.extract_strided_slice %1160 {offsets = [0, 0], sizes = [4, 1], strides = [1, 1]} : vector<4x4xf32> to vector<4x1xf32>
    %1162 = vector.extract_strided_slice %1159 {offsets = [0, 0], sizes = [1, 256], strides = [1, 1]} : vector<8x256xf32> to vector<1x256xf32>
    %1163 = vector.broadcast %1161 : vector<4x1xf32> to vector<4x256xf32>
    %1164 = vector.broadcast %1162 : vector<1x256xf32> to vector<4x256xf32>
    %1165 = arith.mulf %1163, %1164 : vector<4x256xf32>
    %1166 = arith.addf %1125, %1165 : vector<4x256xf32>
    %1167 = vector.extract_strided_slice %1160 {offsets = [0, 1], sizes = [4, 1], strides = [1, 1]} : vector<4x4xf32> to vector<4x1xf32>
    %1168 = vector.extract_strided_slice %1159 {offsets = [1, 0], sizes = [1, 256], strides = [1, 1]} : vector<8x256xf32> to vector<1x256xf32>
    %1169 = vector.broadcast %1167 : vector<4x1xf32> to vector<4x256xf32>
    %1170 = vector.broadcast %1168 : vector<1x256xf32> to vector<4x256xf32>
    %1171 = arith.mulf %1169, %1170 : vector<4x256xf32>
    %1172 = arith.addf %1166, %1171 : vector<4x256xf32>
    %1173 = vector.extract_strided_slice %1160 {offsets = [0, 2], sizes = [4, 1], strides = [1, 1]} : vector<4x4xf32> to vector<4x1xf32>
    %1174 = vector.extract_strided_slice %1159 {offsets = [2, 0], sizes = [1, 256], strides = [1, 1]} : vector<8x256xf32> to vector<1x256xf32>
    %1175 = vector.broadcast %1173 : vector<4x1xf32> to vector<4x256xf32>
    %1176 = vector.broadcast %1174 : vector<1x256xf32> to vector<4x256xf32>
    %1177 = arith.mulf %1175, %1176 : vector<4x256xf32>
    %1178 = arith.addf %1172, %1177 : vector<4x256xf32>
    %1179 = vector.extract_strided_slice %1160 {offsets = [0, 3], sizes = [4, 1], strides = [1, 1]} : vector<4x4xf32> to vector<4x1xf32>
    %1180 = vector.extract_strided_slice %1159 {offsets = [3, 0], sizes = [1, 256], strides = [1, 1]} : vector<8x256xf32> to vector<1x256xf32>
    %1181 = vector.broadcast %1179 : vector<4x1xf32> to vector<4x256xf32>
    %1182 = vector.broadcast %1180 : vector<1x256xf32> to vector<4x256xf32>
    %1183 = arith.mulf %1181, %1182 : vector<4x256xf32>
    %1184 = arith.addf %1178, %1183 : vector<4x256xf32>
    %1185 = vector.extract_strided_slice %1160 {offsets = [0, 0], sizes = [4, 1], strides = [1, 1]} : vector<4x4xf32> to vector<4x1xf32>
    %1186 = vector.extract_strided_slice %1159 {offsets = [4, 0], sizes = [1, 256], strides = [1, 1]} : vector<8x256xf32> to vector<1x256xf32>
    %1187 = vector.broadcast %1185 : vector<4x1xf32> to vector<4x256xf32>
    %1188 = vector.broadcast %1186 : vector<1x256xf32> to vector<4x256xf32>
    %1189 = arith.mulf %1187, %1188 : vector<4x256xf32>
    %1190 = arith.addf %1149, %1189 : vector<4x256xf32>
    %1191 = vector.extract_strided_slice %1160 {offsets = [0, 1], sizes = [4, 1], strides = [1, 1]} : vector<4x4xf32> to vector<4x1xf32>
    %1192 = vector.extract_strided_slice %1159 {offsets = [5, 0], sizes = [1, 256], strides = [1, 1]} : vector<8x256xf32> to vector<1x256xf32>
    %1193 = vector.broadcast %1191 : vector<4x1xf32> to vector<4x256xf32>
    %1194 = vector.broadcast %1192 : vector<1x256xf32> to vector<4x256xf32>
    %1195 = arith.mulf %1193, %1194 : vector<4x256xf32>
    %1196 = arith.addf %1190, %1195 : vector<4x256xf32>
    %1197 = vector.extract_strided_slice %1160 {offsets = [0, 2], sizes = [4, 1], strides = [1, 1]} : vector<4x4xf32> to vector<4x1xf32>
    %1198 = vector.extract_strided_slice %1159 {offsets = [6, 0], sizes = [1, 256], strides = [1, 1]} : vector<8x256xf32> to vector<1x256xf32>
    %1199 = vector.broadcast %1197 : vector<4x1xf32> to vector<4x256xf32>
    %1200 = vector.broadcast %1198 : vector<1x256xf32> to vector<4x256xf32>
    %1201 = arith.mulf %1199, %1200 : vector<4x256xf32>
    %1202 = arith.addf %1196, %1201 : vector<4x256xf32>
    %1203 = vector.extract_strided_slice %1160 {offsets = [0, 3], sizes = [4, 1], strides = [1, 1]} : vector<4x4xf32> to vector<4x1xf32>
    %1204 = vector.extract_strided_slice %1159 {offsets = [7, 0], sizes = [1, 256], strides = [1, 1]} : vector<8x256xf32> to vector<1x256xf32>
    %1205 = vector.broadcast %1203 : vector<4x1xf32> to vector<4x256xf32>
    %1206 = vector.broadcast %1204 : vector<1x256xf32> to vector<4x256xf32>
    %1207 = arith.mulf %1205, %1206 : vector<4x256xf32>
    %1208 = arith.addf %1202, %1207 : vector<4x256xf32>
    %c4_132 = arith.constant 4 : index
    %c0_133 = arith.constant 0 : index
    %1209 = vector.load %arg3[%c4_132, %c0_133] : memref<8x1xf32, #tpu.memory_space<vmem>>, vector<4x1xf32>
    %1210 = vector.broadcast %1209 : vector<4x1xf32> to vector<4x256xf32>
    %1211 = arith.addf %1184, %1210 : vector<4x256xf32>
    %1212 = vector.broadcast %1209 : vector<4x1xf32> to vector<4x256xf32>
    %1213 = arith.addf %1208, %1212 : vector<4x256xf32>
    %1214 = tpu.concatenate %1211, %1213 in 0 : vector<4x256xf32>, vector<4x256xf32> -> vector<8x256xf32>
    %1215 = arith.addf %1214, %613 : vector<8x256xf32>
    %c0_134 = arith.constant 0 : index
    %c0_135 = arith.constant 0 : index
    %1216 = vector.load %arg4[%c0_134, %c0_135] : memref<8x256xf32, #tpu.memory_space<vmem>>, vector<8x256xf32>
    tpu.vector_store %arg4[%c0_134, %c0_135], %1215 {strides = array<i32>} : memref<8x256xf32, #tpu.memory_space<vmem>>, vector<8x256xf32>,
    return
  }
  func.func @transform_0(%arg0: i32) -> (i32, i32) {
    %c0_i32 = arith.constant 0 : i32
    %c0_i32_0 = arith.constant 0 : i32
    return %arg0, %c0_i32 : i32, i32
  }
  func.func @transform_1(%arg0: i32) -> (i32, i32) {
    %c0_i32 = arith.constant 0 : i32
    %c0_i32_0 = arith.constant 0 : i32
    %c0_i32_1 = arith.constant 0 : i32
    return %c0_i32, %c0_i32_0 : i32, i32
  }
  func.func @transform_2(%arg0: i32) -> (i32, i32) {
    %c0_i32 = arith.constant 0 : i32
    %c0_i32_0 = arith.constant 0 : i32
    %c0_i32_1 = arith.constant 0 : i32
    return %c0_i32, %c0_i32_0 : i32, i32
  }
  func.func @transform_3(%arg0: i32) -> (i32, i32) {
    %c0_i32 = arith.constant 0 : i32
    %c0_i32_0 = arith.constant 0 : i32
    return %arg0, %c0_i32 : i32, i32
  }
}

</mosaic_0001>

<llo_original>
// kernel: tpu_custom_call.1
$region0: #{tpu_custom_call.1}
  #allocation0 [shape = 'u32[]', space=smem, size = 0x4, offset = 0x4, fixed_abs, tag = 'smem constant byte address 0x4 - core index']
  #allocation1 [shape = 'u32[72,128]{1,0:T(1,128)}', space=vmem, size = 0x9000, scoped, tag = 'internal scratch']
  %s0 = inlined_call_operand.vmem [shape: f32[8,256], index: 0, kind: input, shape index: {}]
  %s1 = inlined_call_operand.vmem [shape: f32[72,4], index: 1, kind: input, shape index: {}]
  %s2 = inlined_call_operand.vmem [shape: f32[8,1], index: 2, kind: input, shape index: {}]
  %s3 = inlined_call_operand.hbm [shape: f32[8,256], index: 3, kind: output, shape index: {}]
  %s4 = sld [smem:[#allocation0]]
  $region22: #{tpu_custom_call.1} parent=0
    _
  %s6 = ssub.s32 1, %s4
  %s7 = scalar_select 0, %s6, %s4
  $region1: #{tpu_custom_call.1} parent=0
    #allocation2 [shape = 'u8[8192]{0}', space=vmem, size = 0x2000, scoped, tag = 'output window, operand 0, single buffered']
    #allocation3 [shape = 's32[1]{0}', space=sflag, size = 0x4, scoped, tag = 'scoped memory for tpu_custom_call.1']
    %8 = vsyncpa [#allocation3], 0
    // Predicated region
    $region2: #{tpu_custom_call.1} parent=1 // pred_check
      _
    $region3: #{tpu_custom_call.1} parent=1 // pred_check_branch
      %10 = sbr.rel (0) target = $region5
    $region4: #{tpu_custom_call.1} parent=1 // pred_region
      _
    $region5: #{tpu_custom_call.1} parent=1 // pred_fallthru
      _
    // Predicated region
    $region6: #{tpu_custom_call.1} parent=1 // pred_check
      _
    $region7: #{tpu_custom_call.1} parent=1 // pred_check_branch
      %12 = sbr.rel (0) target = $region9
    $region8: #{tpu_custom_call.1} parent=1 // pred_region
      _
    $region9: #{tpu_custom_call.1} parent=1 // pred_fallthru
      _
    // Predicated region
    $region10: #{tpu_custom_call.1} parent=1 // pred_check
      _
    $region11: #{tpu_custom_call.1} parent=1 // pred_check_branch
      %14 = sbr.rel (0) target = $region13
    $region12: #{tpu_custom_call.1} parent=1 // pred_region
      _
    $region13: #{tpu_custom_call.1} parent=1 // pred_fallthru
      _
    %v15 = vlaneseq
    %v16 = vand.u32 %v15, 127
    %v17 = vadd.s32 %v16, 128
    %v18 = vand.u32 %v16, 15
    %v19 = vand.u32 %v17, 15
    %v20 = vld [vmem:[%s0] sm:$0xff]
    %v21 = vld [vmem:[%s0 + $0x8] sm:$0xff]
    %vm22 = vcmp.gt.f32.partialorder %v20, 0.0
    %vm23 = vcmp.gt.f32.partialorder %v21, 0.0
    %v24 = vmin.f32 %v20, 0.0
    %v25 = vmin.f32 %v21, 0.0
    %v26 = vmul.f32 %v24, 1.442695
    %v27 = vpow.pop %v26
    %v28 = vmul.f32 %v25, 1.442695
    %v29 = vpow.pop %v28
    %v30 = vsub.f32 %v27, 1.0
    %v31 = vsub.f32 %v29, 1.0
    %v32 = vsel %vm22, %v20, %v30
    %v33 = vsel %vm23, %v21, %v31
    %34 = vrot.lane.b32.xlu0 %v32, 2
    %v35 = vpop.permute.xlu0 %34
    %36 = vrot.lane.b32.xlu0 %v33, 2
    %v37 = vpop.permute.xlu0 %36
    %vm38 = vcmp.lt.s32.totalorder %v16, 2
    %v39 = vsel %vm38, %v35, %v37
    %v40 = vsel %vm38, %v37, %v35
    %vm41 = vcmp.ge.s32.totalorder %v18, 2
    %vm42 = vcmp.ge.s32.totalorder %v19, 2
    %v43 = vsel %vm41, 1, 0
    %v44 = vsel %vm42, 1, 0
    %vm45 = vcmp.eq.s32.totalorder %v43, 1
    %vm46 = vcmp.eq.s32.totalorder %v44, 1
    %v47 = vsel %vm45, %v40, -3.4028235e+38
    %v48 = vsel %vm46, %v39, -3.4028235e+38
    %v49 = vmax.f32 %v32, %v47
    %v50 = vmax.f32 %v33, %v48
    %51 = vrot.lane.b32.xlu0 %v32, 1
    %v52 = vpop.permute.xlu0 %51
    %53 = vrot.lane.b32.xlu0 %v33, 1
    %v54 = vpop.permute.xlu0 %53
    %vm55 = vcmp.lt.s32.totalorder %v16, 1
    %v56 = vsel %vm55, %v52, %v54
    %v57 = vsel %vm55, %v54, %v52
    %vm58 = vcmp.ge.s32.totalorder %v18, 1
    %vm59 = vcmp.ge.s32.totalorder %v19, 1
    %v60 = vsel %vm58, 1, 0
    %v61 = vsel %vm59, 1, 0
    %vm62 = vcmp.eq.s32.totalorder %v60, 1
    %vm63 = vcmp.eq.s32.totalorder %v61, 1
    %v64 = vsel %vm62, %v57, -3.4028235e+38
    %v65 = vsel %vm63, %v56, -3.4028235e+38
    %v66 = vmax.f32 %v49, %v64
    %v67 = vmax.f32 %v50, %v65
    %68 = vrot.lane.b32.xlu0 %v32, 127
    %v69 = vpop.permute.xlu0 %68
    %70 = vrot.lane.b32.xlu0 %v33, 127
    %v71 = vpop.permute.xlu0 %70
    %vm72 = vcmp.lt.s32.totalorder %v16, 127
    %v73 = vsel %vm72, %v69, %v71
    %v74 = vsel %vm72, %v71, %v69
    %vm75 = vcmp.lt.s32.totalorder %v18, 15
    %vm76 = vcmp.lt.s32.totalorder %v19, 15
    %v77 = vsel %vm75, 1, 0
    %v78 = vsel %vm76, 1, 0
    %vm79 = vcmp.eq.s32.totalorder %v77, 1
    %vm80 = vcmp.eq.s32.totalorder %v78, 1
    %v81 = vsel %vm79, %v73, -3.4028235e+38
    %v82 = vsel %vm80, %v74, -3.4028235e+38
    %v83 = vmax.f32 %v66, %v81
    %v84 = vmax.f32 %v67, %v82
    %85 = vrot.lane.b32.xlu0 %v32, 126
    %v86 = vpop.permute.xlu0 %85
    %87 = vrot.lane.b32.xlu0 %v33, 126
    %v88 = vpop.permute.xlu0 %87
    %vm89 = vcmp.lt.s32.totalorder %v16, 126
    %v90 = vsel %vm89, %v86, %v88
    %v91 = vsel %vm89, %v88, %v86
    %vm92 = vcmp.lt.s32.totalorder %v18, 14
    %vm93 = vcmp.lt.s32.totalorder %v19, 14
    %v94 = vsel %vm92, 1, 0
    %v95 = vsel %vm93, 1, 0
    %vm96 = vcmp.eq.s32.totalorder %v94, 1
    %vm97 = vcmp.eq.s32.totalorder %v95, 1
    %v98 = vsel %vm96, %v90, -3.4028235e+38
    %v99 = vsel %vm97, %v91, -3.4028235e+38
    %v100 = vmax.f32 %v83, %v98
    %v101 = vmax.f32 %v84, %v99
    %102 = vrot.lane.b32.xlu0 %v100, 32
    %v103 = vpop.permute.xlu0 %102
    %104 = vrot.lane.b32.xlu0 %v101, 32
    %v105 = vpop.permute.xlu0 %104
    %vm106 = vcmp.lt.s32.totalorder %v16, 32
    %v107 = vsel %vm106, %v103, %v105
    %v108 = vsel %vm106, %v105, %v103
    %vm109 = vcmp.ge.s32.totalorder %v16, 32
    %vm110 = vcmp.ge.s32.totalorder %v17, 32
    %v111 = vsel %vm109, 1, 0
    %v112 = vsel %vm110, 1, 0
    %vm113 = vcmp.eq.s32.totalorder %v111, 1
    %vm114 = vcmp.eq.s32.totalorder %v112, 1
    %v115 = vsel %vm113, %v108, -3.4028235e+38
    %v116 = vsel %vm114, %v107, -3.4028235e+38
    %v117 = vmax.f32 %v100, %v115
    %v118 = vmax.f32 %v101, %v116
    %119 = vrot.lane.b32.xlu0 %v100, 16
    %v120 = vpop.permute.xlu0 %119
    %121 = vrot.lane.b32.xlu0 %v101, 16
    %v122 = vpop.permute.xlu0 %121
    %vm123 = vcmp.lt.s32.totalorder %v16, 16
    %v124 = vsel %vm123, %v120, %v122
    %v125 = vsel %vm123, %v122, %v120
    %vm126 = vcmp.ge.s32.totalorder %v16, 16
    %vm127 = vcmp.ge.s32.totalorder %v17, 16
    %v128 = vsel %vm126, 1, 0
    %v129 = vsel %vm127, 1, 0
    %vm130 = vcmp.eq.s32.totalorder %v128, 1
    %vm131 = vcmp.eq.s32.totalorder %v129, 1
    %v132 = vsel %vm130, %v125, -3.4028235e+38
    %v133 = vsel %vm131, %v124, -3.4028235e+38
    %v134 = vmax.f32 %v117, %v132
    %v135 = vmax.f32 %v118, %v133
    %136 = vrot.lane.b32.xlu0 %v100, 112
    %v137 = vpop.permute.xlu0 %136
    %138 = vrot.lane.b32.xlu0 %v101, 112
    %v139 = vpop.permute.xlu0 %138
    %vm140 = vcmp.lt.s32.totalorder %v16, 112
    %v141 = vsel %vm140, %v137, %v139
    %v142 = vsel %vm140, %v139, %v137
    %vm143 = vcmp.lt.s32.totalorder %v16, 240
    %vm144 = vcmp.lt.s32.totalorder %v17, 240
    %v145 = vsel %vm143, 1, 0
    %v146 = vsel %vm144, 1, 0
    %vm147 = vcmp.eq.s32.totalorder %v145, 1
    %vm148 = vcmp.eq.s32.totalorder %v146, 1
    %v149 = vsel %vm147, %v141, -3.4028235e+38
    %v150 = vsel %vm148, %v142, -3.4028235e+38
    %v151 = vmax.f32 %v134, %v149
    %v152 = vmax.f32 %v135, %v150
    %153 = vrot.lane.b32.xlu0 %v100, 96
    %v154 = vpop.permute.xlu0 %153
    %155 = vrot.lane.b32.xlu0 %v101, 96
    %v156 = vpop.permute.xlu0 %155
    %vm157 = vcmp.lt.s32.totalorder %v16, 96
    %v158 = vsel %vm157, %v154, %v156
    %v159 = vsel %vm157, %v156, %v154
    %vm160 = vcmp.lt.s32.totalorder %v16, 224
    %vm161 = vcmp.lt.s32.totalorder %v17, 224
    %v162 = vsel %vm160, 1, 0
    %v163 = vsel %vm161, 1, 0
    %vm164 = vcmp.eq.s32.totalorder %v162, 1
    %vm165 = vcmp.eq.s32.totalorder %v163, 1
    %v166 = vsel %vm164, %v158, -3.4028235e+38
    %v167 = vsel %vm165, %v159, -3.4028235e+38
    %v168 = vmax.f32 %v151, %v166
    %v169 = vmax.f32 %v152, %v167
    %v170 = vadd.f32 %v168, %v169
    %171 = vadd.xlane.f32.xlu0 %v170
    %v172 = vpop.xlane.xlu0 %171
    %v173 = vmul.f32 %v172, 0.00390625
    %v174 = vmul.f32 %v168, %v168
    %v175 = vmul.f32 %v169, %v169
    %v176 = vadd.f32 %v174, %v175
    %177 = vadd.xlane.f32.xlu0 %v176
    %v178 = vpop.xlane.xlu0 %177
    %v179 = vmul.f32 %v178, 0.00390625
    %v180 = vmul.f32 %v173, %v173
    %v181 = vsub.f32 %v179, %v180
    %v182 = vmax.f32 %v181, 0.0
    %v183 = vsub.f32 %v168, %v173
    %v184 = vsub.f32 %v169, %v173
    %v185 = vadd.f32 %v182, 1e-05
    %v186 = vrsqrt.pop %v185
    %v187 = vmul.f32 %v186, %v185
    %v188 = vmul.f32 %v187, %v186
    %v189 = vmul.f32 0.5, %v188
    %v190 = vsub.f32 1.5, %v189
    %v191 = vmul.f32 %v186, %v190
    %vm192 = vweird.f32 %v185
    %vm193 = vweird.f32 %v186
    %vm194 = vmor %vm192, %vm193
    %v195 = vsel %vm194, %v186, %v191
    %v196 = vmul.f32 %v183, %v195
    %v197 = vmul.f32 %v184, %v195
    %198 = vrot.lane.b32.xlu0 %v196, 17
    %v199 = vpop.permute.xlu0 %198
    %200 = vrot.lane.b32.xlu0 %v197, 17
    %v201 = vpop.permute.xlu0 %200
    %vm202 = vcmp.lt.s32.totalorder %v16, 17
    %v203 = vsel %vm202, %v199, %v201
    %v204 = vsel %vm202, %v201, %v199
    %vm205 = vmand %vm58, %vm126
    %vm206 = vmand %vm59, %vm127
    %v207 = vsel %vm205, 1, 0
    %v208 = vsel %vm206, 1, 0
    %vm209 = vcmp.eq.s32.totalorder %v207, 1
    %vm210 = vcmp.eq.s32.totalorder %v208, 1
    %v211 = vsel %vm209, %v204, 0.0
    %v212 = vsel %vm210, %v203, 0.0
    %v213 = vld [vmem:[%s1] sm:$0xf]
    %215 = vset.pattern.permute.xlu0 0
    %216 = vperm.xlu0 %215, %v213
    %v217 = vpop.permute.xlu0 %216
    %v219 = vperm.slane %v211, 0
    %v220 = vperm.slane %v212, 0
    %v221 = vmul.f32 %v217, %v219
    %v222 = vmul.f32 %v217, %v220
    %v223 = vadd.f32 %v221, 0.0
    %v224 = vadd.f32 %v222, 0.0
    %225 = vset.pattern.permute.xlu0 1
    %226 = vperm.xlu0 %225, %v213
    %v227 = vpop.permute.xlu0 %226
    %v229 = vperm.slane %v211, 1
    %v230 = vperm.slane %v212, 1
    %v231 = vmul.f32 %v227, %v229
    %v232 = vmul.f32 %v227, %v230
    %v233 = vadd.f32 %v223, %v231
    %v234 = vadd.f32 %v224, %v232
    %235 = vset.pattern.permute.xlu0 2
    %236 = vperm.xlu0 %235, %v213
    %v237 = vpop.permute.xlu0 %236
    %v239 = vperm.slane %v211, 2
    %v240 = vperm.slane %v212, 2
    %v241 = vmul.f32 %v237, %v239
    %v242 = vmul.f32 %v237, %v240
    %v243 = vadd.f32 %v233, %v241
    %v244 = vadd.f32 %v234, %v242
    %245 = vset.pattern.permute.xlu0 3
    %246 = vperm.xlu0 %245, %v213
    %v247 = vpop.permute.xlu0 %246
    %v249 = vperm.slane %v211, 3
    %v250 = vperm.slane %v212, 3
    %v251 = vmul.f32 %v247, %v249
    %v252 = vmul.f32 %v247, %v250
    %v253 = vadd.f32 %v243, %v251
    %v254 = vadd.f32 %v244, %v252
    %v255 = vperm.slane %v211, 4
    %v256 = vperm.slane %v212, 4
    %v257 = vmul.f32 %v217, %v255
    %v258 = vmul.f32 %v217, %v256
    %v259 = vadd.f32 %v257, 0.0
    %v260 = vadd.f32 %v258, 0.0
    %v261 = vperm.slane %v211, 5
    %v262 = vperm.slane %v212, 5
    %v263 = vmul.f32 %v227, %v261
    %v264 = vmul.f32 %v227, %v262
    %v265 = vadd.f32 %v259, %v263
    %v266 = vadd.f32 %v260, %v264
    %v267 = vperm.slane %v211, 6
    %v268 = vperm.slane %v212, 6
    %v269 = vmul.f32 %v237, %v267
    %v270 = vmul.f32 %v237, %v268
    %v271 = vadd.f32 %v265, %v269
    %v272 = vadd.f32 %v266, %v270
    %v273 = vperm.slane %v211, 7
    %v274 = vperm.slane %v212, 7
    %v275 = vmul.f32 %v247, %v273
    %v276 = vmul.f32 %v247, %v274
    %v277 = vadd.f32 %v271, %v275
    %v278 = vadd.f32 %v272, %v276
    %279 = vrot.lane.b32.xlu0 %v196, 16
    %v280 = vpop.permute.xlu0 %279
    %281 = vrot.lane.b32.xlu0 %v197, 16
    %v282 = vpop.permute.xlu0 %281
    %v283 = vsel %vm123, %v280, %v282
    %v284 = vsel %vm123, %v282, %v280
    %v285 = vsel %vm130, %v284, 0.0
    %v286 = vsel %vm131, %v283, 0.0
    %v287 = vld [vmem:[%s1 + $0x4] sm:$0xf]
    %289 = vset.pattern.permute.xlu0 0
    %290 = vperm.xlu0 %289, %v287
    %v291 = vpop.permute.xlu0 %290
    %v293 = vperm.slane %v285, 0
    %v294 = vperm.slane %v286, 0
    %v295 = vmul.f32 %v291, %v293
    %v296 = vmul.f32 %v291, %v294
    %v297 = vadd.f32 %v253, %v295
    %v298 = vadd.f32 %v254, %v296
    %299 = vset.pattern.permute.xlu0 1
    %300 = vperm.xlu0 %299, %v287
    %v301 = vpop.permute.xlu0 %300
    %v303 = vperm.slane %v285, 1
    %v304 = vperm.slane %v286, 1
    %v305 = vmul.f32 %v301, %v303
    %v306 = vmul.f32 %v301, %v304
    %v307 = vadd.f32 %v297, %v305
    %v308 = vadd.f32 %v298, %v306
    %309 = vset.pattern.permute.xlu0 2
    %310 = vperm.xlu0 %309, %v287
    %v311 = vpop.permute.xlu0 %310
    %v313 = vperm.slane %v285, 2
    %v314 = vperm.slane %v286, 2
    %v315 = vmul.f32 %v311, %v313
    %v316 = vmul.f32 %v311, %v314
    %v317 = vadd.f32 %v307, %v315
    %v318 = vadd.f32 %v308, %v316
    %319 = vset.pattern.permute.xlu0 3
    %320 = vperm.xlu0 %319, %v287
    %v321 = vpop.permute.xlu0 %320
    %v323 = vperm.slane %v285, 3
    %v324 = vperm.slane %v286, 3
    %v325 = vmul.f32 %v321, %v323
    %v326 = vmul.f32 %v321, %v324
    %v327 = vadd.f32 %v317, %v325
    %v328 = vadd.f32 %v318, %v326
    %v329 = vperm.slane %v285, 4
    %v330 = vperm.slane %v286, 4
    %v331 = vmul.f32 %v291, %v329
    %v332 = vmul.f32 %v291, %v330
    %v333 = vadd.f32 %v277, %v331
    %v334 = vadd.f32 %v278, %v332
    %v335 = vperm.slane %v285, 5
    %v336 = vperm.slane %v286, 5
    %v337 = vmul.f32 %v301, %v335
    %v338 = vmul.f32 %v301, %v336
    %v339 = vadd.f32 %v333, %v337
    %v340 = vadd.f32 %v334, %v338
    %v341 = vperm.slane %v285, 6
    %v342 = vperm.slane %v286, 6
    %v343 = vmul.f32 %v311, %v341
    %v344 = vmul.f32 %v311, %v342
    %v345 = vadd.f32 %v339, %v343
    %v346 = vadd.f32 %v340, %v344
    %v347 = vperm.slane %v285, 7
    %v348 = vperm.slane %v286, 7
    %v349 = vmul.f32 %v321, %v347
    %v350 = vmul.f32 %v321, %v348
    %v351 = vadd.f32 %v345, %v349
    %v352 = vadd.f32 %v346, %v350
    %353 = vrot.lane.b32.xlu0 %v196, 15
    %v354 = vpop.permute.xlu0 %353
    %355 = vrot.lane.b32.xlu0 %v197, 15
    %v356 = vpop.permute.xlu0 %355
    %vm357 = vcmp.lt.s32.totalorder %v16, 15
    %v358 = vsel %vm357, %v354, %v356
    %v359 = vsel %vm357, %v356, %v354
    %vm360 = vmand %vm75, %vm126
    %vm361 = vmand %vm76, %vm127
    %v362 = vsel %vm360, 1, 0
    %v363 = vsel %vm361, 1, 0
    %vm364 = vcmp.eq.s32.totalorder %v362, 1
    %vm365 = vcmp.eq.s32.totalorder %v363, 1
    %v366 = vsel %vm364, %v359, 0.0
    %v367 = vsel %vm365, %v358, 0.0
    %v368 = vld [vmem:[%s1 + $0x8] sm:$0xf]
    %370 = vset.pattern.permute.xlu0 0
    %371 = vperm.xlu0 %370, %v368
    %v372 = vpop.permute.xlu0 %371
    %v374 = vperm.slane %v366, 0
    %v375 = vperm.slane %v367, 0
    %v376 = vmul.f32 %v372, %v374
    %v377 = vmul.f32 %v372, %v375
    %v378 = vadd.f32 %v327, %v376
    %v379 = vadd.f32 %v328, %v377
    %380 = vset.pattern.permute.xlu0 1
    %381 = vperm.xlu0 %380, %v368
    %v382 = vpop.permute.xlu0 %381
    %v384 = vperm.slane %v366, 1
    %v385 = vperm.slane %v367, 1
    %v386 = vmul.f32 %v382, %v384
    %v387 = vmul.f32 %v382, %v385
    %v388 = vadd.f32 %v378, %v386
    %v389 = vadd.f32 %v379, %v387
    %390 = vset.pattern.permute.xlu0 2
    %391 = vperm.xlu0 %390, %v368
    %v392 = vpop.permute.xlu0 %391
    %v394 = vperm.slane %v366, 2
    %v395 = vperm.slane %v367, 2
    %v396 = vmul.f32 %v392, %v394
    %v397 = vmul.f32 %v392, %v395
    %v398 = vadd.f32 %v388, %v396
    %v399 = vadd.f32 %v389, %v397
    %400 = vset.pattern.permute.xlu0 3
    %401 = vperm.xlu0 %400, %v368
    %v402 = vpop.permute.xlu0 %401
    %v404 = vperm.slane %v366, 3
    %v405 = vperm.slane %v367, 3
    %v406 = vmul.f32 %v402, %v404
    %v407 = vmul.f32 %v402, %v405
    %v408 = vadd.f32 %v398, %v406
    %v409 = vadd.f32 %v399, %v407
    %v410 = vperm.slane %v366, 4
    %v411 = vperm.slane %v367, 4
    %v412 = vmul.f32 %v372, %v410
    %v413 = vmul.f32 %v372, %v411
    %v414 = vadd.f32 %v351, %v412
    %v415 = vadd.f32 %v352, %v413
    %v416 = vperm.slane %v366, 5
    %v417 = vperm.slane %v367, 5
    %v418 = vmul.f32 %v382, %v416
    %v419 = vmul.f32 %v382, %v417
    %v420 = vadd.f32 %v414, %v418
    %v421 = vadd.f32 %v415, %v419
    %v422 = vperm.slane %v366, 6
    %v423 = vperm.slane %v367, 6
    %v424 = vmul.f32 %v392, %v422
    %v425 = vmul.f32 %v392, %v423
    %v426 = vadd.f32 %v420, %v424
    %v427 = vadd.f32 %v421, %v425
    %v428 = vperm.slane %v366, 7
    %v429 = vperm.slane %v367, 7
    %v430 = vmul.f32 %v402, %v428
    %v431 = vmul.f32 %v402, %v429
    %v432 = vadd.f32 %v426, %v430
    %v433 = vadd.f32 %v427, %v431
    %434 = vrot.lane.b32.xlu0 %v196, 1
    %v435 = vpop.permute.xlu0 %434
    %436 = vrot.lane.b32.xlu0 %v197, 1
    %v437 = vpop.permute.xlu0 %436
    %v438 = vsel %vm55, %v435, %v437
    %v439 = vsel %vm55, %v437, %v435
    %v440 = vsel %vm62, %v439, 0.0
    %v441 = vsel %vm63, %v438, 0.0
    %v442 = vld [vmem:[%s1 + $0xc] sm:$0xf]
    %444 = vset.pattern.permute.xlu0 0
    %445 = vperm.xlu0 %444, %v442
    %v446 = vpop.permute.xlu0 %445
    %v448 = vperm.slane %v440, 0
    %v449 = vperm.slane %v441, 0
    %v450 = vmul.f32 %v446, %v448
    %v451 = vmul.f32 %v446, %v449
    %v452 = vadd.f32 %v408, %v450
    %v453 = vadd.f32 %v409, %v451
    %454 = vset.pattern.permute.xlu0 1
    %455 = vperm.xlu0 %454, %v442
    %v456 = vpop.permute.xlu0 %455
    %v458 = vperm.slane %v440, 1
    %v459 = vperm.slane %v441, 1
    %v460 = vmul.f32 %v456, %v458
    %v461 = vmul.f32 %v456, %v459
    %v462 = vadd.f32 %v452, %v460
    %v463 = vadd.f32 %v453, %v461
    %464 = vset.pattern.permute.xlu0 2
    %465 = vperm.xlu0 %464, %v442
    %v466 = vpop.permute.xlu0 %465
    %v468 = vperm.slane %v440, 2
    %v469 = vperm.slane %v441, 2
    %v470 = vmul.f32 %v466, %v468
    %v471 = vmul.f32 %v466, %v469
    %v472 = vadd.f32 %v462, %v470
    %v473 = vadd.f32 %v463, %v471
    %474 = vset.pattern.permute.xlu0 3
    %475 = vperm.xlu0 %474, %v442
    %v476 = vpop.permute.xlu0 %475
    %v478 = vperm.slane %v440, 3
    %v479 = vperm.slane %v441, 3
    %v480 = vmul.f32 %v476, %v478
    %v481 = vmul.f32 %v476, %v479
    %v482 = vadd.f32 %v472, %v480
    %v483 = vadd.f32 %v473, %v481
    %v484 = vperm.slane %v440, 4
    %v485 = vperm.slane %v441, 4
    %v486 = vmul.f32 %v446, %v484
    %v487 = vmul.f32 %v446, %v485
    %v488 = vadd.f32 %v432, %v486
    %v489 = vadd.f32 %v433, %v487
    %v490 = vperm.slane %v440, 5
    %v491 = vperm.slane %v441, 5
    %v492 = vmul.f32 %v456, %v490
    %v493 = vmul.f32 %v456, %v491
    %v494 = vadd.f32 %v488, %v492
    %v495 = vadd.f32 %v489, %v493
    %v496 = vperm.slane %v440, 6
    %v497 = vperm.slane %v441, 6
    %v498 = vmul.f32 %v466, %v496
    %v499 = vmul.f32 %v466, %v497
    %v500 = vadd.f32 %v494, %v498
    %v501 = vadd.f32 %v495, %v499
    %v502 = vperm.slane %v440, 7
    %v503 = vperm.slane %v441, 7
    %v504 = vmul.f32 %v476, %v502
    %v505 = vmul.f32 %v476, %v503
    %v506 = vadd.f32 %v500, %v504
    %v507 = vadd.f32 %v501, %v505
    %v508 = vld [vmem:[%s1 + $0x10] sm:$0xf]
    %510 = vset.pattern.permute.xlu0 0
    %511 = vperm.xlu0 %510, %v508
    %v512 = vpop.permute.xlu0 %511
    %v514 = vperm.slane %v196, 0
    %v515 = vperm.slane %v197, 0
    %v516 = vmul.f32 %v512, %v514
    %v517 = vmul.f32 %v512, %v515
    %v518 = vadd.f32 %v482, %v516
    %v519 = vadd.f32 %v483, %v517
    %520 = vset.pattern.permute.xlu0 1
    %521 = vperm.xlu0 %520, %v508
    %v522 = vpop.permute.xlu0 %521
    %v524 = vperm.slane %v196, 1
    %v525 = vperm.slane %v197, 1
    %v526 = vmul.f32 %v522, %v524
    %v527 = vmul.f32 %v522, %v525
    %v528 = vadd.f32 %v518, %v526
    %v529 = vadd.f32 %v519, %v527
    %530 = vset.pattern.permute.xlu0 2
    %531 = vperm.xlu0 %530, %v508
    %v532 = vpop.permute.xlu0 %531
    %v534 = vperm.slane %v196, 2
    %v535 = vperm.slane %v197, 2
    %v536 = vmul.f32 %v532, %v534
    %v537 = vmul.f32 %v532, %v535
    %v538 = vadd.f32 %v528, %v536
    %v539 = vadd.f32 %v529, %v537
    %540 = vset.pattern.permute.xlu0 3
    %541 = vperm.xlu0 %540, %v508
    %v542 = vpop.permute.xlu0 %541
    %v544 = vperm.slane %v196, 3
    %v545 = vperm.slane %v197, 3
    %v546 = vmul.f32 %v542, %v544
    %v547 = vmul.f32 %v542, %v545
    %v548 = vadd.f32 %v538, %v546
    %v549 = vadd.f32 %v539, %v547
    %v550 = vperm.slane %v196, 4
    %v551 = vperm.slane %v197, 4
    %v552 = vmul.f32 %v512, %v550
    %v553 = vmul.f32 %v512, %v551
    %v554 = vadd.f32 %v506, %v552
    %v555 = vadd.f32 %v507, %v553
    %v556 = vperm.slane %v196, 5
    %v557 = vperm.slane %v197, 5
    %v558 = vmul.f32 %v522, %v556
    %v559 = vmul.f32 %v522, %v557
    %v560 = vadd.f32 %v554, %v558
    %v561 = vadd.f32 %v555, %v559
    %v562 = vperm.slane %v196, 6
    %v563 = vperm.slane %v197, 6
    %v564 = vmul.f32 %v532, %v562
    %v565 = vmul.f32 %v532, %v563
    %v566 = vadd.f32 %v560, %v564
    %v567 = vadd.f32 %v561, %v565
    %v568 = vperm.slane %v196, 7
    %v569 = vperm.slane %v197, 7
    %v570 = vmul.f32 %v542, %v568
    %v571 = vmul.f32 %v542, %v569
    %v572 = vadd.f32 %v566, %v570
    %v573 = vadd.f32 %v567, %v571
    %574 = vrot.lane.b32.xlu0 %v196, 127
    %v575 = vpop.permute.xlu0 %574
    %576 = vrot.lane.b32.xlu0 %v197, 127
    %v577 = vpop.permute.xlu0 %576
    %v578 = vsel %vm72, %v575, %v577
    %v579 = vsel %vm72, %v577, %v575
    %v580 = vsel %vm79, %v578, 0.0
    %v581 = vsel %vm80, %v579, 0.0
    %v582 = vld [vmem:[%s1 + $0x14] sm:$0xf]
    %584 = vset.pattern.permute.xlu0 0
    %585 = vperm.xlu0 %584, %v582
    %v586 = vpop.permute.xlu0 %585
    %v588 = vperm.slane %v580, 0
    %v589 = vperm.slane %v581, 0
    %v590 = vmul.f32 %v586, %v588
    %v591 = vmul.f32 %v586, %v589
    %v592 = vadd.f32 %v548, %v590
    %v593 = vadd.f32 %v549, %v591
    %594 = vset.pattern.permute.xlu0 1
    %595 = vperm.xlu0 %594, %v582
    %v596 = vpop.permute.xlu0 %595
    %v598 = vperm.slane %v580, 1
    %v599 = vperm.slane %v581, 1
    %v600 = vmul.f32 %v596, %v598
    %v601 = vmul.f32 %v596, %v599
    %v602 = vadd.f32 %v592, %v600
    %v603 = vadd.f32 %v593, %v601
    %604 = vset.pattern.permute.xlu0 2
    %605 = vperm.xlu0 %604, %v582
    %v606 = vpop.permute.xlu0 %605
    %v608 = vperm.slane %v580, 2
    %v609 = vperm.slane %v581, 2
    %v610 = vmul.f32 %v606, %v608
    %v611 = vmul.f32 %v606, %v609
    %v612 = vadd.f32 %v602, %v610
    %v613 = vadd.f32 %v603, %v611
    %614 = vset.pattern.permute.xlu0 3
    %615 = vperm.xlu0 %614, %v582
    %v616 = vpop.permute.xlu0 %615
    %v618 = vperm.slane %v580, 3
    %v619 = vperm.slane %v581, 3
    %v620 = vmul.f32 %v616, %v618
    %v621 = vmul.f32 %v616, %v619
    %v622 = vadd.f32 %v612, %v620
    %v623 = vadd.f32 %v613, %v621
    %v624 = vperm.slane %v580, 4
    %v625 = vperm.slane %v581, 4
    %v626 = vmul.f32 %v586, %v624
    %v627 = vmul.f32 %v586, %v625
    %v628 = vadd.f32 %v572, %v626
    %v629 = vadd.f32 %v573, %v627
    %v630 = vperm.slane %v580, 5
    %v631 = vperm.slane %v581, 5
    %v632 = vmul.f32 %v596, %v630
    %v633 = vmul.f32 %v596, %v631
    %v634 = vadd.f32 %v628, %v632
    %v635 = vadd.f32 %v629, %v633
    %v636 = vperm.slane %v580, 6
    %v637 = vperm.slane %v581, 6
    %v638 = vmul.f32 %v606, %v636
    %v639 = vmul.f32 %v606, %v637
    %v640 = vadd.f32 %v634, %v638
    %v641 = vadd.f32 %v635, %v639
    %v642 = vperm.slane %v580, 7
    %v643 = vperm.slane %v581, 7
    %v644 = vmul.f32 %v616, %v642
    %v645 = vmul.f32 %v616, %v643
    %v646 = vadd.f32 %v640, %v644
    %v647 = vadd.f32 %v641, %v645
    %648 = vrot.lane.b32.xlu0 %v196, 113
    %v649 = vpop.permute.xlu0 %648
    %650 = vrot.lane.b32.xlu0 %v197, 113
    %v651 = vpop.permute.xlu0 %650
    %vm652 = vcmp.lt.s32.totalorder %v16, 113
    %v653 = vsel %vm652, %v649, %v651
    %v654 = vsel %vm652, %v651, %v649
    %vm655 = vmand %vm58, %vm143
    %vm656 = vmand %vm59, %vm144
    %v657 = vsel %vm655, 1, 0
    %v658 = vsel %vm656, 1, 0
    %vm659 = vcmp.eq.s32.totalorder %v657, 1
    %vm660 = vcmp.eq.s32.totalorder %v658, 1
    %v661 = vsel %vm659, %v653, 0.0
    %v662 = vsel %vm660, %v654, 0.0
    %v663 = vld [vmem:[%s1 + $0x18] sm:$0xf]
    %665 = vset.pattern.permute.xlu0 0
    %666 = vperm.xlu0 %665, %v663
    %v667 = vpop.permute.xlu0 %666
    %v669 = vperm.slane %v661, 0
    %v670 = vperm.slane %v662, 0
    %v671 = vmul.f32 %v667, %v669
    %v672 = vmul.f32 %v667, %v670
    %v673 = vadd.f32 %v622, %v671
    %v674 = vadd.f32 %v623, %v672
    %675 = vset.pattern.permute.xlu0 1
    %676 = vperm.xlu0 %675, %v663
    %v677 = vpop.permute.xlu0 %676
    %v679 = vperm.slane %v661, 1
    %v680 = vperm.slane %v662, 1
    %v681 = vmul.f32 %v677, %v679
    %v682 = vmul.f32 %v677, %v680
    %v683 = vadd.f32 %v673, %v681
    %v684 = vadd.f32 %v674, %v682
    %685 = vset.pattern.permute.xlu0 2
    %686 = vperm.xlu0 %685, %v663
    %v687 = vpop.permute.xlu0 %686
    %v689 = vperm.slane %v661, 2
    %v690 = vperm.slane %v662, 2
    %v691 = vmul.f32 %v687, %v689
    %v692 = vmul.f32 %v687, %v690
    %v693 = vadd.f32 %v683, %v691
    %v694 = vadd.f32 %v684, %v692
    %695 = vset.pattern.permute.xlu0 3
    %696 = vperm.xlu0 %695, %v663
    %v697 = vpop.permute.xlu0 %696
    %v699 = vperm.slane %v661, 3
    %v700 = vperm.slane %v662, 3
    %v701 = vmul.f32 %v697, %v699
    %v702 = vmul.f32 %v697, %v700
    %v703 = vadd.f32 %v693, %v701
    %v704 = vadd.f32 %v694, %v702
    %v705 = vperm.slane %v661, 4
    %v706 = vperm.slane %v662, 4
    %v707 = vmul.f32 %v667, %v705
    %v708 = vmul.f32 %v667, %v706
    %v709 = vadd.f32 %v646, %v707
    %v710 = vadd.f32 %v647, %v708
    %v711 = vperm.slane %v661, 5
    %v712 = vperm.slane %v662, 5
    %v713 = vmul.f32 %v677, %v711
    %v714 = vmul.f32 %v677, %v712
    %v715 = vadd.f32 %v709, %v713
    %v716 = vadd.f32 %v710, %v714
    %v717 = vperm.slane %v661, 6
    %v718 = vperm.slane %v662, 6
    %v719 = vmul.f32 %v687, %v717
    %v720 = vmul.f32 %v687, %v718
    %v721 = vadd.f32 %v715, %v719
    %v722 = vadd.f32 %v716, %v720
    %v723 = vperm.slane %v661, 7
    %v724 = vperm.slane %v662, 7
    %v725 = vmul.f32 %v697, %v723
    %v726 = vmul.f32 %v697, %v724
    %v727 = vadd.f32 %v721, %v725
    %v728 = vadd.f32 %v722, %v726
    %729 = vrot.lane.b32.xlu0 %v196, 112
    %v730 = vpop.permute.xlu0 %729
    %731 = vrot.lane.b32.xlu0 %v197, 112
    %v732 = vpop.permute.xlu0 %731
    %v733 = vsel %vm140, %v730, %v732
    %v734 = vsel %vm140, %v732, %v730
    %v735 = vsel %vm147, %v733, 0.0
    %v736 = vsel %vm148, %v734, 0.0
    %v737 = vld [vmem:[%s1 + $0x1c] sm:$0xf]
    %739 = vset.pattern.permute.xlu0 0
    %740 = vperm.xlu0 %739, %v737
    %v741 = vpop.permute.xlu0 %740
    %v743 = vperm.slane %v735, 0
    %v744 = vperm.slane %v736, 0
    %v745 = vmul.f32 %v741, %v743
    %v746 = vmul.f32 %v741, %v744
    %v747 = vadd.f32 %v703, %v745
    %v748 = vadd.f32 %v704, %v746
    %749 = vset.pattern.permute.xlu0 1
    %750 = vperm.xlu0 %749, %v737
    %v751 = vpop.permute.xlu0 %750
    %v753 = vperm.slane %v735, 1
    %v754 = vperm.slane %v736, 1
    %v755 = vmul.f32 %v751, %v753
    %v756 = vmul.f32 %v751, %v754
    %v757 = vadd.f32 %v747, %v755
    %v758 = vadd.f32 %v748, %v756
    %759 = vset.pattern.permute.xlu0 2
    %760 = vperm.xlu0 %759, %v737
    %v761 = vpop.permute.xlu0 %760
    %v763 = vperm.slane %v735, 2
    %v764 = vperm.slane %v736, 2
    %v765 = vmul.f32 %v761, %v763
    %v766 = vmul.f32 %v761, %v764
    %v767 = vadd.f32 %v757, %v765
    %v768 = vadd.f32 %v758, %v766
    %769 = vset.pattern.permute.xlu0 3
    %770 = vperm.xlu0 %769, %v737
    %v771 = vpop.permute.xlu0 %770
    %v773 = vperm.slane %v735, 3
    %v774 = vperm.slane %v736, 3
    %v775 = vmul.f32 %v771, %v773
    %v776 = vmul.f32 %v771, %v774
    %v777 = vadd.f32 %v767, %v775
    %v778 = vadd.f32 %v768, %v776
    %v779 = vperm.slane %v735, 4
    %v780 = vperm.slane %v736, 4
    %v781 = vmul.f32 %v741, %v779
    %v782 = vmul.f32 %v741, %v780
    %v783 = vadd.f32 %v727, %v781
    %v784 = vadd.f32 %v728, %v782
    %v785 = vperm.slane %v735, 5
    %v786 = vperm.slane %v736, 5
    %v787 = vmul.f32 %v751, %v785
    %v788 = vmul.f32 %v751, %v786
    %v789 = vadd.f32 %v783, %v787
    %v790 = vadd.f32 %v784, %v788
    %v791 = vperm.slane %v735, 6
    %v792 = vperm.slane %v736, 6
    %v793 = vmul.f32 %v761, %v791
    %v794 = vmul.f32 %v761, %v792
    %v795 = vadd.f32 %v789, %v793
    %v796 = vadd.f32 %v790, %v794
    %v797 = vperm.slane %v735, 7
    %v798 = vperm.slane %v736, 7
    %v799 = vmul.f32 %v771, %v797
    %v800 = vmul.f32 %v771, %v798
    %v801 = vadd.f32 %v795, %v799
    %v802 = vadd.f32 %v796, %v800
    %803 = vrot.lane.b32.xlu0 %v196, 111
    %v804 = vpop.permute.xlu0 %803
    %805 = vrot.lane.b32.xlu0 %v197, 111
    %v806 = vpop.permute.xlu0 %805
    %vm807 = vcmp.lt.s32.totalorder %v16, 111
    %v808 = vsel %vm807, %v804, %v806
    %v809 = vsel %vm807, %v806, %v804
    %vm810 = vmand %vm75, %vm143
    %vm811 = vmand %vm76, %vm144
    %v812 = vsel %vm810, 1, 0
    %v813 = vsel %vm811, 1, 0
    %vm814 = vcmp.eq.s32.totalorder %v812, 1
    %vm815 = vcmp.eq.s32.totalorder %v813, 1
    %v816 = vsel %vm814, %v808, 0.0
    %v817 = vsel %vm815, %v809, 0.0
    %v818 = vld [vmem:[%s1 + $0x20] sm:$0xf]
    %820 = vset.pattern.permute.xlu0 0
    %821 = vperm.xlu0 %820, %v818
    %v822 = vpop.permute.xlu0 %821
    %v824 = vperm.slane %v816, 0
    %v825 = vperm.slane %v817, 0
    %v826 = vmul.f32 %v822, %v824
    %v827 = vmul.f32 %v822, %v825
    %v828 = vadd.f32 %v777, %v826
    %v829 = vadd.f32 %v778, %v827
    %830 = vset.pattern.permute.xlu0 1
    %831 = vperm.xlu0 %830, %v818
    %v832 = vpop.permute.xlu0 %831
    %v834 = vperm.slane %v816, 1
    %v835 = vperm.slane %v817, 1
    %v836 = vmul.f32 %v832, %v834
    %v837 = vmul.f32 %v832, %v835
    %v838 = vadd.f32 %v828, %v836
    %v839 = vadd.f32 %v829, %v837
    %840 = vset.pattern.permute.xlu0 2
    %841 = vperm.xlu0 %840, %v818
    %v842 = vpop.permute.xlu0 %841
    %v844 = vperm.slane %v816, 2
    %v845 = vperm.slane %v817, 2
    %v846 = vmul.f32 %v842, %v844
    %v847 = vmul.f32 %v842, %v845
    %v848 = vadd.f32 %v838, %v846
    %v849 = vadd.f32 %v839, %v847
    %850 = vset.pattern.permute.xlu0 3
    %851 = vperm.xlu0 %850, %v818
    %v852 = vpop.permute.xlu0 %851
    %v854 = vperm.slane %v816, 3
    %v855 = vperm.slane %v817, 3
    %v856 = vmul.f32 %v852, %v854
    %v857 = vmul.f32 %v852, %v855
    %v858 = vadd.f32 %v848, %v856
    %v859 = vadd.f32 %v849, %v857
    %v860 = vperm.slane %v816, 4
    %v861 = vperm.slane %v817, 4
    %v862 = vmul.f32 %v822, %v860
    %v863 = vmul.f32 %v822, %v861
    %v864 = vadd.f32 %v801, %v862
    %v865 = vadd.f32 %v802, %v863
    %v866 = vperm.slane %v816, 5
    %v867 = vperm.slane %v817, 5
    %v868 = vmul.f32 %v832, %v866
    %v869 = vmul.f32 %v832, %v867
    %v870 = vadd.f32 %v864, %v868
    %v871 = vadd.f32 %v865, %v869
    %v872 = vperm.slane %v816, 6
    %v873 = vperm.slane %v817, 6
    %v874 = vmul.f32 %v842, %v872
    %v875 = vmul.f32 %v842, %v873
    %v876 = vadd.f32 %v870, %v874
    %v877 = vadd.f32 %v871, %v875
    %v878 = vperm.slane %v816, 7
    %v879 = vperm.slane %v817, 7
    %v880 = vmul.f32 %v852, %v878
    %v881 = vmul.f32 %v852, %v879
    %v882 = vadd.f32 %v876, %v880
    %v883 = vadd.f32 %v877, %v881
    %v884 = vld [vmem:[%s2] sm:$0xf]
    %886 = vset.pattern.permute.xlu0 0
    %887 = vperm.xlu0 %886, %v884
    %v888 = vpop.permute.xlu0 %887
    %v890 = vadd.f32 %v858, %v888
    %v891 = vadd.f32 %v859, %v888
    %v892 = vadd.f32 %v882, %v888
    %v893 = vadd.f32 %v883, %v888
    %v896 = vrot.slane %v892, 4
    %v897 = vrot.slane %v893, 4
    %vm900 = vcmask 1043456
    %v901 = vsel %vm900, %v890, %v896
    %v902 = vsel %vm900, %v891, %v897
    %v903 = vadd.f32 %v901, %v32
    %v904 = vadd.f32 %v902, %v33
    %905 = vrot.lane.b32.xlu0 %v901, 2
    %v906 = vpop.permute.xlu0 %905
    %907 = vrot.lane.b32.xlu0 %v902, 2
    %v908 = vpop.permute.xlu0 %907
    %v909 = vsel %vm38, %v906, %v908
    %v910 = vsel %vm38, %v908, %v906
    %v911 = vsel %vm45, %v910, -3.4028235e+38
    %v912 = vsel %vm46, %v909, -3.4028235e+38
    %v913 = vmax.f32 %v901, %v911
    %v914 = vmax.f32 %v902, %v912
    %915 = vrot.lane.b32.xlu0 %v901, 1
    %v916 = vpop.permute.xlu0 %915
    %917 = vrot.lane.b32.xlu0 %v902, 1
    %v918 = vpop.permute.xlu0 %917
    %v919 = vsel %vm55, %v916, %v918
    %v920 = vsel %vm55, %v918, %v916
    %v921 = vsel %vm62, %v920, -3.4028235e+38
    %v922 = vsel %vm63, %v919, -3.4028235e+38
    %v923 = vmax.f32 %v913, %v921
    %v924 = vmax.f32 %v914, %v922
    %925 = vrot.lane.b32.xlu0 %v901, 127
    %v926 = vpop.permute.xlu0 %925
    %927 = vrot.lane.b32.xlu0 %v902, 127
    %v928 = vpop.permute.xlu0 %927
    %v929 = vsel %vm72, %v926, %v928
    %v930 = vsel %vm72, %v928, %v926
    %v931 = vsel %vm79, %v929, -3.4028235e+38
    %v932 = vsel %vm80, %v930, -3.4028235e+38
    %v933 = vmax.f32 %v923, %v931
    %v934 = vmax.f32 %v924, %v932
    %935 = vrot.lane.b32.xlu0 %v901, 126
    %v936 = vpop.permute.xlu0 %935
    %937 = vrot.lane.b32.xlu0 %v902, 126
    %v938 = vpop.permute.xlu0 %937
    %v939 = vsel %vm89, %v936, %v938
    %v940 = vsel %vm89, %v938, %v936
    %v941 = vsel %vm96, %v939, -3.4028235e+38
    %v942 = vsel %vm97, %v940, -3.4028235e+38
    %v943 = vmax.f32 %v933, %v941
    %v944 = vmax.f32 %v934, %v942
    %945 = vrot.lane.b32.xlu0 %v943, 32
    %v946 = vpop.permute.xlu0 %945
    %947 = vrot.lane.b32.xlu0 %v944, 32
    %v948 = vpop.permute.xlu0 %947
    %v949 = vsel %vm106, %v946, %v948
    %v950 = vsel %vm106, %v948, %v946
    %v951 = vsel %vm113, %v950, -3.4028235e+38
    %v952 = vsel %vm114, %v949, -3.4028235e+38
    %v953 = vmax.f32 %v943, %v951
    %v954 = vmax.f32 %v944, %v952
    %955 = vrot.lane.b32.xlu0 %v943, 16
    %v956 = vpop.permute.xlu0 %955
    %957 = vrot.lane.b32.xlu0 %v944, 16
    %v958 = vpop.permute.xlu0 %957
    %v959 = vsel %vm123, %v956, %v958
    %v960 = vsel %vm123, %v958, %v956
    %v961 = vsel %vm130, %v960, -3.4028235e+38
    %v962 = vsel %vm131, %v959, -3.4028235e+38
    %v963 = vmax.f32 %v953, %v961
    %v964 = vmax.f32 %v954, %v962
    %965 = vrot.lane.b32.xlu0 %v943, 112
    %v966 = vpop.permute.xlu0 %965
    %967 = vrot.lane.b32.xlu0 %v944, 112
    %v968 = vpop.permute.xlu0 %967
    %v969 = vsel %vm140, %v966, %v968
    %v970 = vsel %vm140, %v968, %v966
    %v971 = vsel %vm147, %v969, -3.4028235e+38
    %v972 = vsel %vm148, %v970, -3.4028235e+38
    %v973 = vmax.f32 %v963, %v971
    %v974 = vmax.f32 %v964, %v972
    %975 = vrot.lane.b32.xlu0 %v943, 96
    %v976 = vpop.permute.xlu0 %975
    %977 = vrot.lane.b32.xlu0 %v944, 96
    %v978 = vpop.permute.xlu0 %977
    %v979 = vsel %vm157, %v976, %v978
    %v980 = vsel %vm157, %v978, %v976
    %v981 = vsel %vm164, %v979, -3.4028235e+38
    %v982 = vsel %vm165, %v980, -3.4028235e+38
    %v983 = vmax.f32 %v973, %v981
    %v984 = vmax.f32 %v974, %v982
    %v985 = vadd.f32 %v983, %v984
    %986 = vadd.xlane.f32.xlu0 %v985
    %v987 = vpop.xlane.xlu0 %986
    %v988 = vmul.f32 %v987, 0.00390625
    %v989 = vmul.f32 %v983, %v983
    %v990 = vmul.f32 %v984, %v984
    %v991 = vadd.f32 %v989, %v990
    %992 = vadd.xlane.f32.xlu0 %v991
    %v993 = vpop.xlane.xlu0 %992
    %v994 = vmul.f32 %v993, 0.00390625
    %v995 = vmul.f32 %v988, %v988
    %v996 = vsub.f32 %v994, %v995
    %v997 = vmax.f32 %v996, 0.0
    %v998 = vsub.f32 %v983, %v988
    %v999 = vsub.f32 %v984, %v988
    %v1000 = vadd.f32 %v997, 1e-05
    %v1001 = vrsqrt.pop %v1000
    %v1002 = vmul.f32 %v1001, %v1000
    %v1003 = vmul.f32 %v1002, %v1001
    %v1004 = vmul.f32 0.5, %v1003
    %v1005 = vsub.f32 1.5, %v1004
    %v1006 = vmul.f32 %v1001, %v1005
    %vm1007 = vweird.f32 %v1000
    %vm1008 = vweird.f32 %v1001
    %vm1009 = vmor %vm1007, %vm1008
    %v1010 = vsel %vm1009, %v1001, %v1006
    %v1011 = vmul.f32 %v998, %v1010
    %v1012 = vmul.f32 %v999, %v1010
    %1013 = vrot.lane.b32.xlu0 %v1011, 17
    %v1014 = vpop.permute.xlu0 %1013
    %1015 = vrot.lane.b32.xlu0 %v1012, 17
    %v1016 = vpop.permute.xlu0 %1015
    %v1017 = vsel %vm202, %v1014, %v1016
    %v1018 = vsel %vm202, %v1016, %v1014
    %v1019 = vsel %vm209, %v1018, 0.0
    %v1020 = vsel %vm210, %v1017, 0.0
    %v1021 = vld [vmem:[%s1 + $0x24] sm:$0xf]
    %1023 = vset.pattern.permute.xlu0 0
    %1024 = vperm.xlu0 %1023, %v1021
    %v1025 = vpop.permute.xlu0 %1024
    %v1027 = vperm.slane %v1019, 0
    %v1028 = vperm.slane %v1020, 0
    %v1029 = vmul.f32 %v1025, %v1027
    %v1030 = vmul.f32 %v1025, %v1028
    %v1031 = vadd.f32 %v1029, 0.0
    %v1032 = vadd.f32 %v1030, 0.0
    %1033 = vset.pattern.permute.xlu0 1
    %1034 = vperm.xlu0 %1033, %v1021
    %v1035 = vpop.permute.xlu0 %1034
    %v1037 = vperm.slane %v1019, 1
    %v1038 = vperm.slane %v1020, 1
    %v1039 = vmul.f32 %v1035, %v1037
    %v1040 = vmul.f32 %v1035, %v1038
    %v1041 = vadd.f32 %v1031, %v1039
    %v1042 = vadd.f32 %v1032, %v1040
    %1043 = vset.pattern.permute.xlu0 2
    %1044 = vperm.xlu0 %1043, %v1021
    %v1045 = vpop.permute.xlu0 %1044
    %v1047 = vperm.slane %v1019, 2
    %v1048 = vperm.slane %v1020, 2
    %v1049 = vmul.f32 %v1045, %v1047
    %v1050 = vmul.f32 %v1045, %v1048
    %v1051 = vadd.f32 %v1041, %v1049
    %v1052 = vadd.f32 %v1042, %v1050
    %1053 = vset.pattern.permute.xlu0 3
    %1054 = vperm.xlu0 %1053, %v1021
    %v1055 = vpop.permute.xlu0 %1054
    %v1057 = vperm.slane %v1019, 3
    %v1058 = vperm.slane %v1020, 3
    %v1059 = vmul.f32 %v1055, %v1057
    %v1060 = vmul.f32 %v1055, %v1058
    %v1061 = vadd.f32 %v1051, %v1059
    %v1062 = vadd.f32 %v1052, %v1060
    %v1063 = vperm.slane %v1019, 4
    %v1064 = vperm.slane %v1020, 4
    %v1065 = vmul.f32 %v1025, %v1063
    %v1066 = vmul.f32 %v1025, %v1064
    %v1067 = vadd.f32 %v1065, 0.0
    %v1068 = vadd.f32 %v1066, 0.0
    %v1069 = vperm.slane %v1019, 5
    %v1070 = vperm.slane %v1020, 5
    %v1071 = vmul.f32 %v1035, %v1069
    %v1072 = vmul.f32 %v1035, %v1070
    %v1073 = vadd.f32 %v1067, %v1071
    %v1074 = vadd.f32 %v1068, %v1072
    %v1075 = vperm.slane %v1019, 6
    %v1076 = vperm.slane %v1020, 6
    %v1077 = vmul.f32 %v1045, %v1075
    %v1078 = vmul.f32 %v1045, %v1076
    %v1079 = vadd.f32 %v1073, %v1077
    %v1080 = vadd.f32 %v1074, %v1078
    %v1081 = vperm.slane %v1019, 7
    %v1082 = vperm.slane %v1020, 7
    %v1083 = vmul.f32 %v1055, %v1081
    %v1084 = vmul.f32 %v1055, %v1082
    %v1085 = vadd.f32 %v1079, %v1083
    %v1086 = vadd.f32 %v1080, %v1084
    %1087 = vrot.lane.b32.xlu0 %v1011, 16
    %v1088 = vpop.permute.xlu0 %1087
    %1089 = vrot.lane.b32.xlu0 %v1012, 16
    %v1090 = vpop.permute.xlu0 %1089
    %v1091 = vsel %vm123, %v1088, %v1090
    %v1092 = vsel %vm123, %v1090, %v1088
    %v1093 = vsel %vm130, %v1092, 0.0
    %v1094 = vsel %vm131, %v1091, 0.0
    %v1095 = vld [vmem:[%s1 + $0x28] sm:$0xf]
    %1097 = vset.pattern.permute.xlu0 0
    %1098 = vperm.xlu0 %1097, %v1095
    %v1099 = vpop.permute.xlu0 %1098
    %v1101 = vperm.slane %v1093, 0
    %v1102 = vperm.slane %v1094, 0
    %v1103 = vmul.f32 %v1099, %v1101
    %v1104 = vmul.f32 %v1099, %v1102
    %v1105 = vadd.f32 %v1061, %v1103
    %v1106 = vadd.f32 %v1062, %v1104
    %1107 = vset.pattern.permute.xlu0 1
    %1108 = vperm.xlu0 %1107, %v1095
    %v1109 = vpop.permute.xlu0 %1108
    %v1111 = vperm.slane %v1093, 1
    %v1112 = vperm.slane %v1094, 1
    %v1113 = vmul.f32 %v1109, %v1111
    %v1114 = vmul.f32 %v1109, %v1112
    %v1115 = vadd.f32 %v1105, %v1113
    %v1116 = vadd.f32 %v1106, %v1114
    %1117 = vset.pattern.permute.xlu0 2
    %1118 = vperm.xlu0 %1117, %v1095
    %v1119 = vpop.permute.xlu0 %1118
    %v1121 = vperm.slane %v1093, 2
    %v1122 = vperm.slane %v1094, 2
    %v1123 = vmul.f32 %v1119, %v1121
    %v1124 = vmul.f32 %v1119, %v1122
    %v1125 = vadd.f32 %v1115, %v1123
    %v1126 = vadd.f32 %v1116, %v1124
    %1127 = vset.pattern.permute.xlu0 3
    %1128 = vperm.xlu0 %1127, %v1095
    %v1129 = vpop.permute.xlu0 %1128
    %v1131 = vperm.slane %v1093, 3
    %v1132 = vperm.slane %v1094, 3
    %v1133 = vmul.f32 %v1129, %v1131
    %v1134 = vmul.f32 %v1129, %v1132
    %v1135 = vadd.f32 %v1125, %v1133
    %v1136 = vadd.f32 %v1126, %v1134
    %v1137 = vperm.slane %v1093, 4
    %v1138 = vperm.slane %v1094, 4
    %v1139 = vmul.f32 %v1099, %v1137
    %v1140 = vmul.f32 %v1099, %v1138
    %v1141 = vadd.f32 %v1085, %v1139
    %v1142 = vadd.f32 %v1086, %v1140
    %v1143 = vperm.slane %v1093, 5
    %v1144 = vperm.slane %v1094, 5
    %v1145 = vmul.f32 %v1109, %v1143
    %v1146 = vmul.f32 %v1109, %v1144
    %v1147 = vadd.f32 %v1141, %v1145
    %v1148 = vadd.f32 %v1142, %v1146
    %v1149 = vperm.slane %v1093, 6
    %v1150 = vperm.slane %v1094, 6
    %v1151 = vmul.f32 %v1119, %v1149
    %v1152 = vmul.f32 %v1119, %v1150
    %v1153 = vadd.f32 %v1147, %v1151
    %v1154 = vadd.f32 %v1148, %v1152
    %v1155 = vperm.slane %v1093, 7
    %v1156 = vperm.slane %v1094, 7
    %v1157 = vmul.f32 %v1129, %v1155
    %v1158 = vmul.f32 %v1129, %v1156
    %v1159 = vadd.f32 %v1153, %v1157
    %v1160 = vadd.f32 %v1154, %v1158
    %1161 = vrot.lane.b32.xlu0 %v1011, 15
    %v1162 = vpop.permute.xlu0 %1161
    %1163 = vrot.lane.b32.xlu0 %v1012, 15
    %v1164 = vpop.permute.xlu0 %1163
    %v1165 = vsel %vm357, %v1162, %v1164
    %v1166 = vsel %vm357, %v1164, %v1162
    %v1167 = vsel %vm364, %v1166, 0.0
    %v1168 = vsel %vm365, %v1165, 0.0
    %v1169 = vld [vmem:[%s1 + $0x2c] sm:$0xf]
    %1171 = vset.pattern.permute.xlu0 0
    %1172 = vperm.xlu0 %1171, %v1169
    %v1173 = vpop.permute.xlu0 %1172
    %v1175 = vperm.slane %v1167, 0
    %v1176 = vperm.slane %v1168, 0
    %v1177 = vmul.f32 %v1173, %v1175
    %v1178 = vmul.f32 %v1173, %v1176
    %v1179 = vadd.f32 %v1135, %v1177
    %v1180 = vadd.f32 %v1136, %v1178
    %1181 = vset.pattern.permute.xlu0 1
    %1182 = vperm.xlu0 %1181, %v1169
    %v1183 = vpop.permute.xlu0 %1182
    %v1185 = vperm.slane %v1167, 1
    %v1186 = vperm.slane %v1168, 1
    %v1187 = vmul.f32 %v1183, %v1185
    %v1188 = vmul.f32 %v1183, %v1186
    %v1189 = vadd.f32 %v1179, %v1187
    %v1190 = vadd.f32 %v1180, %v1188
    %1191 = vset.pattern.permute.xlu0 2
    %1192 = vperm.xlu0 %1191, %v1169
    %v1193 = vpop.permute.xlu0 %1192
    %v1195 = vperm.slane %v1167, 2
    %v1196 = vperm.slane %v1168, 2
    %v1197 = vmul.f32 %v1193, %v1195
    %v1198 = vmul.f32 %v1193, %v1196
    %v1199 = vadd.f32 %v1189, %v1197
    %v1200 = vadd.f32 %v1190, %v1198
    %1201 = vset.pattern.permute.xlu0 3
    %1202 = vperm.xlu0 %1201, %v1169
    %v1203 = vpop.permute.xlu0 %1202
    %v1205 = vperm.slane %v1167, 3
    %v1206 = vperm.slane %v1168, 3
    %v1207 = vmul.f32 %v1203, %v1205
    %v1208 = vmul.f32 %v1203, %v1206
    %v1209 = vadd.f32 %v1199, %v1207
    %v1210 = vadd.f32 %v1200, %v1208
    %v1211 = vperm.slane %v1167, 4
    %v1212 = vperm.slane %v1168, 4
    %v1213 = vmul.f32 %v1173, %v1211
    %v1214 = vmul.f32 %v1173, %v1212
    %v1215 = vadd.f32 %v1159, %v1213
    %v1216 = vadd.f32 %v1160, %v1214
    %v1217 = vperm.slane %v1167, 5
    %v1218 = vperm.slane %v1168, 5
    %v1219 = vmul.f32 %v1183, %v1217
    %v1220 = vmul.f32 %v1183, %v1218
    %v1221 = vadd.f32 %v1215, %v1219
    %v1222 = vadd.f32 %v1216, %v1220
    %v1223 = vperm.slane %v1167, 6
    %v1224 = vperm.slane %v1168, 6
    %v1225 = vmul.f32 %v1193, %v1223
    %v1226 = vmul.f32 %v1193, %v1224
    %v1227 = vadd.f32 %v1221, %v1225
    %v1228 = vadd.f32 %v1222, %v1226
    %v1229 = vperm.slane %v1167, 7
    %v1230 = vperm.slane %v1168, 7
    %v1231 = vmul.f32 %v1203, %v1229
    %v1232 = vmul.f32 %v1203, %v1230
    %v1233 = vadd.f32 %v1227, %v1231
    %v1234 = vadd.f32 %v1228, %v1232
    %1235 = vrot.lane.b32.xlu0 %v1011, 1
    %v1236 = vpop.permute.xlu0 %1235
    %1237 = vrot.lane.b32.xlu0 %v1012, 1
    %v1238 = vpop.permute.xlu0 %1237
    %v1239 = vsel %vm55, %v1236, %v1238
    %v1240 = vsel %vm55, %v1238, %v1236
    %v1241 = vsel %vm62, %v1240, 0.0
    %v1242 = vsel %vm63, %v1239, 0.0
    %v1243 = vld [vmem:[%s1 + $0x30] sm:$0xf]
    %1245 = vset.pattern.permute.xlu0 0
    %1246 = vperm.xlu0 %1245, %v1243
    %v1247 = vpop.permute.xlu0 %1246
    %v1249 = vperm.slane %v1241, 0
    %v1250 = vperm.slane %v1242, 0
    %v1251 = vmul.f32 %v1247, %v1249
    %v1252 = vmul.f32 %v1247, %v1250
    %v1253 = vadd.f32 %v1209, %v1251
    %v1254 = vadd.f32 %v1210, %v1252
    %1255 = vset.pattern.permute.xlu0 1
    %1256 = vperm.xlu0 %1255, %v1243
    %v1257 = vpop.permute.xlu0 %1256
    %v1259 = vperm.slane %v1241, 1
    %v1260 = vperm.slane %v1242, 1
    %v1261 = vmul.f32 %v1257, %v1259
    %v1262 = vmul.f32 %v1257, %v1260
    %v1263 = vadd.f32 %v1253, %v1261
    %v1264 = vadd.f32 %v1254, %v1262
    %1265 = vset.pattern.permute.xlu0 2
    %1266 = vperm.xlu0 %1265, %v1243
    %v1267 = vpop.permute.xlu0 %1266
    %v1269 = vperm.slane %v1241, 2
    %v1270 = vperm.slane %v1242, 2
    %v1271 = vmul.f32 %v1267, %v1269
    %v1272 = vmul.f32 %v1267, %v1270
    %v1273 = vadd.f32 %v1263, %v1271
    %v1274 = vadd.f32 %v1264, %v1272
    %1275 = vset.pattern.permute.xlu0 3
    %1276 = vperm.xlu0 %1275, %v1243
    %v1277 = vpop.permute.xlu0 %1276
    %v1279 = vperm.slane %v1241, 3
    %v1280 = vperm.slane %v1242, 3
    %v1281 = vmul.f32 %v1277, %v1279
    %v1282 = vmul.f32 %v1277, %v1280
    %v1283 = vadd.f32 %v1273, %v1281
    %v1284 = vadd.f32 %v1274, %v1282
    %v1285 = vperm.slane %v1241, 4
    %v1286 = vperm.slane %v1242, 4
    %v1287 = vmul.f32 %v1247, %v1285
    %v1288 = vmul.f32 %v1247, %v1286
    %v1289 = vadd.f32 %v1233, %v1287
    %v1290 = vadd.f32 %v1234, %v1288
    %v1291 = vperm.slane %v1241, 5
    %v1292 = vperm.slane %v1242, 5
    %v1293 = vmul.f32 %v1257, %v1291
    %v1294 = vmul.f32 %v1257, %v1292
    %v1295 = vadd.f32 %v1289, %v1293
    %v1296 = vadd.f32 %v1290, %v1294
    %v1297 = vperm.slane %v1241, 6
    %v1298 = vperm.slane %v1242, 6
    %v1299 = vmul.f32 %v1267, %v1297
    %v1300 = vmul.f32 %v1267, %v1298
    %v1301 = vadd.f32 %v1295, %v1299
    %v1302 = vadd.f32 %v1296, %v1300
    %v1303 = vperm.slane %v1241, 7
    %v1304 = vperm.slane %v1242, 7
    %v1305 = vmul.f32 %v1277, %v1303
    %v1306 = vmul.f32 %v1277, %v1304
    %v1307 = vadd.f32 %v1301, %v1305
    %v1308 = vadd.f32 %v1302, %v1306
    %v1309 = vld [vmem:[%s1 + $0x34] sm:$0xf]
    %1311 = vset.pattern.permute.xlu0 0
    %1312 = vperm.xlu0 %1311, %v1309
    %v1313 = vpop.permute.xlu0 %1312
    %v1315 = vperm.slane %v1011, 0
    %v1316 = vperm.slane %v1012, 0
    %v1317 = vmul.f32 %v1313, %v1315
    %v1318 = vmul.f32 %v1313, %v1316
    %v1319 = vadd.f32 %v1283, %v1317
    %v1320 = vadd.f32 %v1284, %v1318
    %1321 = vset.pattern.permute.xlu0 1
    %1322 = vperm.xlu0 %1321, %v1309
    %v1323 = vpop.permute.xlu0 %1322
    %v1325 = vperm.slane %v1011, 1
    %v1326 = vperm.slane %v1012, 1
    %v1327 = vmul.f32 %v1323, %v1325
    %v1328 = vmul.f32 %v1323, %v1326
    %v1329 = vadd.f32 %v1319, %v1327
    %v1330 = vadd.f32 %v1320, %v1328
    %1331 = vset.pattern.permute.xlu0 2
    %1332 = vperm.xlu0 %1331, %v1309
    %v1333 = vpop.permute.xlu0 %1332
    %v1335 = vperm.slane %v1011, 2
    %v1336 = vperm.slane %v1012, 2
    %v1337 = vmul.f32 %v1333, %v1335
    %v1338 = vmul.f32 %v1333, %v1336
    %v1339 = vadd.f32 %v1329, %v1337
    %v1340 = vadd.f32 %v1330, %v1338
    %1341 = vset.pattern.permute.xlu0 3
    %1342 = vperm.xlu0 %1341, %v1309
    %v1343 = vpop.permute.xlu0 %1342
    %v1345 = vperm.slane %v1011, 3
    %v1346 = vperm.slane %v1012, 3
    %v1347 = vmul.f32 %v1343, %v1345
    %v1348 = vmul.f32 %v1343, %v1346
    %v1349 = vadd.f32 %v1339, %v1347
    %v1350 = vadd.f32 %v1340, %v1348
    %v1351 = vperm.slane %v1011, 4
    %v1352 = vperm.slane %v1012, 4
    %v1353 = vmul.f32 %v1313, %v1351
    %v1354 = vmul.f32 %v1313, %v1352
    %v1355 = vadd.f32 %v1307, %v1353
    %v1356 = vadd.f32 %v1308, %v1354
    %v1357 = vperm.slane %v1011, 5
    %v1358 = vperm.slane %v1012, 5
    %v1359 = vmul.f32 %v1323, %v1357
    %v1360 = vmul.f32 %v1323, %v1358
    %v1361 = vadd.f32 %v1355, %v1359
    %v1362 = vadd.f32 %v1356, %v1360
    %v1363 = vperm.slane %v1011, 6
    %v1364 = vperm.slane %v1012, 6
    %v1365 = vmul.f32 %v1333, %v1363
    %v1366 = vmul.f32 %v1333, %v1364
    %v1367 = vadd.f32 %v1361, %v1365
    %v1368 = vadd.f32 %v1362, %v1366
    %v1369 = vperm.slane %v1011, 7
    %v1370 = vperm.slane %v1012, 7
    %v1371 = vmul.f32 %v1343, %v1369
    %v1372 = vmul.f32 %v1343, %v1370
    %v1373 = vadd.f32 %v1367, %v1371
    %v1374 = vadd.f32 %v1368, %v1372
    %1375 = vrot.lane.b32.xlu0 %v1011, 127
    %v1376 = vpop.permute.xlu0 %1375
    %1377 = vrot.lane.b32.xlu0 %v1012, 127
    %v1378 = vpop.permute.xlu0 %1377
    %v1379 = vsel %vm72, %v1376, %v1378
    %v1380 = vsel %vm72, %v1378, %v1376
    %v1381 = vsel %vm79, %v1379, 0.0
    %v1382 = vsel %vm80, %v1380, 0.0
    %v1383 = vld [vmem:[%s1 + $0x38] sm:$0xf]
    %1385 = vset.pattern.permute.xlu0 0
    %1386 = vperm.xlu0 %1385, %v1383
    %v1387 = vpop.permute.xlu0 %1386
    %v1389 = vperm.slane %v1381, 0
    %v1390 = vperm.slane %v1382, 0
    %v1391 = vmul.f32 %v1387, %v1389
    %v1392 = vmul.f32 %v1387, %v1390
    %v1393 = vadd.f32 %v1349, %v1391
    %v1394 = vadd.f32 %v1350, %v1392
    %1395 = vset.pattern.permute.xlu0 1
    %1396 = vperm.xlu0 %1395, %v1383
    %v1397 = vpop.permute.xlu0 %1396
    %v1399 = vperm.slane %v1381, 1
    %v1400 = vperm.slane %v1382, 1
    %v1401 = vmul.f32 %v1397, %v1399
    %v1402 = vmul.f32 %v1397, %v1400
    %v1403 = vadd.f32 %v1393, %v1401
    %v1404 = vadd.f32 %v1394, %v1402
    %1405 = vset.pattern.permute.xlu0 2
    %1406 = vperm.xlu0 %1405, %v1383
    %v1407 = vpop.permute.xlu0 %1406
    %v1409 = vperm.slane %v1381, 2
    %v1410 = vperm.slane %v1382, 2
    %v1411 = vmul.f32 %v1407, %v1409
    %v1412 = vmul.f32 %v1407, %v1410
    %v1413 = vadd.f32 %v1403, %v1411
    %v1414 = vadd.f32 %v1404, %v1412
    %1415 = vset.pattern.permute.xlu0 3
    %1416 = vperm.xlu0 %1415, %v1383
    %v1417 = vpop.permute.xlu0 %1416
    %v1419 = vperm.slane %v1381, 3
    %v1420 = vperm.slane %v1382, 3
    %v1421 = vmul.f32 %v1417, %v1419
    %v1422 = vmul.f32 %v1417, %v1420
    %v1423 = vadd.f32 %v1413, %v1421
    %v1424 = vadd.f32 %v1414, %v1422
    %v1425 = vperm.slane %v1381, 4
    %v1426 = vperm.slane %v1382, 4
    %v1427 = vmul.f32 %v1387, %v1425
    %v1428 = vmul.f32 %v1387, %v1426
    %v1429 = vadd.f32 %v1373, %v1427
    %v1430 = vadd.f32 %v1374, %v1428
    %v1431 = vperm.slane %v1381, 5
    %v1432 = vperm.slane %v1382, 5
    %v1433 = vmul.f32 %v1397, %v1431
    %v1434 = vmul.f32 %v1397, %v1432
    %v1435 = vadd.f32 %v1429, %v1433
    %v1436 = vadd.f32 %v1430, %v1434
    %v1437 = vperm.slane %v1381, 6
    %v1438 = vperm.slane %v1382, 6
    %v1439 = vmul.f32 %v1407, %v1437
    %v1440 = vmul.f32 %v1407, %v1438
    %v1441 = vadd.f32 %v1435, %v1439
    %v1442 = vadd.f32 %v1436, %v1440
    %v1443 = vperm.slane %v1381, 7
    %v1444 = vperm.slane %v1382, 7
    %v1445 = vmul.f32 %v1417, %v1443
    %v1446 = vmul.f32 %v1417, %v1444
    %v1447 = vadd.f32 %v1441, %v1445
    %v1448 = vadd.f32 %v1442, %v1446
    %1449 = vrot.lane.b32.xlu0 %v1011, 113
    %v1450 = vpop.permute.xlu0 %1449
    %1451 = vrot.lane.b32.xlu0 %v1012, 113
    %v1452 = vpop.permute.xlu0 %1451
    %v1453 = vsel %vm652, %v1450, %v1452
    %v1454 = vsel %vm652, %v1452, %v1450
    %v1455 = vsel %vm659, %v1453, 0.0
    %v1456 = vsel %vm660, %v1454, 0.0
    %v1457 = vld [vmem:[%s1 + $0x3c] sm:$0xf]
    %1459 = vset.pattern.permute.xlu0 0
    %1460 = vperm.xlu0 %1459, %v1457
    %v1461 = vpop.permute.xlu0 %1460
    %v1463 = vperm.slane %v1455, 0
    %v1464 = vperm.slane %v1456, 0
    %v1465 = vmul.f32 %v1461, %v1463
    %v1466 = vmul.f32 %v1461, %v1464
    %v1467 = vadd.f32 %v1423, %v1465
    %v1468 = vadd.f32 %v1424, %v1466
    %1469 = vset.pattern.permute.xlu0 1
    %1470 = vperm.xlu0 %1469, %v1457
    %v1471 = vpop.permute.xlu0 %1470
    %v1473 = vperm.slane %v1455, 1
    %v1474 = vperm.slane %v1456, 1
    %v1475 = vmul.f32 %v1471, %v1473
    %v1476 = vmul.f32 %v1471, %v1474
    %v1477 = vadd.f32 %v1467, %v1475
    %v1478 = vadd.f32 %v1468, %v1476
    %1479 = vset.pattern.permute.xlu0 2
    %1480 = vperm.xlu0 %1479, %v1457
    %v1481 = vpop.permute.xlu0 %1480
    %v1483 = vperm.slane %v1455, 2
    %v1484 = vperm.slane %v1456, 2
    %v1485 = vmul.f32 %v1481, %v1483
    %v1486 = vmul.f32 %v1481, %v1484
    %v1487 = vadd.f32 %v1477, %v1485
    %v1488 = vadd.f32 %v1478, %v1486
    %1489 = vset.pattern.permute.xlu0 3
    %1490 = vperm.xlu0 %1489, %v1457
    %v1491 = vpop.permute.xlu0 %1490
    %v1493 = vperm.slane %v1455, 3
    %v1494 = vperm.slane %v1456, 3
    %v1495 = vmul.f32 %v1491, %v1493
    %v1496 = vmul.f32 %v1491, %v1494
    %v1497 = vadd.f32 %v1487, %v1495
    %v1498 = vadd.f32 %v1488, %v1496
    %v1499 = vperm.slane %v1455, 4
    %v1500 = vperm.slane %v1456, 4
    %v1501 = vmul.f32 %v1461, %v1499
    %v1502 = vmul.f32 %v1461, %v1500
    %v1503 = vadd.f32 %v1447, %v1501
    %v1504 = vadd.f32 %v1448, %v1502
    %v1505 = vperm.slane %v1455, 5
    %v1506 = vperm.slane %v1456, 5
    %v1507 = vmul.f32 %v1471, %v1505
    %v1508 = vmul.f32 %v1471, %v1506
    %v1509 = vadd.f32 %v1503, %v1507
    %v1510 = vadd.f32 %v1504, %v1508
    %v1511 = vperm.slane %v1455, 6
    %v1512 = vperm.slane %v1456, 6
    %v1513 = vmul.f32 %v1481, %v1511
    %v1514 = vmul.f32 %v1481, %v1512
    %v1515 = vadd.f32 %v1509, %v1513
    %v1516 = vadd.f32 %v1510, %v1514
    %v1517 = vperm.slane %v1455, 7
    %v1518 = vperm.slane %v1456, 7
    %v1519 = vmul.f32 %v1491, %v1517
    %v1520 = vmul.f32 %v1491, %v1518
    %v1521 = vadd.f32 %v1515, %v1519
    %v1522 = vadd.f32 %v1516, %v1520
    %1523 = vrot.lane.b32.xlu0 %v1011, 112
    %v1524 = vpop.permute.xlu0 %1523
    %1525 = vrot.lane.b32.xlu0 %v1012, 112
    %v1526 = vpop.permute.xlu0 %1525
    %v1527 = vsel %vm140, %v1524, %v1526
    %v1528 = vsel %vm140, %v1526, %v1524
    %v1529 = vsel %vm147, %v1527, 0.0
    %v1530 = vsel %vm148, %v1528, 0.0
    %v1531 = vld [vmem:[%s1 + $0x40] sm:$0xf]
    %1533 = vset.pattern.permute.xlu0 0
    %1534 = vperm.xlu0 %1533, %v1531
    %v1535 = vpop.permute.xlu0 %1534
    %v1537 = vperm.slane %v1529, 0
    %v1538 = vperm.slane %v1530, 0
    %v1539 = vmul.f32 %v1535, %v1537
    %v1540 = vmul.f32 %v1535, %v1538
    %v1541 = vadd.f32 %v1497, %v1539
    %v1542 = vadd.f32 %v1498, %v1540
    %1543 = vset.pattern.permute.xlu0 1
    %1544 = vperm.xlu0 %1543, %v1531
    %v1545 = vpop.permute.xlu0 %1544
    %v1547 = vperm.slane %v1529, 1
    %v1548 = vperm.slane %v1530, 1
    %v1549 = vmul.f32 %v1545, %v1547
    %v1550 = vmul.f32 %v1545, %v1548
    %v1551 = vadd.f32 %v1541, %v1549
    %v1552 = vadd.f32 %v1542, %v1550
    %1553 = vset.pattern.permute.xlu0 2
    %1554 = vperm.xlu0 %1553, %v1531
    %v1555 = vpop.permute.xlu0 %1554
    %v1557 = vperm.slane %v1529, 2
    %v1558 = vperm.slane %v1530, 2
    %v1559 = vmul.f32 %v1555, %v1557
    %v1560 = vmul.f32 %v1555, %v1558
    %v1561 = vadd.f32 %v1551, %v1559
    %v1562 = vadd.f32 %v1552, %v1560
    %1563 = vset.pattern.permute.xlu0 3
    %1564 = vperm.xlu0 %1563, %v1531
    %v1565 = vpop.permute.xlu0 %1564
    %v1567 = vperm.slane %v1529, 3
    %v1568 = vperm.slane %v1530, 3
    %v1569 = vmul.f32 %v1565, %v1567
    %v1570 = vmul.f32 %v1565, %v1568
    %v1571 = vadd.f32 %v1561, %v1569
    %v1572 = vadd.f32 %v1562, %v1570
    %v1573 = vperm.slane %v1529, 4
    %v1574 = vperm.slane %v1530, 4
    %v1575 = vmul.f32 %v1535, %v1573
    %v1576 = vmul.f32 %v1535, %v1574
    %v1577 = vadd.f32 %v1521, %v1575
    %v1578 = vadd.f32 %v1522, %v1576
    %v1579 = vperm.slane %v1529, 5
    %v1580 = vperm.slane %v1530, 5
    %v1581 = vmul.f32 %v1545, %v1579
    %v1582 = vmul.f32 %v1545, %v1580
    %v1583 = vadd.f32 %v1577, %v1581
    %v1584 = vadd.f32 %v1578, %v1582
    %v1585 = vperm.slane %v1529, 6
    %v1586 = vperm.slane %v1530, 6
    %v1587 = vmul.f32 %v1555, %v1585
    %v1588 = vmul.f32 %v1555, %v1586
    %v1589 = vadd.f32 %v1583, %v1587
    %v1590 = vadd.f32 %v1584, %v1588
    %v1591 = vperm.slane %v1529, 7
    %v1592 = vperm.slane %v1530, 7
    %v1593 = vmul.f32 %v1565, %v1591
    %v1594 = vmul.f32 %v1565, %v1592
    %v1595 = vadd.f32 %v1589, %v1593
    %v1596 = vadd.f32 %v1590, %v1594
    %1597 = vrot.lane.b32.xlu0 %v1011, 111
    %v1598 = vpop.permute.xlu0 %1597
    %1599 = vrot.lane.b32.xlu0 %v1012, 111
    %v1600 = vpop.permute.xlu0 %1599
    %v1601 = vsel %vm807, %v1598, %v1600
    %v1602 = vsel %vm807, %v1600, %v1598
    %v1603 = vsel %vm814, %v1601, 0.0
    %v1604 = vsel %vm815, %v1602, 0.0
    %v1605 = vld [vmem:[%s1 + $0x44] sm:$0xf]
    %1607 = vset.pattern.permute.xlu0 0
    %1608 = vperm.xlu0 %1607, %v1605
    %v1609 = vpop.permute.xlu0 %1608
    %v1611 = vperm.slane %v1603, 0
    %v1612 = vperm.slane %v1604, 0
    %v1613 = vmul.f32 %v1609, %v1611
    %v1614 = vmul.f32 %v1609, %v1612
    %v1615 = vadd.f32 %v1571, %v1613
    %v1616 = vadd.f32 %v1572, %v1614
    %1617 = vset.pattern.permute.xlu0 1
    %1618 = vperm.xlu0 %1617, %v1605
    %v1619 = vpop.permute.xlu0 %1618
    %v1621 = vperm.slane %v1603, 1
    %v1622 = vperm.slane %v1604, 1
    %v1623 = vmul.f32 %v1619, %v1621
    %v1624 = vmul.f32 %v1619, %v1622
    %v1625 = vadd.f32 %v1615, %v1623
    %v1626 = vadd.f32 %v1616, %v1624
    %1627 = vset.pattern.permute.xlu0 2
    %1628 = vperm.xlu0 %1627, %v1605
    %v1629 = vpop.permute.xlu0 %1628
    %v1631 = vperm.slane %v1603, 2
    %v1632 = vperm.slane %v1604, 2
    %v1633 = vmul.f32 %v1629, %v1631
    %v1634 = vmul.f32 %v1629, %v1632
    %v1635 = vadd.f32 %v1625, %v1633
    %v1636 = vadd.f32 %v1626, %v1634
    %1637 = vset.pattern.permute.xlu0 3
    %1638 = vperm.xlu0 %1637, %v1605
    %v1639 = vpop.permute.xlu0 %1638
    %v1641 = vperm.slane %v1603, 3
    %v1642 = vperm.slane %v1604, 3
    %v1643 = vmul.f32 %v1639, %v1641
    %v1644 = vmul.f32 %v1639, %v1642
    %v1645 = vadd.f32 %v1635, %v1643
    %v1646 = vadd.f32 %v1636, %v1644
    %v1647 = vperm.slane %v1603, 4
    %v1648 = vperm.slane %v1604, 4
    %v1649 = vmul.f32 %v1609, %v1647
    %v1650 = vmul.f32 %v1609, %v1648
    %v1651 = vadd.f32 %v1595, %v1649
    %v1652 = vadd.f32 %v1596, %v1650
    %v1653 = vperm.slane %v1603, 5
    %v1654 = vperm.slane %v1604, 5
    %v1655 = vmul.f32 %v1619, %v1653
    %v1656 = vmul.f32 %v1619, %v1654
    %v1657 = vadd.f32 %v1651, %v1655
    %v1658 = vadd.f32 %v1652, %v1656
    %v1659 = vperm.slane %v1603, 6
    %v1660 = vperm.slane %v1604, 6
    %v1661 = vmul.f32 %v1629, %v1659
    %v1662 = vmul.f32 %v1629, %v1660
    %v1663 = vadd.f32 %v1657, %v1661
    %v1664 = vadd.f32 %v1658, %v1662
    %v1665 = vperm.slane %v1603, 7
    %v1666 = vperm.slane %v1604, 7
    %v1667 = vmul.f32 %v1639, %v1665
    %v1668 = vmul.f32 %v1639, %v1666
    %v1669 = vadd.f32 %v1663, %v1667
    %v1670 = vadd.f32 %v1664, %v1668
    %v1671 = vld [vmem:[%s2 + $0x4] sm:$0xf]
    %1673 = vset.pattern.permute.xlu0 0
    %1674 = vperm.xlu0 %1673, %v1671
    %v1675 = vpop.permute.xlu0 %1674
    %v1677 = vadd.f32 %v1645, %v1675
    %v1678 = vadd.f32 %v1646, %v1675
    %v1679 = vadd.f32 %v1669, %v1675
    %v1680 = vadd.f32 %v1670, %v1675
    %v1683 = vrot.slane %v1679, 4
    %v1684 = vrot.slane %v1680, 4
    %v1687 = vsel %vm900, %v1677, %v1683
    %v1688 = vsel %vm900, %v1678, %v1684
    %v1689 = vadd.f32 %v1687, %v903
    %v1690 = vadd.f32 %v1688, %v904
    %1691 = vst [vmem:[#allocation2] sm:$0xff] %v1689
    %1692 = vst [vmem:[#allocation2 + $0x8] sm:$0xff] %v1690
    // Predicated region
    $region14: #{tpu_custom_call.1} parent=1 // pred_check
      _
    $region15: #{tpu_custom_call.1} parent=1 // pred_check_branch
      %1694 = sbr.rel (0) target = $region17
    $region16: #{tpu_custom_call.1} parent=1 // pred_region
      %1696 = vsyncadd [#allocation3], 0
      %s1698 = sshll.u32 [#allocation2], 4
      %s1699 = int_to_ptr.vmem [resolvable:$true] %s1698
      %s1700 = sshll.u32 %s3, 4
      %s1701 = int_to_ptr.hbm [resolvable:$true] %s1700
      %1703 = dma.vmem_to_hbm [thread:$0]  %s1699, 256, %s1701, [#allocation3]
    $region17: #{tpu_custom_call.1} parent=1 // pred_fallthru
      _
    // Predicated region
    $region18: #{tpu_custom_call.1} parent=1 // pred_check
      _
    $region19: #{tpu_custom_call.1} parent=1 // pred_check_branch
      %1705 = sbr.rel (0) target = $region21
    $region20: #{tpu_custom_call.1} parent=1 // pred_region
      %1707 = dma.done [#allocation3], 256
    $region21: #{tpu_custom_call.1} parent=1 // pred_fallthru
      _
    %1708 = vsyncpa [#allocation3], 1

</llo_original>
